<compile_context>
chip_gen: v7x
topology: tpu7x:2x2x1
jax: 0.10.0
libtpu: 0.0.40
codegen_flags: <defaults>
</compile_context>

<pallas_src>
import functools

import jax
import jax.numpy as jnp
from jax import lax
from jax.experimental import pallas as pl
from jax.experimental.pallas import tpu as pltpu


def _sigmoid(v):
    # exact sigmoid; exp(-v) may transiently overflow for very negative v but
    # the result is the correct 0.0 / 1.0.
    return 1.0 / (1.0 + jnp.exp(-v))


# ---------------------------------------------------------------------------
# Fused kernel: BiGRU recurrence + scores linear + adj mask + softmax +
# aggregation matmul + encoder linear (+ self-feature half) + ReLU.
# Single invocation (no grid); everything lives in VMEM.
# ---------------------------------------------------------------------------
def _fused_encoder_kernel(*refs, add_self, concat):
    if concat:
        (x_ref, adj_ref, wih_ref, bih_ref, whf_ref, bhf_ref, whb_ref, bhb_ref,
         wmap_ref, bmap_ref, wenc_self_ref, wenc_neigh_ref,
         out_ref, attn_scr) = refs
    else:
        (x_ref, adj_ref, wih_ref, bih_ref, whf_ref, bhf_ref, whb_ref, bhb_ref,
         wmap_ref, bmap_ref, wenc_neigh_ref,
         out_ref, attn_scr) = refs

    f32 = jnp.float32
    B, S, F = x_ref.shape
    H = whf_ref.shape[0]
    H2 = 2 * H
    A = adj_ref.shape[-1]
    E = out_ref.shape[-1]

    x = x_ref[...].astype(f32)                       # (B, S, F)
    x2d = x.reshape(B * S, F)                        # leading-dim merge: layout no-op

    # ---- Phase 1a: hoisted input projection for BOTH GRU directions --------
    # One well-shaped matmul replaces 2*S tiny matmuls inside the recurrence.
    gi_all = jnp.dot(x2d, wih_ref[...], preferred_element_type=f32) + bih_ref[...]
    gi3 = gi_all.reshape(B, S, 6 * H)                # [.. , 0:3H]=fwd, [.., 3H:6H]=bwd

    whf = whf_ref[...]; bhf = bhf_ref[...]
    whb = whb_ref[...]; bhb = bhb_ref[...]

    def gru_cell(gi, gh, h_prev):
        # PyTorch gate order [r, z, n]; one sigmoid over the full r|z slab.
        rz = _sigmoid(gi[:, :H2] + gh[:, :H2])
        r = rz[:, :H]
        z = rz[:, H:]
        n = jnp.tanh(gi[:, H2:] + r * gh[:, H2:])
        return (1.0 - z) * n + z * h_prev

    # ---- Phase 1b: merged fwd/bwd recurrence, fully unrolled (S static) ----
    h_f = jnp.zeros((B, H), f32)
    h_b = jnp.zeros((B, H), f32)
    for i in range(S):
        tb = S - 1 - i
        gh_f = jnp.dot(h_f, whf, preferred_element_type=f32) + bhf
        gh_b = jnp.dot(h_b, whb, preferred_element_type=f32) + bhb
        h_f = gru_cell(gi3[:, i, 0:3 * H], gh_f, h_f)
        h_b = gru_cell(gi3[:, tb, 3 * H:6 * H], gh_b, h_b)
        # attention[:, t, :] = [h_fwd(t) | h_bwd(t)]  (static indices: unrolled)
        attn_scr[:, i:i + 1, 0:H] = h_f[:, None, :]
        attn_scr[:, tb:tb + 1, H:H2] = h_b[:, None, :]

    attn = attn_scr[...]                             # (B, S, 2H)
    attn2d = attn.reshape(B * S, H2)                 # layout no-op

    # ---- Phase 2: scores + mask + softmax + aggregation + encoder ----------
    scores = (jnp.dot(attn2d, wmap_ref[...], preferred_element_type=f32)
              + bmap_ref[...]).reshape(B, S, A)

    adj = adj_ref[...]                               # native dtype, compared in-reg
    keep = adj != 0
    if add_self:
        rows = lax.broadcasted_iota(jnp.int32, (B, S, A), 1)
        cols = lax.broadcasted_iota(jnp.int32, (B, S, A), 2)
        keep = jnp.logical_or(keep, rows == cols)    # adj_list + I, never materialized
    scores = jnp.where(keep, scores, jnp.float32(-9999999.0))

    scores = scores - jnp.max(scores, axis=-1, keepdims=True)
    p = jnp.exp(scores)
    p = p * pl.reciprocal(jnp.sum(p, axis=-1, keepdims=True), approx=True)

    # neigh[b] = p[b] @ attention[b]    (batched matmul, B is tiny)
    neigh = jnp.einsum("bsa,bah->bsh", p, attn, preferred_element_type=f32)

    # cat([x, neigh]) @ W_enc^T  ==  x @ W_self + neigh @ W_neigh
    acc = jnp.dot(neigh.reshape(B * S, H2), wenc_neigh_ref[...],
                  preferred_element_type=f32)
    if concat:
        acc = acc + jnp.dot(x2d, wenc_self_ref[...], preferred_element_type=f32)

    out_ref[...] = jnp.maximum(acc, 0.0).reshape(B, S, E).astype(out_ref.dtype)


# ---------------------------------------------------------------------------
# Wrapper: full Encoder(LSTM_aggregator(...)).forward
# ---------------------------------------------------------------------------
def encoder_forward(node_features, nodes, adj_list, params, *,
                    add_self=True, concat=True, sample_num=5):
    del nodes, sample_num  # unused by the PyTorch forward as well
    f32 = jnp.float32

    B, S, F = node_features.shape
    H = params["w_hh_f"].shape[1]
    H2 = 2 * H
    A = params["w_map"].shape[0]
    E = params["w_enc"].shape[0]
    C = params["w_enc"].shape[1]
    assert adj_list.shape == (B, S, A) and S == A, "adj_list must be (B, S, S)"
    assert C == (F + H2 if concat else H2)

    # GRU weights: both directions' input projections concatenated -> one matmul.
    w_ih_cat = jnp.concatenate([params["w_ih_f"].T, params["w_ih_b"].T],
                               axis=1).astype(f32)                       # (F, 6H)
    b_ih_cat = jnp.concatenate([params["b_ih_f"], params["b_ih_b"]]
                               ).reshape(1, 6 * H).astype(f32)
    whf = params["w_hh_f"].T.astype(f32)                                 # (H, 3H)
    bhf = params["b_hh_f"].reshape(1, 3 * H).astype(f32)
    whb = params["w_hh_b"].T.astype(f32)
    bhb = params["b_hh_b"].reshape(1, 3 * H).astype(f32)
    wmap_t = params["w_map"].T.astype(f32)                               # (2H, A)
    bmap = params["b_map"].reshape(1, A).astype(f32)
    w_enc = params["w_enc"].astype(f32)                                  # (E, C)

    args = [node_features, adj_list,
            w_ih_cat, b_ih_cat, whf, bhf, whb, bhb, wmap_t, bmap]
    if concat:
        args.append(w_enc[:, :F].T)                                      # (F, E)
        args.append(w_enc[:, F:].T)                                      # (2H, E)
    else:
        args.append(w_enc.T)                                             # (2H, E)

    kernel = functools.partial(_fused_encoder_kernel,
                               add_self=add_self, concat=concat)

    out = pl.pallas_call(
        kernel,
        out_shape=jax.ShapeDtypeStruct((B, S, E), node_features.dtype),
        scratch_shapes=[pltpu.VMEM((B, S, H2), f32)],   # bidirectional hidden states
    )(*args)
    return out


# ---------------------------------------------------------------------------
# Pure-JAX reference (direct transcription of the PyTorch module)
# ---------------------------------------------------------------------------
def _reference_forward(node_features, adj_list, params, *, add_self=True, concat=True):
    HIGH = jax.lax.Precision.HIGHEST
    x = node_features.astype(jnp.float32)
    B, S, _ = x.shape
    H = params["w_hh_f"].shape[1]

    def gru_direction(w_ih, w_hh, b_ih, b_hh, reverse):
        h = jnp.zeros((B, H), jnp.float32)
        outs = [None] * S
        order = range(S - 1, -1, -1) if reverse else range(S)
        for t in order:
            gi = jnp.dot(x[:, t, :], w_ih.T, precision=HIGH) + b_ih
            gh = jnp.dot(h, w_hh.T, precision=HIGH) + b_hh
            r = _sigmoid(gi[:, :H] + gh[:, :H])
            z = _sigmoid(gi[:, H:2 * H] + gh[:, H:2 * H])
            n = jnp.tanh(gi[:, 2 * H:] + r * gh[:, 2 * H:])
            h = (1.0 - z) * n + z * h
            outs[t] = h
        return jnp.stack(outs, axis=1)                                   # (B, S, H)

    hf = gru_direction(params["w_ih_f"], params["w_hh_f"],
                       params["b_ih_f"], params["b_hh_f"], reverse=False)
    hb = gru_direction(params["w_ih_b"], params["w_hh_b"],
                       params["b_ih_b"], params["b_hh_b"], reverse=True)
    attention = jnp.concatenate([hf, hb], axis=-1)                       # (B, S, 2H)

    scores = jnp.einsum("bsh,ah->bsa", attention, params["w_map"],
                        precision=HIGH) + params["b_map"]
    adj = adj_list
    if add_self:
        adj = adj + jnp.eye(adj.shape[-1], dtype=adj.dtype)[None]
    scores = jnp.where(adj == 0, -9999999.0, scores)
    p = jax.nn.softmax(scores, axis=-1)
    neigh = jnp.einsum("bsa,bah->bsh", p, attention, precision=HIGH)
    combined = jnp.concatenate([x, neigh], axis=-1) if concat else neigh
    out = jnp.einsum("bsc,ec->bse", combined, params["w_enc"], precision=HIGH)
    return jax.nn.relu(out)


if __name__ == "__main__":
    key = jax.random.PRNGKey(0)
    ks = jax.random.split(key, 16)

    B = 2          # batch
    A = 8          # agent_num == sequence length (adj_list is (B, A, A))
    F = 32         # feature_dim == GRU input_dim
    H = 16         # GRU output_dim  -> bidirectional width 2H = 32
    E = 32         # embed_dim
    concat = True  # encoder_layer input = feature_dim * 2 = F + 2H = 64
    add_self = True

    def w(k, shape, scale=0.2):
        return (scale * jax.random.normal(k, shape)).astype(jnp.float32)

    params = {
        # nn.GRU(F, H, bidirectional=True) parameters (PyTorch layouts)
        "w_ih_f": w(ks[0], (3 * H, F)), "w_hh_f": w(ks[1], (3 * H, H)),
        "b_ih_f": w(ks[2], (3 * H,), 0.1), "b_hh_f": w(ks[3], (3 * H,), 0.1),
        "w_ih_b": w(ks[4], (3 * H, F)), "w_hh_b": w(ks[5], (3 * H, H)),
        "b_ih_b": w(ks[6], (3 * H,), 0.1), "b_hh_b": w(ks[7], (3 * H,), 0.1),
        # linear_mapping: Linear(2H -> agent_num)
        "w_map": w(ks[8], (A, 2 * H)), "b_map": w(ks[9], (A,), 0.1),
        # encoder_layer: Linear(2*feature_dim -> embed_dim, bias=False)
        "w_enc": w(ks[10], (E, F + 2 * H)),
    }

    node_features = jax.random.normal(ks[11], (B, A, F), dtype=jnp.float32)
    adj_list = (jax.random.uniform(ks[12], (B, A, A)) > 0.4).astype(jnp.float32)
    nodes = jnp.arange(A, dtype=jnp.int32)

    fwd = jax.jit(functools.partial(encoder_forward,
                                    add_self=add_self, concat=concat))
    out = jax.block_until_ready(fwd(node_features, nodes, adj_list, params))

    ref = _reference_forward(node_features, adj_list, params,
                             add_self=add_self, concat=concat)

    assert out.shape == (B, A, E), out.shape
    assert bool(jnp.all(jnp.isfinite(out)))
    assert jnp.allclose(out, ref, atol=2e-2, rtol=2e-2), (
        "max abs diff vs reference: %f" % float(jnp.max(jnp.abs(out - ref))))
    print("KERNEL_OK")
</pallas_src>

<mosaic_0001>
module attributes {stable_mosaic.version = 11 : i64} {
  func.func @_fused_encoder_kernel(%arg0: memref<2x8x32xf32, #tpu.memory_space<vmem>>, %arg1: memref<2x8x8xf32, #tpu.memory_space<vmem>>, %arg2: memref<32x96xf32, #tpu.memory_space<vmem>>, %arg3: memref<1x96xf32, #tpu.memory_space<vmem>>, %arg4: memref<16x48xf32, #tpu.memory_space<vmem>>, %arg5: memref<1x48xf32, #tpu.memory_space<vmem>>, %arg6: memref<16x48xf32, #tpu.memory_space<vmem>>, %arg7: memref<1x48xf32, #tpu.memory_space<vmem>>, %arg8: memref<32x8xf32, #tpu.memory_space<vmem>>, %arg9: memref<1x8xf32, #tpu.memory_space<vmem>>, %arg10: memref<32x32xf32, #tpu.memory_space<vmem>>, %arg11: memref<32x32xf32, #tpu.memory_space<vmem>>, %arg12: memref<2x8x32xf32, #tpu.memory_space<vmem>>, %arg13: memref<2x8x32xf32, #tpu.memory_space<vmem>>) attributes {dimension_semantics = [], scalar_prefetch = 0 : i64, scratch_operands = 1 : i64, tpu.core_type = #tpu.core_type<tc>} {
    %c0 = arith.constant 0 : index
    %c0_0 = arith.constant 0 : index
    %c0_1 = arith.constant 0 : index
    %0 = vector.load %arg0[%c0, %c0_0, %c0_1] : memref<2x8x32xf32, #tpu.memory_space<vmem>>, vector<2x8x32xf32>
    %1 = vector.shape_cast %0 : vector<2x8x32xf32> to vector<16x32xf32>
    %c0_2 = arith.constant 0 : index
    %c0_3 = arith.constant 0 : index
    %2 = vector.load %arg2[%c0_2, %c0_3] : memref<32x96xf32, #tpu.memory_space<vmem>>, vector<32x96xf32>
    %cst = arith.constant dense<0.000000e+00> : vector<16x96xf32>
    %3 = tpu.matmul %1, %2, %cst {dimension_numbers = #tpu.dot_dimension_numbers<[1], [0], [0], [1], [0, 0, 1, 1], [], []>} : vector<16x32xf32>, vector<32x96xf32>, vector<16x96xf32> -> vector<16x96xf32>
    %c0_4 = arith.constant 0 : index
    %c0_5 = arith.constant 0 : index
    %4 = vector.load %arg3[%c0_4, %c0_5] : memref<1x96xf32, #tpu.memory_space<vmem>>, vector<1x96xf32>
    %5 = vector.broadcast %4 : vector<1x96xf32> to vector<16x96xf32>
    %6 = arith.addf %3, %5 : vector<16x96xf32>
    %7 = vector.shape_cast %6 : vector<16x96xf32> to vector<2x8x96xf32>
    %c0_6 = arith.constant 0 : index
    %c0_7 = arith.constant 0 : index
    %8 = vector.load %arg4[%c0_6, %c0_7] : memref<16x48xf32, #tpu.memory_space<vmem>>, vector<16x48xf32>
    %c0_8 = arith.constant 0 : index
    %c0_9 = arith.constant 0 : index
    %9 = vector.load %arg5[%c0_8, %c0_9] : memref<1x48xf32, #tpu.memory_space<vmem>>, vector<1x48xf32>
    %c0_10 = arith.constant 0 : index
    %c0_11 = arith.constant 0 : index
    %10 = vector.load %arg6[%c0_10, %c0_11] : memref<16x48xf32, #tpu.memory_space<vmem>>, vector<16x48xf32>
    %c0_12 = arith.constant 0 : index
    %c0_13 = arith.constant 0 : index
    %11 = vector.load %arg7[%c0_12, %c0_13] : memref<1x48xf32, #tpu.memory_space<vmem>>, vector<1x48xf32>
    %cst_14 = arith.constant 0.000000e+00 : f32
    %12 = vector.broadcast %cst_14 : f32 to vector<2x16xf32>
    %cst_15 = arith.constant 0.000000e+00 : f32
    %13 = vector.broadcast %cst_15 : f32 to vector<2x16xf32>
    %cst_16 = arith.constant dense<0.000000e+00> : vector<2x48xf32>
    %14 = tpu.matmul %12, %8, %cst_16 {dimension_numbers = #tpu.dot_dimension_numbers<[1], [0], [0], [1], [0, 0, 1, 1], [], []>} : vector<2x16xf32>, vector<16x48xf32>, vector<2x48xf32> -> vector<2x48xf32>
    %15 = vector.broadcast %9 : vector<1x48xf32> to vector<2x48xf32>
    %16 = arith.addf %14, %15 : vector<2x48xf32>
    %cst_17 = arith.constant dense<0.000000e+00> : vector<2x48xf32>
    %17 = tpu.matmul %13, %10, %cst_17 {dimension_numbers = #tpu.dot_dimension_numbers<[1], [0], [0], [1], [0, 0, 1, 1], [], []>} : vector<2x16xf32>, vector<16x48xf32>, vector<2x48xf32> -> vector<2x48xf32>
    %18 = vector.broadcast %11 : vector<1x48xf32> to vector<2x48xf32>
    %19 = arith.addf %17, %18 : vector<2x48xf32>
    %20 = vector.extract_strided_slice %7 {offsets = [0, 0, 0], sizes = [2, 1, 48], strides = [1, 1, 1]} : vector<2x8x96xf32> to vector<2x1x48xf32>
    %21 = vector.shape_cast %20 : vector<2x1x48xf32> to vector<2x48xf32>
    %22 = vector.extract_strided_slice %21 {offsets = [0, 0], sizes = [2, 32], strides = [1, 1]} : vector<2x48xf32> to vector<2x32xf32>
    %23 = vector.extract_strided_slice %16 {offsets = [0, 0], sizes = [2, 32], strides = [1, 1]} : vector<2x48xf32> to vector<2x32xf32>
    %24 = arith.addf %22, %23 : vector<2x32xf32>
    %cst_18 = arith.constant 0.000000e+00 : f32
    %25 = vector.broadcast %cst_18 : f32 to vector<2x32xf32>
    %26 = arith.subf %25, %24 : vector<2x32xf32>
    %27 = math.exp %26 : vector<2x32xf32>
    %cst_19 = arith.constant 1.000000e+00 : f32
    %28 = vector.broadcast %cst_19 : f32 to vector<2x32xf32>
    %29 = arith.addf %28, %27 : vector<2x32xf32>
    %cst_20 = arith.constant 1.000000e+00 : f32
    %30 = vector.broadcast %cst_20 : f32 to vector<2x32xf32>
    %31 = arith.divf %30, %29 : vector<2x32xf32>
    %32 = vector.extract_strided_slice %31 {offsets = [0, 0], sizes = [2, 16], strides = [1, 1]} : vector<2x32xf32> to vector<2x16xf32>
    %33 = vector.extract_strided_slice %31 {offsets = [0, 16], sizes = [2, 16], strides = [1, 1]} : vector<2x32xf32> to vector<2x16xf32>
    %34 = vector.extract_strided_slice %21 {offsets = [0, 32], sizes = [2, 16], strides = [1, 1]} : vector<2x48xf32> to vector<2x16xf32>
    %35 = vector.extract_strided_slice %16 {offsets = [0, 32], sizes = [2, 16], strides = [1, 1]} : vector<2x48xf32> to vector<2x16xf32>
    %36 = arith.mulf %32, %35 : vector<2x16xf32>
    %37 = arith.addf %34, %36 : vector<2x16xf32>
    %38 = math.tanh %37 : vector<2x16xf32>
    %cst_21 = arith.constant 1.000000e+00 : f32
    %39 = vector.broadcast %cst_21 : f32 to vector<2x16xf32>
    %40 = arith.subf %39, %33 : vector<2x16xf32>
    %41 = arith.mulf %40, %38 : vector<2x16xf32>
    %42 = arith.mulf %33, %12 : vector<2x16xf32>
    %43 = arith.addf %41, %42 : vector<2x16xf32>
    %44 = vector.extract_strided_slice %7 {offsets = [0, 7, 48], sizes = [2, 1, 48], strides = [1, 1, 1]} : vector<2x8x96xf32> to vector<2x1x48xf32>
    %45 = vector.shape_cast %44 : vector<2x1x48xf32> to vector<2x48xf32>
    %46 = vector.extract_strided_slice %45 {offsets = [0, 0], sizes = [2, 32], strides = [1, 1]} : vector<2x48xf32> to vector<2x32xf32>
    %47 = vector.extract_strided_slice %19 {offsets = [0, 0], sizes = [2, 32], strides = [1, 1]} : vector<2x48xf32> to vector<2x32xf32>
    %48 = arith.addf %46, %47 : vector<2x32xf32>
    %cst_22 = arith.constant 0.000000e+00 : f32
    %49 = vector.broadcast %cst_22 : f32 to vector<2x32xf32>
    %50 = arith.subf %49, %48 : vector<2x32xf32>
    %51 = math.exp %50 : vector<2x32xf32>
    %cst_23 = arith.constant 1.000000e+00 : f32
    %52 = vector.broadcast %cst_23 : f32 to vector<2x32xf32>
    %53 = arith.addf %52, %51 : vector<2x32xf32>
    %cst_24 = arith.constant 1.000000e+00 : f32
    %54 = vector.broadcast %cst_24 : f32 to vector<2x32xf32>
    %55 = arith.divf %54, %53 : vector<2x32xf32>
    %56 = vector.extract_strided_slice %55 {offsets = [0, 0], sizes = [2, 16], strides = [1, 1]} : vector<2x32xf32> to vector<2x16xf32>
    %57 = vector.extract_strided_slice %55 {offsets = [0, 16], sizes = [2, 16], strides = [1, 1]} : vector<2x32xf32> to vector<2x16xf32>
    %58 = vector.extract_strided_slice %45 {offsets = [0, 32], sizes = [2, 16], strides = [1, 1]} : vector<2x48xf32> to vector<2x16xf32>
    %59 = vector.extract_strided_slice %19 {offsets = [0, 32], sizes = [2, 16], strides = [1, 1]} : vector<2x48xf32> to vector<2x16xf32>
    %60 = arith.mulf %56, %59 : vector<2x16xf32>
    %61 = arith.addf %58, %60 : vector<2x16xf32>
    %62 = math.tanh %61 : vector<2x16xf32>
    %cst_25 = arith.constant 1.000000e+00 : f32
    %63 = vector.broadcast %cst_25 : f32 to vector<2x16xf32>
    %64 = arith.subf %63, %57 : vector<2x16xf32>
    %65 = arith.mulf %64, %62 : vector<2x16xf32>
    %66 = arith.mulf %57, %13 : vector<2x16xf32>
    %67 = arith.addf %65, %66 : vector<2x16xf32>
    %68 = vector.shape_cast %43 : vector<2x16xf32> to vector<2x1x16xf32>
    %c0_26 = arith.constant 0 : index
    %c0_27 = arith.constant 0 : index
    %c0_28 = arith.constant 0 : index
    %69 = vector.load %arg13[%c0_26, %c0_27, %c0_28] : memref<2x8x32xf32, #tpu.memory_space<vmem>>, vector<2x1x16xf32>
    tpu.vector_store %arg13[%c0_26, %c0_27, %c0_28], %68 {strides = array<i32>} : memref<2x8x32xf32, #tpu.memory_space<vmem>>, vector<2x1x16xf32>,
    %70 = vector.shape_cast %67 : vector<2x16xf32> to vector<2x1x16xf32>
    %c0_29 = arith.constant 0 : index
    %c7 = arith.constant 7 : index
    %c16 = arith.constant 16 : index
    %71 = vector.load %arg13[%c0_29, %c7, %c16] : memref<2x8x32xf32, #tpu.memory_space<vmem>>, vector<2x1x16xf32>
    tpu.vector_store %arg13[%c0_29, %c7, %c16], %70 {strides = array<i32>} : memref<2x8x32xf32, #tpu.memory_space<vmem>>, vector<2x1x16xf32>,
    %cst_30 = arith.constant dense<0.000000e+00> : vector<2x48xf32>
    %72 = tpu.matmul %43, %8, %cst_30 {dimension_numbers = #tpu.dot_dimension_numbers<[1], [0], [0], [1], [0, 0, 1, 1], [], []>} : vector<2x16xf32>, vector<16x48xf32>, vector<2x48xf32> -> vector<2x48xf32>
    %73 = vector.broadcast %9 : vector<1x48xf32> to vector<2x48xf32>
    %74 = arith.addf %72, %73 : vector<2x48xf32>
    %cst_31 = arith.constant dense<0.000000e+00> : vector<2x48xf32>
    %75 = tpu.matmul %67, %10, %cst_31 {dimension_numbers = #tpu.dot_dimension_numbers<[1], [0], [0], [1], [0, 0, 1, 1], [], []>} : vector<2x16xf32>, vector<16x48xf32>, vector<2x48xf32> -> vector<2x48xf32>
    %76 = vector.broadcast %11 : vector<1x48xf32> to vector<2x48xf32>
    %77 = arith.addf %75, %76 : vector<2x48xf32>
    %78 = vector.extract_strided_slice %7 {offsets = [0, 1, 0], sizes = [2, 1, 48], strides = [1, 1, 1]} : vector<2x8x96xf32> to vector<2x1x48xf32>
    %79 = vector.shape_cast %78 : vector<2x1x48xf32> to vector<2x48xf32>
    %80 = vector.extract_strided_slice %79 {offsets = [0, 0], sizes = [2, 32], strides = [1, 1]} : vector<2x48xf32> to vector<2x32xf32>
    %81 = vector.extract_strided_slice %74 {offsets = [0, 0], sizes = [2, 32], strides = [1, 1]} : vector<2x48xf32> to vector<2x32xf32>
    %82 = arith.addf %80, %81 : vector<2x32xf32>
    %cst_32 = arith.constant 0.000000e+00 : f32
    %83 = vector.broadcast %cst_32 : f32 to vector<2x32xf32>
    %84 = arith.subf %83, %82 : vector<2x32xf32>
    %85 = math.exp %84 : vector<2x32xf32>
    %cst_33 = arith.constant 1.000000e+00 : f32
    %86 = vector.broadcast %cst_33 : f32 to vector<2x32xf32>
    %87 = arith.addf %86, %85 : vector<2x32xf32>
    %cst_34 = arith.constant 1.000000e+00 : f32
    %88 = vector.broadcast %cst_34 : f32 to vector<2x32xf32>
    %89 = arith.divf %88, %87 : vector<2x32xf32>
    %90 = vector.extract_strided_slice %89 {offsets = [0, 0], sizes = [2, 16], strides = [1, 1]} : vector<2x32xf32> to vector<2x16xf32>
    %91 = vector.extract_strided_slice %89 {offsets = [0, 16], sizes = [2, 16], strides = [1, 1]} : vector<2x32xf32> to vector<2x16xf32>
    %92 = vector.extract_strided_slice %79 {offsets = [0, 32], sizes = [2, 16], strides = [1, 1]} : vector<2x48xf32> to vector<2x16xf32>
    %93 = vector.extract_strided_slice %74 {offsets = [0, 32], sizes = [2, 16], strides = [1, 1]} : vector<2x48xf32> to vector<2x16xf32>
    %94 = arith.mulf %90, %93 : vector<2x16xf32>
    %95 = arith.addf %92, %94 : vector<2x16xf32>
    %96 = math.tanh %95 : vector<2x16xf32>
    %cst_35 = arith.constant 1.000000e+00 : f32
    %97 = vector.broadcast %cst_35 : f32 to vector<2x16xf32>
    %98 = arith.subf %97, %91 : vector<2x16xf32>
    %99 = arith.mulf %98, %96 : vector<2x16xf32>
    %100 = arith.mulf %91, %43 : vector<2x16xf32>
    %101 = arith.addf %99, %100 : vector<2x16xf32>
    %102 = vector.extract_strided_slice %7 {offsets = [0, 6, 48], sizes = [2, 1, 48], strides = [1, 1, 1]} : vector<2x8x96xf32> to vector<2x1x48xf32>
    %103 = vector.shape_cast %102 : vector<2x1x48xf32> to vector<2x48xf32>
    %104 = vector.extract_strided_slice %103 {offsets = [0, 0], sizes = [2, 32], strides = [1, 1]} : vector<2x48xf32> to vector<2x32xf32>
    %105 = vector.extract_strided_slice %77 {offsets = [0, 0], sizes = [2, 32], strides = [1, 1]} : vector<2x48xf32> to vector<2x32xf32>
    %106 = arith.addf %104, %105 : vector<2x32xf32>
    %cst_36 = arith.constant 0.000000e+00 : f32
    %107 = vector.broadcast %cst_36 : f32 to vector<2x32xf32>
    %108 = arith.subf %107, %106 : vector<2x32xf32>
    %109 = math.exp %108 : vector<2x32xf32>
    %cst_37 = arith.constant 1.000000e+00 : f32
    %110 = vector.broadcast %cst_37 : f32 to vector<2x32xf32>
    %111 = arith.addf %110, %109 : vector<2x32xf32>
    %cst_38 = arith.constant 1.000000e+00 : f32
    %112 = vector.broadcast %cst_38 : f32 to vector<2x32xf32>
    %113 = arith.divf %112, %111 : vector<2x32xf32>
    %114 = vector.extract_strided_slice %113 {offsets = [0, 0], sizes = [2, 16], strides = [1, 1]} : vector<2x32xf32> to vector<2x16xf32>
    %115 = vector.extract_strided_slice %113 {offsets = [0, 16], sizes = [2, 16], strides = [1, 1]} : vector<2x32xf32> to vector<2x16xf32>
    %116 = vector.extract_strided_slice %103 {offsets = [0, 32], sizes = [2, 16], strides = [1, 1]} : vector<2x48xf32> to vector<2x16xf32>
    %117 = vector.extract_strided_slice %77 {offsets = [0, 32], sizes = [2, 16], strides = [1, 1]} : vector<2x48xf32> to vector<2x16xf32>
    %118 = arith.mulf %114, %117 : vector<2x16xf32>
    %119 = arith.addf %116, %118 : vector<2x16xf32>
    %120 = math.tanh %119 : vector<2x16xf32>
    %cst_39 = arith.constant 1.000000e+00 : f32
    %121 = vector.broadcast %cst_39 : f32 to vector<2x16xf32>
    %122 = arith.subf %121, %115 : vector<2x16xf32>
    %123 = arith.mulf %122, %120 : vector<2x16xf32>
    %124 = arith.mulf %115, %67 : vector<2x16xf32>
    %125 = arith.addf %123, %124 : vector<2x16xf32>
    %126 = vector.shape_cast %101 : vector<2x16xf32> to vector<2x1x16xf32>
    %c0_40 = arith.constant 0 : index
    %c1 = arith.constant 1 : index
    %c0_41 = arith.constant 0 : index
    %127 = vector.load %arg13[%c0_40, %c1, %c0_41] : memref<2x8x32xf32, #tpu.memory_space<vmem>>, vector<2x1x16xf32>
    tpu.vector_store %arg13[%c0_40, %c1, %c0_41], %126 {strides = array<i32>} : memref<2x8x32xf32, #tpu.memory_space<vmem>>, vector<2x1x16xf32>,
    %128 = vector.shape_cast %125 : vector<2x16xf32> to vector<2x1x16xf32>
    %c0_42 = arith.constant 0 : index
    %c6 = arith.constant 6 : index
    %c16_43 = arith.constant 16 : index
    %129 = vector.load %arg13[%c0_42, %c6, %c16_43] : memref<2x8x32xf32, #tpu.memory_space<vmem>>, vector<2x1x16xf32>
    tpu.vector_store %arg13[%c0_42, %c6, %c16_43], %128 {strides = array<i32>} : memref<2x8x32xf32, #tpu.memory_space<vmem>>, vector<2x1x16xf32>,
    %cst_44 = arith.constant dense<0.000000e+00> : vector<2x48xf32>
    %130 = tpu.matmul %101, %8, %cst_44 {dimension_numbers = #tpu.dot_dimension_numbers<[1], [0], [0], [1], [0, 0, 1, 1], [], []>} : vector<2x16xf32>, vector<16x48xf32>, vector<2x48xf32> -> vector<2x48xf32>
    %131 = vector.broadcast %9 : vector<1x48xf32> to vector<2x48xf32>
    %132 = arith.addf %130, %131 : vector<2x48xf32>
    %cst_45 = arith.constant dense<0.000000e+00> : vector<2x48xf32>
    %133 = tpu.matmul %125, %10, %cst_45 {dimension_numbers = #tpu.dot_dimension_numbers<[1], [0], [0], [1], [0, 0, 1, 1], [], []>} : vector<2x16xf32>, vector<16x48xf32>, vector<2x48xf32> -> vector<2x48xf32>
    %134 = vector.broadcast %11 : vector<1x48xf32> to vector<2x48xf32>
    %135 = arith.addf %133, %134 : vector<2x48xf32>
    %136 = vector.extract_strided_slice %7 {offsets = [0, 2, 0], sizes = [2, 1, 48], strides = [1, 1, 1]} : vector<2x8x96xf32> to vector<2x1x48xf32>
    %137 = vector.shape_cast %136 : vector<2x1x48xf32> to vector<2x48xf32>
    %138 = vector.extract_strided_slice %137 {offsets = [0, 0], sizes = [2, 32], strides = [1, 1]} : vector<2x48xf32> to vector<2x32xf32>
    %139 = vector.extract_strided_slice %132 {offsets = [0, 0], sizes = [2, 32], strides = [1, 1]} : vector<2x48xf32> to vector<2x32xf32>
    %140 = arith.addf %138, %139 : vector<2x32xf32>
    %cst_46 = arith.constant 0.000000e+00 : f32
    %141 = vector.broadcast %cst_46 : f32 to vector<2x32xf32>
    %142 = arith.subf %141, %140 : vector<2x32xf32>
    %143 = math.exp %142 : vector<2x32xf32>
    %cst_47 = arith.constant 1.000000e+00 : f32
    %144 = vector.broadcast %cst_47 : f32 to vector<2x32xf32>
    %145 = arith.addf %144, %143 : vector<2x32xf32>
    %cst_48 = arith.constant 1.000000e+00 : f32
    %146 = vector.broadcast %cst_48 : f32 to vector<2x32xf32>
    %147 = arith.divf %146, %145 : vector<2x32xf32>
    %148 = vector.extract_strided_slice %147 {offsets = [0, 0], sizes = [2, 16], strides = [1, 1]} : vector<2x32xf32> to vector<2x16xf32>
    %149 = vector.extract_strided_slice %147 {offsets = [0, 16], sizes = [2, 16], strides = [1, 1]} : vector<2x32xf32> to vector<2x16xf32>
    %150 = vector.extract_strided_slice %137 {offsets = [0, 32], sizes = [2, 16], strides = [1, 1]} : vector<2x48xf32> to vector<2x16xf32>
    %151 = vector.extract_strided_slice %132 {offsets = [0, 32], sizes = [2, 16], strides = [1, 1]} : vector<2x48xf32> to vector<2x16xf32>
    %152 = arith.mulf %148, %151 : vector<2x16xf32>
    %153 = arith.addf %150, %152 : vector<2x16xf32>
    %154 = math.tanh %153 : vector<2x16xf32>
    %cst_49 = arith.constant 1.000000e+00 : f32
    %155 = vector.broadcast %cst_49 : f32 to vector<2x16xf32>
    %156 = arith.subf %155, %149 : vector<2x16xf32>
    %157 = arith.mulf %156, %154 : vector<2x16xf32>
    %158 = arith.mulf %149, %101 : vector<2x16xf32>
    %159 = arith.addf %157, %158 : vector<2x16xf32>
    %160 = vector.extract_strided_slice %7 {offsets = [0, 5, 48], sizes = [2, 1, 48], strides = [1, 1, 1]} : vector<2x8x96xf32> to vector<2x1x48xf32>
    %161 = vector.shape_cast %160 : vector<2x1x48xf32> to vector<2x48xf32>
    %162 = vector.extract_strided_slice %161 {offsets = [0, 0], sizes = [2, 32], strides = [1, 1]} : vector<2x48xf32> to vector<2x32xf32>
    %163 = vector.extract_strided_slice %135 {offsets = [0, 0], sizes = [2, 32], strides = [1, 1]} : vector<2x48xf32> to vector<2x32xf32>
    %164 = arith.addf %162, %163 : vector<2x32xf32>
    %cst_50 = arith.constant 0.000000e+00 : f32
    %165 = vector.broadcast %cst_50 : f32 to vector<2x32xf32>
    %166 = arith.subf %165, %164 : vector<2x32xf32>
    %167 = math.exp %166 : vector<2x32xf32>
    %cst_51 = arith.constant 1.000000e+00 : f32
    %168 = vector.broadcast %cst_51 : f32 to vector<2x32xf32>
    %169 = arith.addf %168, %167 : vector<2x32xf32>
    %cst_52 = arith.constant 1.000000e+00 : f32
    %170 = vector.broadcast %cst_52 : f32 to vector<2x32xf32>
    %171 = arith.divf %170, %169 : vector<2x32xf32>
    %172 = vector.extract_strided_slice %171 {offsets = [0, 0], sizes = [2, 16], strides = [1, 1]} : vector<2x32xf32> to vector<2x16xf32>
    %173 = vector.extract_strided_slice %171 {offsets = [0, 16], sizes = [2, 16], strides = [1, 1]} : vector<2x32xf32> to vector<2x16xf32>
    %174 = vector.extract_strided_slice %161 {offsets = [0, 32], sizes = [2, 16], strides = [1, 1]} : vector<2x48xf32> to vector<2x16xf32>
    %175 = vector.extract_strided_slice %135 {offsets = [0, 32], sizes = [2, 16], strides = [1, 1]} : vector<2x48xf32> to vector<2x16xf32>
    %176 = arith.mulf %172, %175 : vector<2x16xf32>
    %177 = arith.addf %174, %176 : vector<2x16xf32>
    %178 = math.tanh %177 : vector<2x16xf32>
    %cst_53 = arith.constant 1.000000e+00 : f32
    %179 = vector.broadcast %cst_53 : f32 to vector<2x16xf32>
    %180 = arith.subf %179, %173 : vector<2x16xf32>
    %181 = arith.mulf %180, %178 : vector<2x16xf32>
    %182 = arith.mulf %173, %125 : vector<2x16xf32>
    %183 = arith.addf %181, %182 : vector<2x16xf32>
    %184 = vector.shape_cast %159 : vector<2x16xf32> to vector<2x1x16xf32>
    %c0_54 = arith.constant 0 : index
    %c2 = arith.constant 2 : index
    %c0_55 = arith.constant 0 : index
    %185 = vector.load %arg13[%c0_54, %c2, %c0_55] : memref<2x8x32xf32, #tpu.memory_space<vmem>>, vector<2x1x16xf32>
    tpu.vector_store %arg13[%c0_54, %c2, %c0_55], %184 {strides = array<i32>} : memref<2x8x32xf32, #tpu.memory_space<vmem>>, vector<2x1x16xf32>,
    %186 = vector.shape_cast %183 : vector<2x16xf32> to vector<2x1x16xf32>
    %c0_56 = arith.constant 0 : index
    %c5 = arith.constant 5 : index
    %c16_57 = arith.constant 16 : index
    %187 = vector.load %arg13[%c0_56, %c5, %c16_57] : memref<2x8x32xf32, #tpu.memory_space<vmem>>, vector<2x1x16xf32>
    tpu.vector_store %arg13[%c0_56, %c5, %c16_57], %186 {strides = array<i32>} : memref<2x8x32xf32, #tpu.memory_space<vmem>>, vector<2x1x16xf32>,
    %cst_58 = arith.constant dense<0.000000e+00> : vector<2x48xf32>
    %188 = tpu.matmul %159, %8, %cst_58 {dimension_numbers = #tpu.dot_dimension_numbers<[1], [0], [0], [1], [0, 0, 1, 1], [], []>} : vector<2x16xf32>, vector<16x48xf32>, vector<2x48xf32> -> vector<2x48xf32>
    %189 = vector.broadcast %9 : vector<1x48xf32> to vector<2x48xf32>
    %190 = arith.addf %188, %189 : vector<2x48xf32>
    %cst_59 = arith.constant dense<0.000000e+00> : vector<2x48xf32>
    %191 = tpu.matmul %183, %10, %cst_59 {dimension_numbers = #tpu.dot_dimension_numbers<[1], [0], [0], [1], [0, 0, 1, 1], [], []>} : vector<2x16xf32>, vector<16x48xf32>, vector<2x48xf32> -> vector<2x48xf32>
    %192 = vector.broadcast %11 : vector<1x48xf32> to vector<2x48xf32>
    %193 = arith.addf %191, %192 : vector<2x48xf32>
    %194 = vector.extract_strided_slice %7 {offsets = [0, 3, 0], sizes = [2, 1, 48], strides = [1, 1, 1]} : vector<2x8x96xf32> to vector<2x1x48xf32>
    %195 = vector.shape_cast %194 : vector<2x1x48xf32> to vector<2x48xf32>
    %196 = vector.extract_strided_slice %195 {offsets = [0, 0], sizes = [2, 32], strides = [1, 1]} : vector<2x48xf32> to vector<2x32xf32>
    %197 = vector.extract_strided_slice %190 {offsets = [0, 0], sizes = [2, 32], strides = [1, 1]} : vector<2x48xf32> to vector<2x32xf32>
    %198 = arith.addf %196, %197 : vector<2x32xf32>
    %cst_60 = arith.constant 0.000000e+00 : f32
    %199 = vector.broadcast %cst_60 : f32 to vector<2x32xf32>
    %200 = arith.subf %199, %198 : vector<2x32xf32>
    %201 = math.exp %200 : vector<2x32xf32>
    %cst_61 = arith.constant 1.000000e+00 : f32
    %202 = vector.broadcast %cst_61 : f32 to vector<2x32xf32>
    %203 = arith.addf %202, %201 : vector<2x32xf32>
    %cst_62 = arith.constant 1.000000e+00 : f32
    %204 = vector.broadcast %cst_62 : f32 to vector<2x32xf32>
    %205 = arith.divf %204, %203 : vector<2x32xf32>
    %206 = vector.extract_strided_slice %205 {offsets = [0, 0], sizes = [2, 16], strides = [1, 1]} : vector<2x32xf32> to vector<2x16xf32>
    %207 = vector.extract_strided_slice %205 {offsets = [0, 16], sizes = [2, 16], strides = [1, 1]} : vector<2x32xf32> to vector<2x16xf32>
    %208 = vector.extract_strided_slice %195 {offsets = [0, 32], sizes = [2, 16], strides = [1, 1]} : vector<2x48xf32> to vector<2x16xf32>
    %209 = vector.extract_strided_slice %190 {offsets = [0, 32], sizes = [2, 16], strides = [1, 1]} : vector<2x48xf32> to vector<2x16xf32>
    %210 = arith.mulf %206, %209 : vector<2x16xf32>
    %211 = arith.addf %208, %210 : vector<2x16xf32>
    %212 = math.tanh %211 : vector<2x16xf32>
    %cst_63 = arith.constant 1.000000e+00 : f32
    %213 = vector.broadcast %cst_63 : f32 to vector<2x16xf32>
    %214 = arith.subf %213, %207 : vector<2x16xf32>
    %215 = arith.mulf %214, %212 : vector<2x16xf32>
    %216 = arith.mulf %207, %159 : vector<2x16xf32>
    %217 = arith.addf %215, %216 : vector<2x16xf32>
    %218 = vector.extract_strided_slice %7 {offsets = [0, 4, 48], sizes = [2, 1, 48], strides = [1, 1, 1]} : vector<2x8x96xf32> to vector<2x1x48xf32>
    %219 = vector.shape_cast %218 : vector<2x1x48xf32> to vector<2x48xf32>
    %220 = vector.extract_strided_slice %219 {offsets = [0, 0], sizes = [2, 32], strides = [1, 1]} : vector<2x48xf32> to vector<2x32xf32>
    %221 = vector.extract_strided_slice %193 {offsets = [0, 0], sizes = [2, 32], strides = [1, 1]} : vector<2x48xf32> to vector<2x32xf32>
    %222 = arith.addf %220, %221 : vector<2x32xf32>
    %cst_64 = arith.constant 0.000000e+00 : f32
    %223 = vector.broadcast %cst_64 : f32 to vector<2x32xf32>
    %224 = arith.subf %223, %222 : vector<2x32xf32>
    %225 = math.exp %224 : vector<2x32xf32>
    %cst_65 = arith.constant 1.000000e+00 : f32
    %226 = vector.broadcast %cst_65 : f32 to vector<2x32xf32>
    %227 = arith.addf %226, %225 : vector<2x32xf32>
    %cst_66 = arith.constant 1.000000e+00 : f32
    %228 = vector.broadcast %cst_66 : f32 to vector<2x32xf32>
    %229 = arith.divf %228, %227 : vector<2x32xf32>
    %230 = vector.extract_strided_slice %229 {offsets = [0, 0], sizes = [2, 16], strides = [1, 1]} : vector<2x32xf32> to vector<2x16xf32>
    %231 = vector.extract_strided_slice %229 {offsets = [0, 16], sizes = [2, 16], strides = [1, 1]} : vector<2x32xf32> to vector<2x16xf32>
    %232 = vector.extract_strided_slice %219 {offsets = [0, 32], sizes = [2, 16], strides = [1, 1]} : vector<2x48xf32> to vector<2x16xf32>
    %233 = vector.extract_strided_slice %193 {offsets = [0, 32], sizes = [2, 16], strides = [1, 1]} : vector<2x48xf32> to vector<2x16xf32>
    %234 = arith.mulf %230, %233 : vector<2x16xf32>
    %235 = arith.addf %232, %234 : vector<2x16xf32>
    %236 = math.tanh %235 : vector<2x16xf32>
    %cst_67 = arith.constant 1.000000e+00 : f32
    %237 = vector.broadcast %cst_67 : f32 to vector<2x16xf32>
    %238 = arith.subf %237, %231 : vector<2x16xf32>
    %239 = arith.mulf %238, %236 : vector<2x16xf32>
    %240 = arith.mulf %231, %183 : vector<2x16xf32>
    %241 = arith.addf %239, %240 : vector<2x16xf32>
    %242 = vector.shape_cast %217 : vector<2x16xf32> to vector<2x1x16xf32>
    %c0_68 = arith.constant 0 : index
    %c3 = arith.constant 3 : index
    %c0_69 = arith.constant 0 : index
    %243 = vector.load %arg13[%c0_68, %c3, %c0_69] : memref<2x8x32xf32, #tpu.memory_space<vmem>>, vector<2x1x16xf32>
    tpu.vector_store %arg13[%c0_68, %c3, %c0_69], %242 {strides = array<i32>} : memref<2x8x32xf32, #tpu.memory_space<vmem>>, vector<2x1x16xf32>,
    %244 = vector.shape_cast %241 : vector<2x16xf32> to vector<2x1x16xf32>
    %c0_70 = arith.constant 0 : index
    %c4 = arith.constant 4 : index
    %c16_71 = arith.constant 16 : index
    %245 = vector.load %arg13[%c0_70, %c4, %c16_71] : memref<2x8x32xf32, #tpu.memory_space<vmem>>, vector<2x1x16xf32>
    tpu.vector_store %arg13[%c0_70, %c4, %c16_71], %244 {strides = array<i32>} : memref<2x8x32xf32, #tpu.memory_space<vmem>>, vector<2x1x16xf32>,
    %cst_72 = arith.constant dense<0.000000e+00> : vector<2x48xf32>
    %246 = tpu.matmul %217, %8, %cst_72 {dimension_numbers = #tpu.dot_dimension_numbers<[1], [0], [0], [1], [0, 0, 1, 1], [], []>} : vector<2x16xf32>, vector<16x48xf32>, vector<2x48xf32> -> vector<2x48xf32>
    %247 = vector.broadcast %9 : vector<1x48xf32> to vector<2x48xf32>
    %248 = arith.addf %246, %247 : vector<2x48xf32>
    %cst_73 = arith.constant dense<0.000000e+00> : vector<2x48xf32>
    %249 = tpu.matmul %241, %10, %cst_73 {dimension_numbers = #tpu.dot_dimension_numbers<[1], [0], [0], [1], [0, 0, 1, 1], [], []>} : vector<2x16xf32>, vector<16x48xf32>, vector<2x48xf32> -> vector<2x48xf32>
    %250 = vector.broadcast %11 : vector<1x48xf32> to vector<2x48xf32>
    %251 = arith.addf %249, %250 : vector<2x48xf32>
    %252 = vector.extract_strided_slice %7 {offsets = [0, 4, 0], sizes = [2, 1, 48], strides = [1, 1, 1]} : vector<2x8x96xf32> to vector<2x1x48xf32>
    %253 = vector.shape_cast %252 : vector<2x1x48xf32> to vector<2x48xf32>
    %254 = vector.extract_strided_slice %253 {offsets = [0, 0], sizes = [2, 32], strides = [1, 1]} : vector<2x48xf32> to vector<2x32xf32>
    %255 = vector.extract_strided_slice %248 {offsets = [0, 0], sizes = [2, 32], strides = [1, 1]} : vector<2x48xf32> to vector<2x32xf32>
    %256 = arith.addf %254, %255 : vector<2x32xf32>
    %cst_74 = arith.constant 0.000000e+00 : f32
    %257 = vector.broadcast %cst_74 : f32 to vector<2x32xf32>
    %258 = arith.subf %257, %256 : vector<2x32xf32>
    %259 = math.exp %258 : vector<2x32xf32>
    %cst_75 = arith.constant 1.000000e+00 : f32
    %260 = vector.broadcast %cst_75 : f32 to vector<2x32xf32>
    %261 = arith.addf %260, %259 : vector<2x32xf32>
    %cst_76 = arith.constant 1.000000e+00 : f32
    %262 = vector.broadcast %cst_76 : f32 to vector<2x32xf32>
    %263 = arith.divf %262, %261 : vector<2x32xf32>
    %264 = vector.extract_strided_slice %263 {offsets = [0, 0], sizes = [2, 16], strides = [1, 1]} : vector<2x32xf32> to vector<2x16xf32>
    %265 = vector.extract_strided_slice %263 {offsets = [0, 16], sizes = [2, 16], strides = [1, 1]} : vector<2x32xf32> to vector<2x16xf32>
    %266 = vector.extract_strided_slice %253 {offsets = [0, 32], sizes = [2, 16], strides = [1, 1]} : vector<2x48xf32> to vector<2x16xf32>
    %267 = vector.extract_strided_slice %248 {offsets = [0, 32], sizes = [2, 16], strides = [1, 1]} : vector<2x48xf32> to vector<2x16xf32>
    %268 = arith.mulf %264, %267 : vector<2x16xf32>
    %269 = arith.addf %266, %268 : vector<2x16xf32>
    %270 = math.tanh %269 : vector<2x16xf32>
    %cst_77 = arith.constant 1.000000e+00 : f32
    %271 = vector.broadcast %cst_77 : f32 to vector<2x16xf32>
    %272 = arith.subf %271, %265 : vector<2x16xf32>
    %273 = arith.mulf %272, %270 : vector<2x16xf32>
    %274 = arith.mulf %265, %217 : vector<2x16xf32>
    %275 = arith.addf %273, %274 : vector<2x16xf32>
    %276 = vector.extract_strided_slice %7 {offsets = [0, 3, 48], sizes = [2, 1, 48], strides = [1, 1, 1]} : vector<2x8x96xf32> to vector<2x1x48xf32>
    %277 = vector.shape_cast %276 : vector<2x1x48xf32> to vector<2x48xf32>
    %278 = vector.extract_strided_slice %277 {offsets = [0, 0], sizes = [2, 32], strides = [1, 1]} : vector<2x48xf32> to vector<2x32xf32>
    %279 = vector.extract_strided_slice %251 {offsets = [0, 0], sizes = [2, 32], strides = [1, 1]} : vector<2x48xf32> to vector<2x32xf32>
    %280 = arith.addf %278, %279 : vector<2x32xf32>
    %cst_78 = arith.constant 0.000000e+00 : f32
    %281 = vector.broadcast %cst_78 : f32 to vector<2x32xf32>
    %282 = arith.subf %281, %280 : vector<2x32xf32>
    %283 = math.exp %282 : vector<2x32xf32>
    %cst_79 = arith.constant 1.000000e+00 : f32
    %284 = vector.broadcast %cst_79 : f32 to vector<2x32xf32>
    %285 = arith.addf %284, %283 : vector<2x32xf32>
    %cst_80 = arith.constant 1.000000e+00 : f32
    %286 = vector.broadcast %cst_80 : f32 to vector<2x32xf32>
    %287 = arith.divf %286, %285 : vector<2x32xf32>
    %288 = vector.extract_strided_slice %287 {offsets = [0, 0], sizes = [2, 16], strides = [1, 1]} : vector<2x32xf32> to vector<2x16xf32>
    %289 = vector.extract_strided_slice %287 {offsets = [0, 16], sizes = [2, 16], strides = [1, 1]} : vector<2x32xf32> to vector<2x16xf32>
    %290 = vector.extract_strided_slice %277 {offsets = [0, 32], sizes = [2, 16], strides = [1, 1]} : vector<2x48xf32> to vector<2x16xf32>
    %291 = vector.extract_strided_slice %251 {offsets = [0, 32], sizes = [2, 16], strides = [1, 1]} : vector<2x48xf32> to vector<2x16xf32>
    %292 = arith.mulf %288, %291 : vector<2x16xf32>
    %293 = arith.addf %290, %292 : vector<2x16xf32>
    %294 = math.tanh %293 : vector<2x16xf32>
    %cst_81 = arith.constant 1.000000e+00 : f32
    %295 = vector.broadcast %cst_81 : f32 to vector<2x16xf32>
    %296 = arith.subf %295, %289 : vector<2x16xf32>
    %297 = arith.mulf %296, %294 : vector<2x16xf32>
    %298 = arith.mulf %289, %241 : vector<2x16xf32>
    %299 = arith.addf %297, %298 : vector<2x16xf32>
    %300 = vector.shape_cast %275 : vector<2x16xf32> to vector<2x1x16xf32>
    %c0_82 = arith.constant 0 : index
    %c4_83 = arith.constant 4 : index
    %c0_84 = arith.constant 0 : index
    %301 = vector.load %arg13[%c0_82, %c4_83, %c0_84] : memref<2x8x32xf32, #tpu.memory_space<vmem>>, vector<2x1x16xf32>
    tpu.vector_store %arg13[%c0_82, %c4_83, %c0_84], %300 {strides = array<i32>} : memref<2x8x32xf32, #tpu.memory_space<vmem>>, vector<2x1x16xf32>,
    %302 = vector.shape_cast %299 : vector<2x16xf32> to vector<2x1x16xf32>
    %c0_85 = arith.constant 0 : index
    %c3_86 = arith.constant 3 : index
    %c16_87 = arith.constant 16 : index
    %303 = vector.load %arg13[%c0_85, %c3_86, %c16_87] : memref<2x8x32xf32, #tpu.memory_space<vmem>>, vector<2x1x16xf32>
    tpu.vector_store %arg13[%c0_85, %c3_86, %c16_87], %302 {strides = array<i32>} : memref<2x8x32xf32, #tpu.memory_space<vmem>>, vector<2x1x16xf32>,
    %cst_88 = arith.constant dense<0.000000e+00> : vector<2x48xf32>
    %304 = tpu.matmul %275, %8, %cst_88 {dimension_numbers = #tpu.dot_dimension_numbers<[1], [0], [0], [1], [0, 0, 1, 1], [], []>} : vector<2x16xf32>, vector<16x48xf32>, vector<2x48xf32> -> vector<2x48xf32>
    %305 = vector.broadcast %9 : vector<1x48xf32> to vector<2x48xf32>
    %306 = arith.addf %304, %305 : vector<2x48xf32>
    %cst_89 = arith.constant dense<0.000000e+00> : vector<2x48xf32>
    %307 = tpu.matmul %299, %10, %cst_89 {dimension_numbers = #tpu.dot_dimension_numbers<[1], [0], [0], [1], [0, 0, 1, 1], [], []>} : vector<2x16xf32>, vector<16x48xf32>, vector<2x48xf32> -> vector<2x48xf32>
    %308 = vector.broadcast %11 : vector<1x48xf32> to vector<2x48xf32>
    %309 = arith.addf %307, %308 : vector<2x48xf32>
    %310 = vector.extract_strided_slice %7 {offsets = [0, 5, 0], sizes = [2, 1, 48], strides = [1, 1, 1]} : vector<2x8x96xf32> to vector<2x1x48xf32>
    %311 = vector.shape_cast %310 : vector<2x1x48xf32> to vector<2x48xf32>
    %312 = vector.extract_strided_slice %311 {offsets = [0, 0], sizes = [2, 32], strides = [1, 1]} : vector<2x48xf32> to vector<2x32xf32>
    %313 = vector.extract_strided_slice %306 {offsets = [0, 0], sizes = [2, 32], strides = [1, 1]} : vector<2x48xf32> to vector<2x32xf32>
    %314 = arith.addf %312, %313 : vector<2x32xf32>
    %cst_90 = arith.constant 0.000000e+00 : f32
    %315 = vector.broadcast %cst_90 : f32 to vector<2x32xf32>
    %316 = arith.subf %315, %314 : vector<2x32xf32>
    %317 = math.exp %316 : vector<2x32xf32>
    %cst_91 = arith.constant 1.000000e+00 : f32
    %318 = vector.broadcast %cst_91 : f32 to vector<2x32xf32>
    %319 = arith.addf %318, %317 : vector<2x32xf32>
    %cst_92 = arith.constant 1.000000e+00 : f32
    %320 = vector.broadcast %cst_92 : f32 to vector<2x32xf32>
    %321 = arith.divf %320, %319 : vector<2x32xf32>
    %322 = vector.extract_strided_slice %321 {offsets = [0, 0], sizes = [2, 16], strides = [1, 1]} : vector<2x32xf32> to vector<2x16xf32>
    %323 = vector.extract_strided_slice %321 {offsets = [0, 16], sizes = [2, 16], strides = [1, 1]} : vector<2x32xf32> to vector<2x16xf32>
    %324 = vector.extract_strided_slice %311 {offsets = [0, 32], sizes = [2, 16], strides = [1, 1]} : vector<2x48xf32> to vector<2x16xf32>
    %325 = vector.extract_strided_slice %306 {offsets = [0, 32], sizes = [2, 16], strides = [1, 1]} : vector<2x48xf32> to vector<2x16xf32>
    %326 = arith.mulf %322, %325 : vector<2x16xf32>
    %327 = arith.addf %324, %326 : vector<2x16xf32>
    %328 = math.tanh %327 : vector<2x16xf32>
    %cst_93 = arith.constant 1.000000e+00 : f32
    %329 = vector.broadcast %cst_93 : f32 to vector<2x16xf32>
    %330 = arith.subf %329, %323 : vector<2x16xf32>
    %331 = arith.mulf %330, %328 : vector<2x16xf32>
    %332 = arith.mulf %323, %275 : vector<2x16xf32>
    %333 = arith.addf %331, %332 : vector<2x16xf32>
    %334 = vector.extract_strided_slice %7 {offsets = [0, 2, 48], sizes = [2, 1, 48], strides = [1, 1, 1]} : vector<2x8x96xf32> to vector<2x1x48xf32>
    %335 = vector.shape_cast %334 : vector<2x1x48xf32> to vector<2x48xf32>
    %336 = vector.extract_strided_slice %335 {offsets = [0, 0], sizes = [2, 32], strides = [1, 1]} : vector<2x48xf32> to vector<2x32xf32>
    %337 = vector.extract_strided_slice %309 {offsets = [0, 0], sizes = [2, 32], strides = [1, 1]} : vector<2x48xf32> to vector<2x32xf32>
    %338 = arith.addf %336, %337 : vector<2x32xf32>
    %cst_94 = arith.constant 0.000000e+00 : f32
    %339 = vector.broadcast %cst_94 : f32 to vector<2x32xf32>
    %340 = arith.subf %339, %338 : vector<2x32xf32>
    %341 = math.exp %340 : vector<2x32xf32>
    %cst_95 = arith.constant 1.000000e+00 : f32
    %342 = vector.broadcast %cst_95 : f32 to vector<2x32xf32>
    %343 = arith.addf %342, %341 : vector<2x32xf32>
    %cst_96 = arith.constant 1.000000e+00 : f32
    %344 = vector.broadcast %cst_96 : f32 to vector<2x32xf32>
    %345 = arith.divf %344, %343 : vector<2x32xf32>
    %346 = vector.extract_strided_slice %345 {offsets = [0, 0], sizes = [2, 16], strides = [1, 1]} : vector<2x32xf32> to vector<2x16xf32>
    %347 = vector.extract_strided_slice %345 {offsets = [0, 16], sizes = [2, 16], strides = [1, 1]} : vector<2x32xf32> to vector<2x16xf32>
    %348 = vector.extract_strided_slice %335 {offsets = [0, 32], sizes = [2, 16], strides = [1, 1]} : vector<2x48xf32> to vector<2x16xf32>
    %349 = vector.extract_strided_slice %309 {offsets = [0, 32], sizes = [2, 16], strides = [1, 1]} : vector<2x48xf32> to vector<2x16xf32>
    %350 = arith.mulf %346, %349 : vector<2x16xf32>
    %351 = arith.addf %348, %350 : vector<2x16xf32>
    %352 = math.tanh %351 : vector<2x16xf32>
    %cst_97 = arith.constant 1.000000e+00 : f32
    %353 = vector.broadcast %cst_97 : f32 to vector<2x16xf32>
    %354 = arith.subf %353, %347 : vector<2x16xf32>
    %355 = arith.mulf %354, %352 : vector<2x16xf32>
    %356 = arith.mulf %347, %299 : vector<2x16xf32>
    %357 = arith.addf %355, %356 : vector<2x16xf32>
    %358 = vector.shape_cast %333 : vector<2x16xf32> to vector<2x1x16xf32>
    %c0_98 = arith.constant 0 : index
    %c5_99 = arith.constant 5 : index
    %c0_100 = arith.constant 0 : index
    %359 = vector.load %arg13[%c0_98, %c5_99, %c0_100] : memref<2x8x32xf32, #tpu.memory_space<vmem>>, vector<2x1x16xf32>
    tpu.vector_store %arg13[%c0_98, %c5_99, %c0_100], %358 {strides = array<i32>} : memref<2x8x32xf32, #tpu.memory_space<vmem>>, vector<2x1x16xf32>,
    %360 = vector.shape_cast %357 : vector<2x16xf32> to vector<2x1x16xf32>
    %c0_101 = arith.constant 0 : index
    %c2_102 = arith.constant 2 : index
    %c16_103 = arith.constant 16 : index
    %361 = vector.load %arg13[%c0_101, %c2_102, %c16_103] : memref<2x8x32xf32, #tpu.memory_space<vmem>>, vector<2x1x16xf32>
    tpu.vector_store %arg13[%c0_101, %c2_102, %c16_103], %360 {strides = array<i32>} : memref<2x8x32xf32, #tpu.memory_space<vmem>>, vector<2x1x16xf32>,
    %cst_104 = arith.constant dense<0.000000e+00> : vector<2x48xf32>
    %362 = tpu.matmul %333, %8, %cst_104 {dimension_numbers = #tpu.dot_dimension_numbers<[1], [0], [0], [1], [0, 0, 1, 1], [], []>} : vector<2x16xf32>, vector<16x48xf32>, vector<2x48xf32> -> vector<2x48xf32>
    %363 = vector.broadcast %9 : vector<1x48xf32> to vector<2x48xf32>
    %364 = arith.addf %362, %363 : vector<2x48xf32>
    %cst_105 = arith.constant dense<0.000000e+00> : vector<2x48xf32>
    %365 = tpu.matmul %357, %10, %cst_105 {dimension_numbers = #tpu.dot_dimension_numbers<[1], [0], [0], [1], [0, 0, 1, 1], [], []>} : vector<2x16xf32>, vector<16x48xf32>, vector<2x48xf32> -> vector<2x48xf32>
    %366 = vector.broadcast %11 : vector<1x48xf32> to vector<2x48xf32>
    %367 = arith.addf %365, %366 : vector<2x48xf32>
    %368 = vector.extract_strided_slice %7 {offsets = [0, 6, 0], sizes = [2, 1, 48], strides = [1, 1, 1]} : vector<2x8x96xf32> to vector<2x1x48xf32>
    %369 = vector.shape_cast %368 : vector<2x1x48xf32> to vector<2x48xf32>
    %370 = vector.extract_strided_slice %369 {offsets = [0, 0], sizes = [2, 32], strides = [1, 1]} : vector<2x48xf32> to vector<2x32xf32>
    %371 = vector.extract_strided_slice %364 {offsets = [0, 0], sizes = [2, 32], strides = [1, 1]} : vector<2x48xf32> to vector<2x32xf32>
    %372 = arith.addf %370, %371 : vector<2x32xf32>
    %cst_106 = arith.constant 0.000000e+00 : f32
    %373 = vector.broadcast %cst_106 : f32 to vector<2x32xf32>
    %374 = arith.subf %373, %372 : vector<2x32xf32>
    %375 = math.exp %374 : vector<2x32xf32>
    %cst_107 = arith.constant 1.000000e+00 : f32
    %376 = vector.broadcast %cst_107 : f32 to vector<2x32xf32>
    %377 = arith.addf %376, %375 : vector<2x32xf32>
    %cst_108 = arith.constant 1.000000e+00 : f32
    %378 = vector.broadcast %cst_108 : f32 to vector<2x32xf32>
    %379 = arith.divf %378, %377 : vector<2x32xf32>
    %380 = vector.extract_strided_slice %379 {offsets = [0, 0], sizes = [2, 16], strides = [1, 1]} : vector<2x32xf32> to vector<2x16xf32>
    %381 = vector.extract_strided_slice %379 {offsets = [0, 16], sizes = [2, 16], strides = [1, 1]} : vector<2x32xf32> to vector<2x16xf32>
    %382 = vector.extract_strided_slice %369 {offsets = [0, 32], sizes = [2, 16], strides = [1, 1]} : vector<2x48xf32> to vector<2x16xf32>
    %383 = vector.extract_strided_slice %364 {offsets = [0, 32], sizes = [2, 16], strides = [1, 1]} : vector<2x48xf32> to vector<2x16xf32>
    %384 = arith.mulf %380, %383 : vector<2x16xf32>
    %385 = arith.addf %382, %384 : vector<2x16xf32>
    %386 = math.tanh %385 : vector<2x16xf32>
    %cst_109 = arith.constant 1.000000e+00 : f32
    %387 = vector.broadcast %cst_109 : f32 to vector<2x16xf32>
    %388 = arith.subf %387, %381 : vector<2x16xf32>
    %389 = arith.mulf %388, %386 : vector<2x16xf32>
    %390 = arith.mulf %381, %333 : vector<2x16xf32>
    %391 = arith.addf %389, %390 : vector<2x16xf32>
    %392 = vector.extract_strided_slice %7 {offsets = [0, 1, 48], sizes = [2, 1, 48], strides = [1, 1, 1]} : vector<2x8x96xf32> to vector<2x1x48xf32>
    %393 = vector.shape_cast %392 : vector<2x1x48xf32> to vector<2x48xf32>
    %394 = vector.extract_strided_slice %393 {offsets = [0, 0], sizes = [2, 32], strides = [1, 1]} : vector<2x48xf32> to vector<2x32xf32>
    %395 = vector.extract_strided_slice %367 {offsets = [0, 0], sizes = [2, 32], strides = [1, 1]} : vector<2x48xf32> to vector<2x32xf32>
    %396 = arith.addf %394, %395 : vector<2x32xf32>
    %cst_110 = arith.constant 0.000000e+00 : f32
    %397 = vector.broadcast %cst_110 : f32 to vector<2x32xf32>
    %398 = arith.subf %397, %396 : vector<2x32xf32>
    %399 = math.exp %398 : vector<2x32xf32>
    %cst_111 = arith.constant 1.000000e+00 : f32
    %400 = vector.broadcast %cst_111 : f32 to vector<2x32xf32>
    %401 = arith.addf %400, %399 : vector<2x32xf32>
    %cst_112 = arith.constant 1.000000e+00 : f32
    %402 = vector.broadcast %cst_112 : f32 to vector<2x32xf32>
    %403 = arith.divf %402, %401 : vector<2x32xf32>
    %404 = vector.extract_strided_slice %403 {offsets = [0, 0], sizes = [2, 16], strides = [1, 1]} : vector<2x32xf32> to vector<2x16xf32>
    %405 = vector.extract_strided_slice %403 {offsets = [0, 16], sizes = [2, 16], strides = [1, 1]} : vector<2x32xf32> to vector<2x16xf32>
    %406 = vector.extract_strided_slice %393 {offsets = [0, 32], sizes = [2, 16], strides = [1, 1]} : vector<2x48xf32> to vector<2x16xf32>
    %407 = vector.extract_strided_slice %367 {offsets = [0, 32], sizes = [2, 16], strides = [1, 1]} : vector<2x48xf32> to vector<2x16xf32>
    %408 = arith.mulf %404, %407 : vector<2x16xf32>
    %409 = arith.addf %406, %408 : vector<2x16xf32>
    %410 = math.tanh %409 : vector<2x16xf32>
    %cst_113 = arith.constant 1.000000e+00 : f32
    %411 = vector.broadcast %cst_113 : f32 to vector<2x16xf32>
    %412 = arith.subf %411, %405 : vector<2x16xf32>
    %413 = arith.mulf %412, %410 : vector<2x16xf32>
    %414 = arith.mulf %405, %357 : vector<2x16xf32>
    %415 = arith.addf %413, %414 : vector<2x16xf32>
    %416 = vector.shape_cast %391 : vector<2x16xf32> to vector<2x1x16xf32>
    %c0_114 = arith.constant 0 : index
    %c6_115 = arith.constant 6 : index
    %c0_116 = arith.constant 0 : index
    %417 = vector.load %arg13[%c0_114, %c6_115, %c0_116] : memref<2x8x32xf32, #tpu.memory_space<vmem>>, vector<2x1x16xf32>
    tpu.vector_store %arg13[%c0_114, %c6_115, %c0_116], %416 {strides = array<i32>} : memref<2x8x32xf32, #tpu.memory_space<vmem>>, vector<2x1x16xf32>,
    %418 = vector.shape_cast %415 : vector<2x16xf32> to vector<2x1x16xf32>
    %c0_117 = arith.constant 0 : index
    %c1_118 = arith.constant 1 : index
    %c16_119 = arith.constant 16 : index
    %419 = vector.load %arg13[%c0_117, %c1_118, %c16_119] : memref<2x8x32xf32, #tpu.memory_space<vmem>>, vector<2x1x16xf32>
    tpu.vector_store %arg13[%c0_117, %c1_118, %c16_119], %418 {strides = array<i32>} : memref<2x8x32xf32, #tpu.memory_space<vmem>>, vector<2x1x16xf32>,
    %cst_120 = arith.constant dense<0.000000e+00> : vector<2x48xf32>
    %420 = tpu.matmul %391, %8, %cst_120 {dimension_numbers = #tpu.dot_dimension_numbers<[1], [0], [0], [1], [0, 0, 1, 1], [], []>} : vector<2x16xf32>, vector<16x48xf32>, vector<2x48xf32> -> vector<2x48xf32>
    %421 = vector.broadcast %9 : vector<1x48xf32> to vector<2x48xf32>
    %422 = arith.addf %420, %421 : vector<2x48xf32>
    %cst_121 = arith.constant dense<0.000000e+00> : vector<2x48xf32>
    %423 = tpu.matmul %415, %10, %cst_121 {dimension_numbers = #tpu.dot_dimension_numbers<[1], [0], [0], [1], [0, 0, 1, 1], [], []>} : vector<2x16xf32>, vector<16x48xf32>, vector<2x48xf32> -> vector<2x48xf32>
    %424 = vector.broadcast %11 : vector<1x48xf32> to vector<2x48xf32>
    %425 = arith.addf %423, %424 : vector<2x48xf32>
    %426 = vector.extract_strided_slice %7 {offsets = [0, 7, 0], sizes = [2, 1, 48], strides = [1, 1, 1]} : vector<2x8x96xf32> to vector<2x1x48xf32>
    %427 = vector.shape_cast %426 : vector<2x1x48xf32> to vector<2x48xf32>
    %428 = vector.extract_strided_slice %427 {offsets = [0, 0], sizes = [2, 32], strides = [1, 1]} : vector<2x48xf32> to vector<2x32xf32>
    %429 = vector.extract_strided_slice %422 {offsets = [0, 0], sizes = [2, 32], strides = [1, 1]} : vector<2x48xf32> to vector<2x32xf32>
    %430 = arith.addf %428, %429 : vector<2x32xf32>
    %cst_122 = arith.constant 0.000000e+00 : f32
    %431 = vector.broadcast %cst_122 : f32 to vector<2x32xf32>
    %432 = arith.subf %431, %430 : vector<2x32xf32>
    %433 = math.exp %432 : vector<2x32xf32>
    %cst_123 = arith.constant 1.000000e+00 : f32
    %434 = vector.broadcast %cst_123 : f32 to vector<2x32xf32>
    %435 = arith.addf %434, %433 : vector<2x32xf32>
    %cst_124 = arith.constant 1.000000e+00 : f32
    %436 = vector.broadcast %cst_124 : f32 to vector<2x32xf32>
    %437 = arith.divf %436, %435 : vector<2x32xf32>
    %438 = vector.extract_strided_slice %437 {offsets = [0, 0], sizes = [2, 16], strides = [1, 1]} : vector<2x32xf32> to vector<2x16xf32>
    %439 = vector.extract_strided_slice %437 {offsets = [0, 16], sizes = [2, 16], strides = [1, 1]} : vector<2x32xf32> to vector<2x16xf32>
    %440 = vector.extract_strided_slice %427 {offsets = [0, 32], sizes = [2, 16], strides = [1, 1]} : vector<2x48xf32> to vector<2x16xf32>
    %441 = vector.extract_strided_slice %422 {offsets = [0, 32], sizes = [2, 16], strides = [1, 1]} : vector<2x48xf32> to vector<2x16xf32>
    %442 = arith.mulf %438, %441 : vector<2x16xf32>
    %443 = arith.addf %440, %442 : vector<2x16xf32>
    %444 = math.tanh %443 : vector<2x16xf32>
    %cst_125 = arith.constant 1.000000e+00 : f32
    %445 = vector.broadcast %cst_125 : f32 to vector<2x16xf32>
    %446 = arith.subf %445, %439 : vector<2x16xf32>
    %447 = arith.mulf %446, %444 : vector<2x16xf32>
    %448 = arith.mulf %439, %391 : vector<2x16xf32>
    %449 = arith.addf %447, %448 : vector<2x16xf32>
    %450 = vector.extract_strided_slice %7 {offsets = [0, 0, 48], sizes = [2, 1, 48], strides = [1, 1, 1]} : vector<2x8x96xf32> to vector<2x1x48xf32>
    %451 = vector.shape_cast %450 : vector<2x1x48xf32> to vector<2x48xf32>
    %452 = vector.extract_strided_slice %451 {offsets = [0, 0], sizes = [2, 32], strides = [1, 1]} : vector<2x48xf32> to vector<2x32xf32>
    %453 = vector.extract_strided_slice %425 {offsets = [0, 0], sizes = [2, 32], strides = [1, 1]} : vector<2x48xf32> to vector<2x32xf32>
    %454 = arith.addf %452, %453 : vector<2x32xf32>
    %cst_126 = arith.constant 0.000000e+00 : f32
    %455 = vector.broadcast %cst_126 : f32 to vector<2x32xf32>
    %456 = arith.subf %455, %454 : vector<2x32xf32>
    %457 = math.exp %456 : vector<2x32xf32>
    %cst_127 = arith.constant 1.000000e+00 : f32
    %458 = vector.broadcast %cst_127 : f32 to vector<2x32xf32>
    %459 = arith.addf %458, %457 : vector<2x32xf32>
    %cst_128 = arith.constant 1.000000e+00 : f32
    %460 = vector.broadcast %cst_128 : f32 to vector<2x32xf32>
    %461 = arith.divf %460, %459 : vector<2x32xf32>
    %462 = vector.extract_strided_slice %461 {offsets = [0, 0], sizes = [2, 16], strides = [1, 1]} : vector<2x32xf32> to vector<2x16xf32>
    %463 = vector.extract_strided_slice %461 {offsets = [0, 16], sizes = [2, 16], strides = [1, 1]} : vector<2x32xf32> to vector<2x16xf32>
    %464 = vector.extract_strided_slice %451 {offsets = [0, 32], sizes = [2, 16], strides = [1, 1]} : vector<2x48xf32> to vector<2x16xf32>
    %465 = vector.extract_strided_slice %425 {offsets = [0, 32], sizes = [2, 16], strides = [1, 1]} : vector<2x48xf32> to vector<2x16xf32>
    %466 = arith.mulf %462, %465 : vector<2x16xf32>
    %467 = arith.addf %464, %466 : vector<2x16xf32>
    %468 = math.tanh %467 : vector<2x16xf32>
    %cst_129 = arith.constant 1.000000e+00 : f32
    %469 = vector.broadcast %cst_129 : f32 to vector<2x16xf32>
    %470 = arith.subf %469, %463 : vector<2x16xf32>
    %471 = arith.mulf %470, %468 : vector<2x16xf32>
    %472 = arith.mulf %463, %415 : vector<2x16xf32>
    %473 = arith.addf %471, %472 : vector<2x16xf32>
    %474 = vector.shape_cast %449 : vector<2x16xf32> to vector<2x1x16xf32>
    %c0_130 = arith.constant 0 : index
    %c7_131 = arith.constant 7 : index
    %c0_132 = arith.constant 0 : index
    %475 = vector.load %arg13[%c0_130, %c7_131, %c0_132] : memref<2x8x32xf32, #tpu.memory_space<vmem>>, vector<2x1x16xf32>
    tpu.vector_store %arg13[%c0_130, %c7_131, %c0_132], %474 {strides = array<i32>} : memref<2x8x32xf32, #tpu.memory_space<vmem>>, vector<2x1x16xf32>,
    %476 = vector.shape_cast %473 : vector<2x16xf32> to vector<2x1x16xf32>
    %c0_133 = arith.constant 0 : index
    %c0_134 = arith.constant 0 : index
    %c16_135 = arith.constant 16 : index
    %477 = vector.load %arg13[%c0_133, %c0_134, %c16_135] : memref<2x8x32xf32, #tpu.memory_space<vmem>>, vector<2x1x16xf32>
    tpu.vector_store %arg13[%c0_133, %c0_134, %c16_135], %476 {strides = array<i32>} : memref<2x8x32xf32, #tpu.memory_space<vmem>>, vector<2x1x16xf32>,
    %c0_136 = arith.constant 0 : index
    %c0_137 = arith.constant 0 : index
    %c0_138 = arith.constant 0 : index
    %478 = vector.load %arg13[%c0_136, %c0_137, %c0_138] : memref<2x8x32xf32, #tpu.memory_space<vmem>>, vector<2x8x32xf32>
    %479 = vector.shape_cast %478 : vector<2x8x32xf32> to vector<16x32xf32>
    %c0_139 = arith.constant 0 : index
    %c0_140 = arith.constant 0 : index
    %480 = vector.load %arg8[%c0_139, %c0_140] : memref<32x8xf32, #tpu.memory_space<vmem>>, vector<32x8xf32>
    %cst_141 = arith.constant dense<0.000000e+00> : vector<16x8xf32>
    %481 = tpu.matmul %479, %480, %cst_141 {dimension_numbers = #tpu.dot_dimension_numbers<[1], [0], [0], [1], [0, 0, 1, 1], [], []>} : vector<16x32xf32>, vector<32x8xf32>, vector<16x8xf32> -> vector<16x8xf32>
    %c0_142 = arith.constant 0 : index
    %c0_143 = arith.constant 0 : index
    %482 = vector.load %arg9[%c0_142, %c0_143] : memref<1x8xf32, #tpu.memory_space<vmem>>, vector<1x8xf32>
    %483 = vector.broadcast %482 : vector<1x8xf32> to vector<16x8xf32>
    %484 = arith.addf %481, %483 : vector<16x8xf32>
    %485 = vector.shape_cast %484 : vector<16x8xf32> to vector<2x8x8xf32>
    %c0_144 = arith.constant 0 : index
    %c0_145 = arith.constant 0 : index
    %c0_146 = arith.constant 0 : index
    %486 = vector.load %arg1[%c0_144, %c0_145, %c0_146] : memref<2x8x8xf32, #tpu.memory_space<vmem>>, vector<2x8x8xf32>
    %cst_147 = arith.constant 0.000000e+00 : f32
    %487 = vector.broadcast %cst_147 : f32 to vector<2x8x8xf32>
    %488 = arith.cmpf one, %486, %487 : vector<2x8x8xf32>
    %489 = tpu.iota {dimensions = array<i32: 1>} : vector<2x8x8xi32>
    %490 = tpu.iota {dimensions = array<i32: 2>} : vector<2x8x8xi32>
    %491 = arith.cmpi eq, %489, %490 : vector<2x8x8xi32>
    %492 = arith.ori %488, %491 : vector<2x8x8xi1>
    %cst_148 = arith.constant 0xCB18967F : f32
    %493 = vector.broadcast %cst_148 : f32 to vector<2x8x8xf32>
    %494 = arith.select %492, %485, %493 : vector<2x8x8xi1>, vector<2x8x8xf32>
    %cst_149 = arith.constant dense<0xFF800000> : vector<2x8xf32>
    %495 = vector.multi_reduction <maximumf>, %494, %cst_149 [2] : vector<2x8x8xf32> to vector<2x8xf32>
    %496 = vector.shape_cast %495 : vector<2x8xf32> to vector<2x8x1xf32>
    %497 = vector.broadcast %496 : vector<2x8x1xf32> to vector<2x8x8xf32>
    %498 = arith.subf %494, %497 : vector<2x8x8xf32>
    %499 = math.exp %498 : vector<2x8x8xf32>
    %cst_150 = arith.constant dense<0.000000e+00> : vector<2x8xf32>
    %500 = vector.multi_reduction <add>, %499, %cst_150 [2] : vector<2x8x8xf32> to vector<2x8xf32>
    %501 = vector.shape_cast %500 : vector<2x8xf32> to vector<2x8x1xf32>
    %502 = tpu.reciprocal %501 {approx = true} : vector<2x8x1xf32> -> vector<2x8x1xf32>
    %503 = vector.broadcast %502 : vector<2x8x1xf32> to vector<2x8x8xf32>
    %504 = arith.mulf %499, %503 : vector<2x8x8xf32>
    "tpu.trace_start"() <{level = 10 : i32, message = "bsa,bah->bsh"}> : () -> ()
    %cst_151 = arith.constant dense<0.000000e+00> : vector<2x8x32xf32>
    %505 = tpu.matmul %504, %478, %cst_151 {dimension_numbers = #tpu.dot_dimension_numbers<[2], [1], [1], [2], [0, 0, 0, 1, 1, 2], [0], [0]>} : vector<2x8x8xf32>, vector<2x8x32xf32>, vector<2x8x32xf32> -> vector<2x8x32xf32>
    "tpu.trace_stop"() : () -> ()
    %506 = vector.shape_cast %505 : vector<2x8x32xf32> to vector<16x32xf32>
    %c0_152 = arith.constant 0 : index
    %c0_153 = arith.constant 0 : index
    %507 = vector.load %arg11[%c0_152, %c0_153] : memref<32x32xf32, #tpu.memory_space<vmem>>, vector<32x32xf32>
    %cst_154 = arith.constant dense<0.000000e+00> : vector<16x32xf32>
    %508 = tpu.matmul %506, %507, %cst_154 {dimension_numbers = #tpu.dot_dimension_numbers<[1], [0], [0], [1], [0, 0, 1, 1], [], []>} : vector<16x32xf32>, vector<32x32xf32>, vector<16x32xf32> -> vector<16x32xf32>
    %c0_155 = arith.constant 0 : index
    %c0_156 = arith.constant 0 : index
    %509 = vector.load %arg10[%c0_155, %c0_156] : memref<32x32xf32, #tpu.memory_space<vmem>>, vector<32x32xf32>
    %cst_157 = arith.constant dense<0.000000e+00> : vector<16x32xf32>
    %510 = tpu.matmul %1, %509, %cst_157 {dimension_numbers = #tpu.dot_dimension_numbers<[1], [0], [0], [1], [0, 0, 1, 1], [], []>} : vector<16x32xf32>, vector<32x32xf32>, vector<16x32xf32> -> vector<16x32xf32>
    %511 = arith.addf %508, %510 : vector<16x32xf32>
    %cst_158 = arith.constant 0.000000e+00 : f32
    %512 = vector.broadcast %cst_158 : f32 to vector<16x32xf32>
    %513 = arith.maximumf %511, %512 : vector<16x32xf32>
    %514 = vector.shape_cast %513 : vector<16x32xf32> to vector<2x8x32xf32>
    %c0_159 = arith.constant 0 : index
    %c0_160 = arith.constant 0 : index
    %c0_161 = arith.constant 0 : index
    %515 = vector.load %arg12[%c0_159, %c0_160, %c0_161] : memref<2x8x32xf32, #tpu.memory_space<vmem>>, vector<2x8x32xf32>
    tpu.vector_store %arg12[%c0_159, %c0_160, %c0_161], %514 {strides = array<i32>} : memref<2x8x32xf32, #tpu.memory_space<vmem>>, vector<2x8x32xf32>,
    return
  }
}

</mosaic_0001>

<llo_original>
// kernel: encoder_forward.1
$region0: #{encoder_forward.1}
  #allocation0 [shape = 'u32[]', space=smem, size = 0x4, offset = 0x4, fixed_abs, tag = 'smem constant byte address 0x4 - core index']
  #allocation1 [shape = 'u32[144,128]{1,0:T(1,128)}', space=vmem, size = 0x12000, scoped, tag = 'internal scratch']
  #allocation2 [shape = 'f32[2,8,32]{2,1,0:T(8,128)}', space=vmem, size = 0x2000, scoped, tag = 'scratch operand']
  %s0 = inlined_call_operand.vmem [shape: f32[2,8,32], index: 0, kind: input, shape index: {}]
  %s1 = inlined_call_operand.vmem [shape: f32[2,8,8], index: 1, kind: input, shape index: {}]
  %s2 = inlined_call_operand.vmem [shape: f32[32,96], index: 2, kind: input, shape index: {}]
  %s3 = inlined_call_operand.vmem [shape: f32[1,96], index: 3, kind: input, shape index: {}]
  %s4 = inlined_call_operand.vmem [shape: f32[16,48], index: 4, kind: input, shape index: {}]
  %s5 = inlined_call_operand.vmem [shape: f32[1,48], index: 5, kind: input, shape index: {}]
  %s6 = inlined_call_operand.vmem [shape: f32[16,48], index: 6, kind: input, shape index: {}]
  %s7 = inlined_call_operand.vmem [shape: f32[1,48], index: 7, kind: input, shape index: {}]
  %s8 = inlined_call_operand.vmem [shape: f32[32,8], index: 8, kind: input, shape index: {}]
  %s9 = inlined_call_operand.vmem [shape: f32[1,8], index: 9, kind: input, shape index: {}]
  %s10 = inlined_call_operand.vmem [shape: f32[32,32], index: 10, kind: input, shape index: {}]
  %s11 = inlined_call_operand.vmem [shape: f32[32,32], index: 11, kind: input, shape index: {}]
  %s12 = inlined_call_operand.hbm [shape: f32[2,8,32], index: 12, kind: output, shape index: {}]
  %s13 = sld [smem:[#allocation0]]
  $region58: #{encoder_forward.1} parent=0
    _
  %s15 = ssub.s32 1, %s13
  %s16 = scalar_select 0, %s15, %s13
  $region1: #{encoder_forward.1} parent=0
    #allocation3 [shape = 'u8[8192]{0}', space=vmem, size = 0x2000, scoped, tag = 'output window, operand 0, single buffered']
    #allocation4 [shape = 's32[1]{0}', space=sflag, size = 0x4, scoped, tag = 'scoped memory for encoder_forward.1']
    %17 = vsyncpa [#allocation4], 0
    // Predicated region
    $region2: #{encoder_forward.1} parent=1 // pred_check
      _
    $region3: #{encoder_forward.1} parent=1 // pred_check_branch
      %19 = sbr.rel (0) target = $region5
    $region4: #{encoder_forward.1} parent=1 // pred_region
      _
    $region5: #{encoder_forward.1} parent=1 // pred_fallthru
      _
    // Predicated region
    $region6: #{encoder_forward.1} parent=1 // pred_check
      _
    $region7: #{encoder_forward.1} parent=1 // pred_check_branch
      %21 = sbr.rel (0) target = $region9
    $region8: #{encoder_forward.1} parent=1 // pred_region
      _
    $region9: #{encoder_forward.1} parent=1 // pred_fallthru
      _
    // Predicated region
    $region10: #{encoder_forward.1} parent=1 // pred_check
      _
    $region11: #{encoder_forward.1} parent=1 // pred_check_branch
      %23 = sbr.rel (0) target = $region13
    $region12: #{encoder_forward.1} parent=1 // pred_region
      _
    $region13: #{encoder_forward.1} parent=1 // pred_fallthru
      _
    // Predicated region
    $region14: #{encoder_forward.1} parent=1 // pred_check
      _
    $region15: #{encoder_forward.1} parent=1 // pred_check_branch
      %25 = sbr.rel (0) target = $region17
    $region16: #{encoder_forward.1} parent=1 // pred_region
      _
    $region17: #{encoder_forward.1} parent=1 // pred_fallthru
      _
    // Predicated region
    $region18: #{encoder_forward.1} parent=1 // pred_check
      _
    $region19: #{encoder_forward.1} parent=1 // pred_check_branch
      %27 = sbr.rel (0) target = $region21
    $region20: #{encoder_forward.1} parent=1 // pred_region
      _
    $region21: #{encoder_forward.1} parent=1 // pred_fallthru
      _
    // Predicated region
    $region22: #{encoder_forward.1} parent=1 // pred_check
      _
    $region23: #{encoder_forward.1} parent=1 // pred_check_branch
      %29 = sbr.rel (0) target = $region25
    $region24: #{encoder_forward.1} parent=1 // pred_region
      _
    $region25: #{encoder_forward.1} parent=1 // pred_fallthru
      _
    // Predicated region
    $region26: #{encoder_forward.1} parent=1 // pred_check
      _
    $region27: #{encoder_forward.1} parent=1 // pred_check_branch
      %31 = sbr.rel (0) target = $region29
    $region28: #{encoder_forward.1} parent=1 // pred_region
      _
    $region29: #{encoder_forward.1} parent=1 // pred_fallthru
      _
    // Predicated region
    $region30: #{encoder_forward.1} parent=1 // pred_check
      _
    $region31: #{encoder_forward.1} parent=1 // pred_check_branch
      %33 = sbr.rel (0) target = $region33
    $region32: #{encoder_forward.1} parent=1 // pred_region
      _
    $region33: #{encoder_forward.1} parent=1 // pred_fallthru
      _
    // Predicated region
    $region34: #{encoder_forward.1} parent=1 // pred_check
      _
    $region35: #{encoder_forward.1} parent=1 // pred_check_branch
      %35 = sbr.rel (0) target = $region37
    $region36: #{encoder_forward.1} parent=1 // pred_region
      _
    $region37: #{encoder_forward.1} parent=1 // pred_fallthru
      _
    // Predicated region
    $region38: #{encoder_forward.1} parent=1 // pred_check
      _
    $region39: #{encoder_forward.1} parent=1 // pred_check_branch
      %37 = sbr.rel (0) target = $region41
    $region40: #{encoder_forward.1} parent=1 // pred_region
      _
    $region41: #{encoder_forward.1} parent=1 // pred_fallthru
      _
    // Predicated region
    $region42: #{encoder_forward.1} parent=1 // pred_check
      _
    $region43: #{encoder_forward.1} parent=1 // pred_check_branch
      %39 = sbr.rel (0) target = $region45
    $region44: #{encoder_forward.1} parent=1 // pred_region
      _
    $region45: #{encoder_forward.1} parent=1 // pred_fallthru
      _
    // Predicated region
    $region46: #{encoder_forward.1} parent=1 // pred_check
      _
    $region47: #{encoder_forward.1} parent=1 // pred_check_branch
      %41 = sbr.rel (0) target = $region49
    $region48: #{encoder_forward.1} parent=1 // pred_region
      _
    $region49: #{encoder_forward.1} parent=1 // pred_fallthru
      _
    %v42 = vld [vmem:[%s0] sm:$0xff]
    %v43 = vld [vmem:[%s0 + $0x8] sm:$0xff]
    %v44 = vld [vmem:[%s2] sm:$0xff]
    %v45 = vld [vmem:[%s2 + $0x8] sm:$0xff]
    %v46 = vld [vmem:[%s2 + $0x10] sm:$0xff]
    %v47 = vld [vmem:[%s2 + $0x18] sm:$0xff]
    %v48 = vld [vmem:[%s3] sm:$0x1]
    %v50 = vlaneseq
    %v51 = vshrl.u32 %v50, 7
    %v52 = vsub.s32 0, %v51
    %v53 = vrot.slane %v48, %v52
    %vm55 = vcmask 261120
    %v57 = vsel %vm55, %v42, 0
    %v60 = vsel %vm55, %v43, 0
    %62 = vmatprep.subr.mxu0 0.0
    %63 = vmatpush1.msra.mxu0 %v44
    %64 = vmatprep.subr.mxu0 0.0
    %65 = vmatpush1.msra.mxu0 %v45
    %66 = vmatprep.subr.mxu0 0.0
    %67 = vmatpush1.msra.mxu0 %v46
    %68 = vmatprep.subr.mxu0 0.0
    %69 = vmatpush1.msra.mxu0 %v47
    %70 = vmatprep.subr.mxu0 0.0
    %71 = vmatpush1.msra.mxu0 0.0
    %72 = vmatprep.subr.mxu0 0.0
    %73 = vmatpush1.msra.mxu0 0.0
    %74 = vmatprep.subr.mxu0 0.0
    %75 = vmatpush1.msra.mxu0 0.0
    %76 = vmatprep.subr.mxu0 0.0
    %77 = vmatpush1.msra.mxu0 0.0
    %78 = vmatprep.subr.mxu0 0.0
    %79 = vmatpush1.msra.mxu0 0.0
    %80 = vmatprep.subr.mxu0 0.0
    %81 = vmatpush1.msra.mxu0 0.0
    %82 = vmatprep.subr.mxu0 0.0
    %83 = vmatpush1.msra.mxu0 0.0
    %84 = vmatprep.subr.mxu0 0.0
    %85 = vmatpush1.msra.mxu0 0.0
    %86 = vmatprep.subr.mxu0 0.0
    %87 = vmatpush1.msra.mxu0 0.0
    %88 = vmatprep.subr.mxu0 0.0
    %89 = vmatpush1.msra.mxu0 0.0
    %90 = vmatprep.subr.mxu0 0.0
    %91 = vmatpush1.msra.mxu0 0.0
    %92 = vmatprep.subr.mxu0 0.0
    %93 = vmatpush1.msra.mxu0 0.0
    %94 = vmatprep.subr.mxu0 0.0
    %95 = vmatpush1.msra.mxu0 0.0
    %96 = vmatprep.subr.mxu0 0.0
    %97 = vmatpush1.msra.mxu0 0.0
    %98 = vmatprep.subr.mxu0 0.0
    %99 = vmatpush1.msra.mxu0 0.0
    %100 = vmatprep.subr.mxu0 0.0
    %101 = vmatpush1.msra.mxu0 0.0
    %102 = vmatprep.subr.mxu0 0.0
    %103 = vmatpush1.msra.mxu0 0.0
    %104 = vmatprep.subr.mxu0 0.0
    %105 = vmatpush1.msra.mxu0 0.0
    %106 = vmatprep.subr.mxu0 0.0
    %107 = vmatpush1.msra.mxu0 0.0
    %108 = vmatprep.subr.mxu0 0.0
    %109 = vmatpush1.msra.mxu0 0.0
    %110 = vmatprep.subr.mxu0 0.0
    %111 = vmatpush1.msra.mxu0 0.0
    %112 = vmatprep.subr.mxu0 0.0
    %113 = vmatpush1.msra.mxu0 0.0
    %114 = vmatprep.subr.mxu0 0.0
    %115 = vmatpush1.msra.mxu0 0.0
    %116 = vmatprep.subr.mxu0 0.0
    %117 = vmatpush1.msra.mxu0 0.0
    %118 = vmatprep.subr.mxu0 0.0
    %119 = vmatpush1.msra.mxu0 0.0
    %120 = vmatprep.subr.mxu0 0.0
    %121 = vmatpush1.msra.mxu0 0.0
    %122 = vmatprep.subr.mxu0 0.0
    %123 = vmatpush1.msra.mxu0 0.0
    %124 = vmatprep.subr.mxu0 0.0
    %125 = vmatpush1.msra.mxu0 0.0
    %126 = vmatprep.mubr.f32.mxu0 0.0
    %127 = vmatmul.mubr.f32.gmra.mrb[0].mxu0 %v57
    %v128 = vpop.f32.mrb[0].mxu0
    %v129 = vadd.f32 %v53, %v128
    %v130 = vpop.f32.mrb[0].mxu0
    %131 = vmatprep.mubr.f32.mxu0 0.0
    %132 = vmatmul.mubr.f32.gmra.mrb[0].mxu0 %v60
    %v133 = vpop.f32.mrb[0].mxu0
    %v134 = vadd.f32 %v53, %v133
    %v135 = vpop.f32.mrb[0].mxu0
    %136 = vdwg.mxu0
    %v137 = vld [vmem:[%s4] sm:$0xff]
    %v138 = vld [vmem:[%s4 + $0x8] sm:$0xff]
    %v139 = vld [vmem:[%s5] sm:$0x1]
    %v140 = vld [vmem:[%s6] sm:$0xff]
    %v141 = vld [vmem:[%s6 + $0x8] sm:$0xff]
    %v142 = vld [vmem:[%s7] sm:$0x1]
    %v144 = vlaneseq
    %v145 = vshrl.u32 %v144, 7
    %v146 = vsub.s32 0, %v145
    %v147 = vrot.slane %v139, %v146
    %vm149 = vcmask 130048
    %v151 = vsel %vm149, 0.0, 0
    %153 = vmatprep.subr.mxu0 0.0
    %154 = vmatpush1.msra.mxu0 %v137
    %155 = vmatprep.subr.mxu0 0.0
    %156 = vmatpush1.msra.mxu0 %v138
    %157 = vmatprep.subr.mxu0 0.0
    %158 = vmatpush1.msra.mxu0 0.0
    %159 = vmatprep.subr.mxu0 0.0
    %160 = vmatpush1.msra.mxu0 0.0
    %161 = vmatprep.subr.mxu0 0.0
    %162 = vmatpush1.msra.mxu0 0.0
    %163 = vmatprep.subr.mxu0 0.0
    %164 = vmatpush1.msra.mxu0 0.0
    %165 = vmatprep.subr.mxu0 0.0
    %166 = vmatpush1.msra.mxu0 0.0
    %167 = vmatprep.subr.mxu0 0.0
    %168 = vmatpush1.msra.mxu0 0.0
    %169 = vmatprep.subr.mxu0 0.0
    %170 = vmatpush1.msra.mxu0 0.0
    %171 = vmatprep.subr.mxu0 0.0
    %172 = vmatpush1.msra.mxu0 0.0
    %173 = vmatprep.subr.mxu0 0.0
    %174 = vmatpush1.msra.mxu0 0.0
    %175 = vmatprep.subr.mxu0 0.0
    %176 = vmatpush1.msra.mxu0 0.0
    %177 = vmatprep.subr.mxu0 0.0
    %178 = vmatpush1.msra.mxu0 0.0
    %179 = vmatprep.subr.mxu0 0.0
    %180 = vmatpush1.msra.mxu0 0.0
    %181 = vmatprep.subr.mxu0 0.0
    %182 = vmatpush1.msra.mxu0 0.0
    %183 = vmatprep.subr.mxu0 0.0
    %184 = vmatpush1.msra.mxu0 0.0
    %185 = vmatprep.subr.mxu0 0.0
    %186 = vmatpush1.msra.mxu0 0.0
    %187 = vmatprep.subr.mxu0 0.0
    %188 = vmatpush1.msra.mxu0 0.0
    %189 = vmatprep.subr.mxu0 0.0
    %190 = vmatpush1.msra.mxu0 0.0
    %191 = vmatprep.subr.mxu0 0.0
    %192 = vmatpush1.msra.mxu0 0.0
    %193 = vmatprep.subr.mxu0 0.0
    %194 = vmatpush1.msra.mxu0 0.0
    %195 = vmatprep.subr.mxu0 0.0
    %196 = vmatpush1.msra.mxu0 0.0
    %197 = vmatprep.subr.mxu0 0.0
    %198 = vmatpush1.msra.mxu0 0.0
    %199 = vmatprep.subr.mxu0 0.0
    %200 = vmatpush1.msra.mxu0 0.0
    %201 = vmatprep.subr.mxu0 0.0
    %202 = vmatpush1.msra.mxu0 0.0
    %203 = vmatprep.subr.mxu0 0.0
    %204 = vmatpush1.msra.mxu0 0.0
    %205 = vmatprep.subr.mxu0 0.0
    %206 = vmatpush1.msra.mxu0 0.0
    %207 = vmatprep.subr.mxu0 0.0
    %208 = vmatpush1.msra.mxu0 0.0
    %209 = vmatprep.subr.mxu0 0.0
    %210 = vmatpush1.msra.mxu0 0.0
    %211 = vmatprep.subr.mxu0 0.0
    %212 = vmatpush1.msra.mxu0 0.0
    %213 = vmatprep.subr.mxu0 0.0
    %214 = vmatpush1.msra.mxu0 0.0
    %215 = vmatprep.subr.mxu0 0.0
    %216 = vmatpush1.msra.mxu0 0.0
    %217 = vmatprep.mubr.f32.mxu0 0.0
    %218 = vmatmul.mubr.f32.gmra.mrb[0].mxu0 %v151
    %v219 = vpop.f32.mrb[0].mxu0
    %v220 = vadd.f32 %v147, %v219
    %v221 = vpop.f32.mrb[0].mxu0
    %222 = vdwg.mxu0
    %v224 = vlaneseq
    %v225 = vshrl.u32 %v224, 7
    %v226 = vsub.s32 0, %v225
    %v227 = vrot.slane %v142, %v226
    %229 = vmatprep.subr.mxu0 0.0
    %230 = vmatpush1.msra.mxu0 %v140
    %231 = vmatprep.subr.mxu0 0.0
    %232 = vmatpush1.msra.mxu0 %v141
    %233 = vmatprep.subr.mxu0 0.0
    %234 = vmatpush1.msra.mxu0 0.0
    %235 = vmatprep.subr.mxu0 0.0
    %236 = vmatpush1.msra.mxu0 0.0
    %237 = vmatprep.subr.mxu0 0.0
    %238 = vmatpush1.msra.mxu0 0.0
    %239 = vmatprep.subr.mxu0 0.0
    %240 = vmatpush1.msra.mxu0 0.0
    %241 = vmatprep.subr.mxu0 0.0
    %242 = vmatpush1.msra.mxu0 0.0
    %243 = vmatprep.subr.mxu0 0.0
    %244 = vmatpush1.msra.mxu0 0.0
    %245 = vmatprep.subr.mxu0 0.0
    %246 = vmatpush1.msra.mxu0 0.0
    %247 = vmatprep.subr.mxu0 0.0
    %248 = vmatpush1.msra.mxu0 0.0
    %249 = vmatprep.subr.mxu0 0.0
    %250 = vmatpush1.msra.mxu0 0.0
    %251 = vmatprep.subr.mxu0 0.0
    %252 = vmatpush1.msra.mxu0 0.0
    %253 = vmatprep.subr.mxu0 0.0
    %254 = vmatpush1.msra.mxu0 0.0
    %255 = vmatprep.subr.mxu0 0.0
    %256 = vmatpush1.msra.mxu0 0.0
    %257 = vmatprep.subr.mxu0 0.0
    %258 = vmatpush1.msra.mxu0 0.0
    %259 = vmatprep.subr.mxu0 0.0
    %260 = vmatpush1.msra.mxu0 0.0
    %261 = vmatprep.subr.mxu0 0.0
    %262 = vmatpush1.msra.mxu0 0.0
    %263 = vmatprep.subr.mxu0 0.0
    %264 = vmatpush1.msra.mxu0 0.0
    %265 = vmatprep.subr.mxu0 0.0
    %266 = vmatpush1.msra.mxu0 0.0
    %267 = vmatprep.subr.mxu0 0.0
    %268 = vmatpush1.msra.mxu0 0.0
    %269 = vmatprep.subr.mxu0 0.0
    %270 = vmatpush1.msra.mxu0 0.0
    %271 = vmatprep.subr.mxu0 0.0
    %272 = vmatpush1.msra.mxu0 0.0
    %273 = vmatprep.subr.mxu0 0.0
    %274 = vmatpush1.msra.mxu0 0.0
    %275 = vmatprep.subr.mxu0 0.0
    %276 = vmatpush1.msra.mxu0 0.0
    %277 = vmatprep.subr.mxu0 0.0
    %278 = vmatpush1.msra.mxu0 0.0
    %279 = vmatprep.subr.mxu0 0.0
    %280 = vmatpush1.msra.mxu0 0.0
    %281 = vmatprep.subr.mxu0 0.0
    %282 = vmatpush1.msra.mxu0 0.0
    %283 = vmatprep.subr.mxu0 0.0
    %284 = vmatpush1.msra.mxu0 0.0
    %285 = vmatprep.subr.mxu0 0.0
    %286 = vmatpush1.msra.mxu0 0.0
    %287 = vmatprep.subr.mxu0 0.0
    %288 = vmatpush1.msra.mxu0 0.0
    %289 = vmatprep.subr.mxu0 0.0
    %290 = vmatpush1.msra.mxu0 0.0
    %291 = vmatprep.subr.mxu0 0.0
    %292 = vmatpush1.msra.mxu0 0.0
    %293 = vmatprep.mubr.f32.mxu0 0.0
    %294 = vmatmul.mubr.f32.gmra.mrb[0].mxu0 %v151
    %v295 = vpop.f32.mrb[0].mxu0
    %v296 = vadd.f32 %v227, %v295
    %v297 = vpop.f32.mrb[0].mxu0
    %298 = vdwg.mxu0
    %v300 = vrot.slane %v220, 1
    %v303 = vadd.f32 %v129, %v220
    %v304 = vadd.f32 %v134, %v300
    %v305 = vsub.f32 0.0, %v303
    %v306 = vsub.f32 0.0, %v304
    %v307 = vmul.f32 %v305, 1.442695
    %v308 = vpow.pop %v307
    %v309 = vmul.f32 %v306, 1.442695
    %v310 = vpow.pop %v309
    %v311 = vadd.f32 %v308, 1.0
    %v312 = vadd.f32 %v310, 1.0
    %v313 = vrcp.pop %v311
    %v314 = vmul.f32 1.0, %v313
    %v315 = vrcp.pop %v312
    %v316 = vmul.f32 1.0, %v315
    %317 = vrot.lane.b32.xlu0 %v220, 96
    %v318 = vpop.permute.xlu0 %317
    %319 = vrot.lane.b32.xlu0 %v300, 96
    %v320 = vpop.permute.xlu0 %319
    %v323 = vmul.f32 %v314, %v318
    %v324 = vmul.f32 %v316, %v320
    %327 = vrot.lane.b32.xlu0 %v323, 32
    %v328 = vpop.permute.xlu0 %327
    %329 = vrot.lane.b32.xlu0 %v324, 32
    %v330 = vpop.permute.xlu0 %329
    %v333 = vadd.f32 %v129, %v328
    %v334 = vadd.f32 %v134, %v330
    %v335 = vtanh.pop %v333
    %v336 = vtanh.pop %v334
    %v337 = vsub.f32 1.0, %v314
    %v338 = vsub.f32 1.0, %v316
    %341 = vrot.lane.b32.xlu0 %v335, 112
    %v342 = vpop.permute.xlu0 %341
    %343 = vrot.lane.b32.xlu0 %v336, 112
    %v344 = vpop.permute.xlu0 %343
    %v347 = vmul.f32 %v337, %v342
    %v348 = vmul.f32 %v338, %v344
    %v349 = vmul.f32 %v314, 0.0
    %v350 = vmul.f32 %v316, 0.0
    %v351 = vadd.f32 %v347, %v349
    %v352 = vadd.f32 %v348, %v350
    %v354 = vrot.slane %v296, 1
    %v355 = vrot.slane %v296, 2
    %356 = vrot.lane.b32.xlu0 %v354, 48
    %v357 = vpop.permute.xlu0 %356
    %358 = vrot.lane.b32.xlu0 %v355, 48
    %v359 = vpop.permute.xlu0 %358
    %v362 = vadd.f32 %v129, %v357
    %v363 = vadd.f32 %v134, %v359
    %v364 = vsub.f32 0.0, %v362
    %v365 = vsub.f32 0.0, %v363
    %v366 = vmul.f32 %v364, 1.442695
    %v367 = vpow.pop %v366
    %v368 = vmul.f32 %v365, 1.442695
    %v369 = vpow.pop %v368
    %v370 = vadd.f32 %v367, 1.0
    %v371 = vadd.f32 %v369, 1.0
    %v372 = vrcp.pop %v370
    %v373 = vmul.f32 1.0, %v372
    %v374 = vrcp.pop %v371
    %v375 = vmul.f32 1.0, %v374
    %376 = vrot.lane.b32.xlu0 %v354, 16
    %v377 = vpop.permute.xlu0 %376
    %378 = vrot.lane.b32.xlu0 %v355, 16
    %v379 = vpop.permute.xlu0 %378
    %v382 = vmul.f32 %v373, %v377
    %v383 = vmul.f32 %v375, %v379
    %386 = vrot.lane.b32.xlu0 %v382, 32
    %v387 = vpop.permute.xlu0 %386
    %388 = vrot.lane.b32.xlu0 %v383, 32
    %v389 = vpop.permute.xlu0 %388
    %v392 = vadd.f32 %v129, %v387
    %v393 = vadd.f32 %v134, %v389
    %v394 = vtanh.pop %v392
    %v395 = vtanh.pop %v393
    %v396 = vsub.f32 1.0, %v373
    %v397 = vsub.f32 1.0, %v375
    %400 = vrot.lane.b32.xlu0 %v394, 112
    %v401 = vpop.permute.xlu0 %400
    %402 = vrot.lane.b32.xlu0 %v395, 112
    %v403 = vpop.permute.xlu0 %402
    %v406 = vmul.f32 %v396, %v401
    %v407 = vmul.f32 %v397, %v403
    %v408 = vmul.f32 %v373, 0.0
    %v409 = vmul.f32 %v375, 0.0
    %v410 = vadd.f32 %v406, %v408
    %v411 = vadd.f32 %v407, %v409
    %414 = vrot.lane.b32.xlu0 %v351, 112
    %v415 = vpop.permute.xlu0 %414
    %416 = vrot.lane.b32.xlu0 %v352, 112
    %v417 = vpop.permute.xlu0 %416
    %vm420 = vcmask 122880
    %421 = vst.msk [vmem:[#allocation2] sm:$0x1] %vm420, %v415
    %422 = vst.msk [vmem:[#allocation2 + $0x8] sm:$0x1] %vm420, %v417
    %425 = vrot.lane.b32.xlu0 %v410, 80
    %v426 = vpop.permute.xlu0 %425
    %427 = vrot.lane.b32.xlu0 %v411, 80
    %v428 = vpop.permute.xlu0 %427
    %vm431 = vcmask 261255
    %432 = vst.msk [vmem:[#allocation2] sm:$0x80] %vm431, %v426
    %433 = vst.msk [vmem:[#allocation2 + $0x8] sm:$0x80] %vm431, %v428
    %v434 = vrot.slane %v352, 7
    %vm435 = vcmask 1041409
    %v436 = vsel %vm435, %v434, %v351
    %437 = vrot.lane.b32.xlu0 %v436, 112
    %v438 = vpop.permute.xlu0 %437
    %v439 = vsel %vm149, %v438, 0
    %441 = vmatprep.subr.mxu0 0.0
    %442 = vmatpush1.msra.mxu0 %v137
    %443 = vmatprep.subr.mxu0 0.0
    %444 = vmatpush1.msra.mxu0 %v138
    %445 = vmatprep.subr.mxu0 0.0
    %446 = vmatpush1.msra.mxu0 0.0
    %447 = vmatprep.subr.mxu0 0.0
    %448 = vmatpush1.msra.mxu0 0.0
    %449 = vmatprep.subr.mxu0 0.0
    %450 = vmatpush1.msra.mxu0 0.0
    %451 = vmatprep.subr.mxu0 0.0
    %452 = vmatpush1.msra.mxu0 0.0
    %453 = vmatprep.subr.mxu0 0.0
    %454 = vmatpush1.msra.mxu0 0.0
    %455 = vmatprep.subr.mxu0 0.0
    %456 = vmatpush1.msra.mxu0 0.0
    %457 = vmatprep.subr.mxu0 0.0
    %458 = vmatpush1.msra.mxu0 0.0
    %459 = vmatprep.subr.mxu0 0.0
    %460 = vmatpush1.msra.mxu0 0.0
    %461 = vmatprep.subr.mxu0 0.0
    %462 = vmatpush1.msra.mxu0 0.0
    %463 = vmatprep.subr.mxu0 0.0
    %464 = vmatpush1.msra.mxu0 0.0
    %465 = vmatprep.subr.mxu0 0.0
    %466 = vmatpush1.msra.mxu0 0.0
    %467 = vmatprep.subr.mxu0 0.0
    %468 = vmatpush1.msra.mxu0 0.0
    %469 = vmatprep.subr.mxu0 0.0
    %470 = vmatpush1.msra.mxu0 0.0
    %471 = vmatprep.subr.mxu0 0.0
    %472 = vmatpush1.msra.mxu0 0.0
    %473 = vmatprep.subr.mxu0 0.0
    %474 = vmatpush1.msra.mxu0 0.0
    %475 = vmatprep.subr.mxu0 0.0
    %476 = vmatpush1.msra.mxu0 0.0
    %477 = vmatprep.subr.mxu0 0.0
    %478 = vmatpush1.msra.mxu0 0.0
    %479 = vmatprep.subr.mxu0 0.0
    %480 = vmatpush1.msra.mxu0 0.0
    %481 = vmatprep.subr.mxu0 0.0
    %482 = vmatpush1.msra.mxu0 0.0
    %483 = vmatprep.subr.mxu0 0.0
    %484 = vmatpush1.msra.mxu0 0.0
    %485 = vmatprep.subr.mxu0 0.0
    %486 = vmatpush1.msra.mxu0 0.0
    %487 = vmatprep.subr.mxu0 0.0
    %488 = vmatpush1.msra.mxu0 0.0
    %489 = vmatprep.subr.mxu0 0.0
    %490 = vmatpush1.msra.mxu0 0.0
    %491 = vmatprep.subr.mxu0 0.0
    %492 = vmatpush1.msra.mxu0 0.0
    %493 = vmatprep.subr.mxu0 0.0
    %494 = vmatpush1.msra.mxu0 0.0
    %495 = vmatprep.subr.mxu0 0.0
    %496 = vmatpush1.msra.mxu0 0.0
    %497 = vmatprep.subr.mxu0 0.0
    %498 = vmatpush1.msra.mxu0 0.0
    %499 = vmatprep.subr.mxu0 0.0
    %500 = vmatpush1.msra.mxu0 0.0
    %501 = vmatprep.subr.mxu0 0.0
    %502 = vmatpush1.msra.mxu0 0.0
    %503 = vmatprep.subr.mxu0 0.0
    %504 = vmatpush1.msra.mxu0 0.0
    %505 = vmatprep.mubr.f32.mxu0 0.0
    %506 = vmatmul.mubr.f32.gmra.mrb[0].mxu0 %v439
    %v507 = vpop.f32.mrb[0].mxu0
    %v508 = vadd.f32 %v147, %v507
    %v509 = vpop.f32.mrb[0].mxu0
    %510 = vdwg.mxu0
    %v511 = vrot.slane %v410, 7
    %v512 = vrot.slane %v411, 6
    %v513 = vsel %vm435, %v512, %v511
    %514 = vrot.lane.b32.xlu0 %v513, 64
    %v515 = vpop.permute.xlu0 %514
    %v516 = vsel %vm149, %v515, 0
    %518 = vmatprep.subr.mxu0 0.0
    %519 = vmatpush1.msra.mxu0 %v140
    %520 = vmatprep.subr.mxu0 0.0
    %521 = vmatpush1.msra.mxu0 %v141
    %522 = vmatprep.subr.mxu0 0.0
    %523 = vmatpush1.msra.mxu0 0.0
    %524 = vmatprep.subr.mxu0 0.0
    %525 = vmatpush1.msra.mxu0 0.0
    %526 = vmatprep.subr.mxu0 0.0
    %527 = vmatpush1.msra.mxu0 0.0
    %528 = vmatprep.subr.mxu0 0.0
    %529 = vmatpush1.msra.mxu0 0.0
    %530 = vmatprep.subr.mxu0 0.0
    %531 = vmatpush1.msra.mxu0 0.0
    %532 = vmatprep.subr.mxu0 0.0
    %533 = vmatpush1.msra.mxu0 0.0
    %534 = vmatprep.subr.mxu0 0.0
    %535 = vmatpush1.msra.mxu0 0.0
    %536 = vmatprep.subr.mxu0 0.0
    %537 = vmatpush1.msra.mxu0 0.0
    %538 = vmatprep.subr.mxu0 0.0
    %539 = vmatpush1.msra.mxu0 0.0
    %540 = vmatprep.subr.mxu0 0.0
    %541 = vmatpush1.msra.mxu0 0.0
    %542 = vmatprep.subr.mxu0 0.0
    %543 = vmatpush1.msra.mxu0 0.0
    %544 = vmatprep.subr.mxu0 0.0
    %545 = vmatpush1.msra.mxu0 0.0
    %546 = vmatprep.subr.mxu0 0.0
    %547 = vmatpush1.msra.mxu0 0.0
    %548 = vmatprep.subr.mxu0 0.0
    %549 = vmatpush1.msra.mxu0 0.0
    %550 = vmatprep.subr.mxu0 0.0
    %551 = vmatpush1.msra.mxu0 0.0
    %552 = vmatprep.subr.mxu0 0.0
    %553 = vmatpush1.msra.mxu0 0.0
    %554 = vmatprep.subr.mxu0 0.0
    %555 = vmatpush1.msra.mxu0 0.0
    %556 = vmatprep.subr.mxu0 0.0
    %557 = vmatpush1.msra.mxu0 0.0
    %558 = vmatprep.subr.mxu0 0.0
    %559 = vmatpush1.msra.mxu0 0.0
    %560 = vmatprep.subr.mxu0 0.0
    %561 = vmatpush1.msra.mxu0 0.0
    %562 = vmatprep.subr.mxu0 0.0
    %563 = vmatpush1.msra.mxu0 0.0
    %564 = vmatprep.subr.mxu0 0.0
    %565 = vmatpush1.msra.mxu0 0.0
    %566 = vmatprep.subr.mxu0 0.0
    %567 = vmatpush1.msra.mxu0 0.0
    %568 = vmatprep.subr.mxu0 0.0
    %569 = vmatpush1.msra.mxu0 0.0
    %570 = vmatprep.subr.mxu0 0.0
    %571 = vmatpush1.msra.mxu0 0.0
    %572 = vmatprep.subr.mxu0 0.0
    %573 = vmatpush1.msra.mxu0 0.0
    %574 = vmatprep.subr.mxu0 0.0
    %575 = vmatpush1.msra.mxu0 0.0
    %576 = vmatprep.subr.mxu0 0.0
    %577 = vmatpush1.msra.mxu0 0.0
    %578 = vmatprep.subr.mxu0 0.0
    %579 = vmatpush1.msra.mxu0 0.0
    %580 = vmatprep.subr.mxu0 0.0
    %581 = vmatpush1.msra.mxu0 0.0
    %582 = vmatprep.mubr.f32.mxu0 0.0
    %583 = vmatmul.mubr.f32.gmra.mrb[0].mxu0 %v516
    %v584 = vpop.f32.mrb[0].mxu0
    %v585 = vadd.f32 %v227, %v584
    %v586 = vpop.f32.mrb[0].mxu0
    %587 = vdwg.mxu0
    %v589 = vrot.slane %v508, 7
    %v592 = vadd.f32 %v129, %v589
    %v593 = vadd.f32 %v134, %v508
    %v594 = vsub.f32 0.0, %v592
    %v595 = vsub.f32 0.0, %v593
    %v596 = vmul.f32 %v594, 1.442695
    %v597 = vpow.pop %v596
    %v598 = vmul.f32 %v595, 1.442695
    %v599 = vpow.pop %v598
    %v600 = vadd.f32 %v597, 1.0
    %v601 = vadd.f32 %v599, 1.0
    %v602 = vrcp.pop %v600
    %v603 = vmul.f32 1.0, %v602
    %v604 = vrcp.pop %v601
    %v605 = vmul.f32 1.0, %v604
    %606 = vrot.lane.b32.xlu0 %v589, 96
    %v607 = vpop.permute.xlu0 %606
    %608 = vrot.lane.b32.xlu0 %v508, 96
    %v609 = vpop.permute.xlu0 %608
    %v612 = vmul.f32 %v603, %v607
    %v613 = vmul.f32 %v605, %v609
    %616 = vrot.lane.b32.xlu0 %v612, 32
    %v617 = vpop.permute.xlu0 %616
    %618 = vrot.lane.b32.xlu0 %v613, 32
    %v619 = vpop.permute.xlu0 %618
    %v622 = vadd.f32 %v129, %v617
    %v623 = vadd.f32 %v134, %v619
    %v624 = vtanh.pop %v622
    %v625 = vtanh.pop %v623
    %v626 = vsub.f32 1.0, %v603
    %v627 = vsub.f32 1.0, %v605
    %630 = vrot.lane.b32.xlu0 %v624, 112
    %v631 = vpop.permute.xlu0 %630
    %632 = vrot.lane.b32.xlu0 %v625, 112
    %v633 = vpop.permute.xlu0 %632
    %v636 = vmul.f32 %v626, %v631
    %v637 = vmul.f32 %v627, %v633
    %v638 = vrot.slane %v351, 7
    %v641 = vmul.f32 %v603, %v638
    %v642 = vmul.f32 %v605, %v434
    %v643 = vadd.f32 %v636, %v641
    %v644 = vadd.f32 %v637, %v642
    %v646 = vrot.slane %v585, 2
    %v647 = vrot.slane %v585, 3
    %648 = vrot.lane.b32.xlu0 %v646, 48
    %v649 = vpop.permute.xlu0 %648
    %650 = vrot.lane.b32.xlu0 %v647, 48
    %v651 = vpop.permute.xlu0 %650
    %v654 = vadd.f32 %v129, %v649
    %v655 = vadd.f32 %v134, %v651
    %v656 = vsub.f32 0.0, %v654
    %v657 = vsub.f32 0.0, %v655
    %v658 = vmul.f32 %v656, 1.442695
    %v659 = vpow.pop %v658
    %v660 = vmul.f32 %v657, 1.442695
    %v661 = vpow.pop %v660
    %v662 = vadd.f32 %v659, 1.0
    %v663 = vadd.f32 %v661, 1.0
    %v664 = vrcp.pop %v662
    %v665 = vmul.f32 1.0, %v664
    %v666 = vrcp.pop %v663
    %v667 = vmul.f32 1.0, %v666
    %668 = vrot.lane.b32.xlu0 %v646, 16
    %v669 = vpop.permute.xlu0 %668
    %670 = vrot.lane.b32.xlu0 %v647, 16
    %v671 = vpop.permute.xlu0 %670
    %v674 = vmul.f32 %v665, %v669
    %v675 = vmul.f32 %v667, %v671
    %678 = vrot.lane.b32.xlu0 %v674, 32
    %v679 = vpop.permute.xlu0 %678
    %680 = vrot.lane.b32.xlu0 %v675, 32
    %v681 = vpop.permute.xlu0 %680
    %v684 = vadd.f32 %v129, %v679
    %v685 = vadd.f32 %v134, %v681
    %v686 = vtanh.pop %v684
    %v687 = vtanh.pop %v685
    %v688 = vsub.f32 1.0, %v665
    %v689 = vsub.f32 1.0, %v667
    %692 = vrot.lane.b32.xlu0 %v686, 112
    %v693 = vpop.permute.xlu0 %692
    %694 = vrot.lane.b32.xlu0 %v687, 112
    %v695 = vpop.permute.xlu0 %694
    %v698 = vmul.f32 %v688, %v693
    %v699 = vmul.f32 %v689, %v695
    %v700 = vrot.slane %v410, 1
    %v701 = vrot.slane %v411, 1
    %v704 = vmul.f32 %v665, %v700
    %v705 = vmul.f32 %v667, %v701
    %v706 = vadd.f32 %v698, %v704
    %v707 = vadd.f32 %v699, %v705
    %710 = vrot.lane.b32.xlu0 %v643, 112
    %v711 = vpop.permute.xlu0 %710
    %712 = vrot.lane.b32.xlu0 %v644, 112
    %v713 = vpop.permute.xlu0 %712
    %vm716 = vcmask 123905
    %717 = vst.msk [vmem:[#allocation2] sm:$0x2] %vm716, %v711
    %718 = vst.msk [vmem:[#allocation2 + $0x8] sm:$0x2] %vm716, %v713
    %721 = vrot.lane.b32.xlu0 %v706, 80
    %v722 = vpop.permute.xlu0 %721
    %723 = vrot.lane.b32.xlu0 %v707, 80
    %v724 = vpop.permute.xlu0 %723
    %vm727 = vcmask 260230
    %728 = vst.msk [vmem:[#allocation2] sm:$0x40] %vm727, %v722
    %729 = vst.msk [vmem:[#allocation2 + $0x8] sm:$0x40] %vm727, %v724
    %v730 = vrot.slane %v643, 1
    %v731 = vsel %vm435, %v644, %v730
    %732 = vrot.lane.b32.xlu0 %v731, 112
    %v733 = vpop.permute.xlu0 %732
    %v734 = vsel %vm149, %v733, 0
    %736 = vmatprep.subr.mxu0 0.0
    %737 = vmatpush1.msra.mxu0 %v137
    %738 = vmatprep.subr.mxu0 0.0
    %739 = vmatpush1.msra.mxu0 %v138
    %740 = vmatprep.subr.mxu0 0.0
    %741 = vmatpush1.msra.mxu0 0.0
    %742 = vmatprep.subr.mxu0 0.0
    %743 = vmatpush1.msra.mxu0 0.0
    %744 = vmatprep.subr.mxu0 0.0
    %745 = vmatpush1.msra.mxu0 0.0
    %746 = vmatprep.subr.mxu0 0.0
    %747 = vmatpush1.msra.mxu0 0.0
    %748 = vmatprep.subr.mxu0 0.0
    %749 = vmatpush1.msra.mxu0 0.0
    %750 = vmatprep.subr.mxu0 0.0
    %751 = vmatpush1.msra.mxu0 0.0
    %752 = vmatprep.subr.mxu0 0.0
    %753 = vmatpush1.msra.mxu0 0.0
    %754 = vmatprep.subr.mxu0 0.0
    %755 = vmatpush1.msra.mxu0 0.0
    %756 = vmatprep.subr.mxu0 0.0
    %757 = vmatpush1.msra.mxu0 0.0
    %758 = vmatprep.subr.mxu0 0.0
    %759 = vmatpush1.msra.mxu0 0.0
    %760 = vmatprep.subr.mxu0 0.0
    %761 = vmatpush1.msra.mxu0 0.0
    %762 = vmatprep.subr.mxu0 0.0
    %763 = vmatpush1.msra.mxu0 0.0
    %764 = vmatprep.subr.mxu0 0.0
    %765 = vmatpush1.msra.mxu0 0.0
    %766 = vmatprep.subr.mxu0 0.0
    %767 = vmatpush1.msra.mxu0 0.0
    %768 = vmatprep.subr.mxu0 0.0
    %769 = vmatpush1.msra.mxu0 0.0
    %770 = vmatprep.subr.mxu0 0.0
    %771 = vmatpush1.msra.mxu0 0.0
    %772 = vmatprep.subr.mxu0 0.0
    %773 = vmatpush1.msra.mxu0 0.0
    %774 = vmatprep.subr.mxu0 0.0
    %775 = vmatpush1.msra.mxu0 0.0
    %776 = vmatprep.subr.mxu0 0.0
    %777 = vmatpush1.msra.mxu0 0.0
    %778 = vmatprep.subr.mxu0 0.0
    %779 = vmatpush1.msra.mxu0 0.0
    %780 = vmatprep.subr.mxu0 0.0
    %781 = vmatpush1.msra.mxu0 0.0
    %782 = vmatprep.subr.mxu0 0.0
    %783 = vmatpush1.msra.mxu0 0.0
    %784 = vmatprep.subr.mxu0 0.0
    %785 = vmatpush1.msra.mxu0 0.0
    %786 = vmatprep.subr.mxu0 0.0
    %787 = vmatpush1.msra.mxu0 0.0
    %788 = vmatprep.subr.mxu0 0.0
    %789 = vmatpush1.msra.mxu0 0.0
    %790 = vmatprep.subr.mxu0 0.0
    %791 = vmatpush1.msra.mxu0 0.0
    %792 = vmatprep.subr.mxu0 0.0
    %793 = vmatpush1.msra.mxu0 0.0
    %794 = vmatprep.subr.mxu0 0.0
    %795 = vmatpush1.msra.mxu0 0.0
    %796 = vmatprep.subr.mxu0 0.0
    %797 = vmatpush1.msra.mxu0 0.0
    %798 = vmatprep.subr.mxu0 0.0
    %799 = vmatpush1.msra.mxu0 0.0
    %800 = vmatprep.mubr.f32.mxu0 0.0
    %801 = vmatmul.mubr.f32.gmra.mrb[0].mxu0 %v734
    %v802 = vpop.f32.mrb[0].mxu0
    %v803 = vadd.f32 %v147, %v802
    %v804 = vpop.f32.mrb[0].mxu0
    %805 = vdwg.mxu0
    %v806 = vrot.slane %v706, 6
    %v807 = vrot.slane %v707, 5
    %v808 = vsel %vm435, %v807, %v806
    %809 = vrot.lane.b32.xlu0 %v808, 64
    %v810 = vpop.permute.xlu0 %809
    %v811 = vsel %vm149, %v810, 0
    %813 = vmatprep.subr.mxu0 0.0
    %814 = vmatpush1.msra.mxu0 %v140
    %815 = vmatprep.subr.mxu0 0.0
    %816 = vmatpush1.msra.mxu0 %v141
    %817 = vmatprep.subr.mxu0 0.0
    %818 = vmatpush1.msra.mxu0 0.0
    %819 = vmatprep.subr.mxu0 0.0
    %820 = vmatpush1.msra.mxu0 0.0
    %821 = vmatprep.subr.mxu0 0.0
    %822 = vmatpush1.msra.mxu0 0.0
    %823 = vmatprep.subr.mxu0 0.0
    %824 = vmatpush1.msra.mxu0 0.0
    %825 = vmatprep.subr.mxu0 0.0
    %826 = vmatpush1.msra.mxu0 0.0
    %827 = vmatprep.subr.mxu0 0.0
    %828 = vmatpush1.msra.mxu0 0.0
    %829 = vmatprep.subr.mxu0 0.0
    %830 = vmatpush1.msra.mxu0 0.0
    %831 = vmatprep.subr.mxu0 0.0
    %832 = vmatpush1.msra.mxu0 0.0
    %833 = vmatprep.subr.mxu0 0.0
    %834 = vmatpush1.msra.mxu0 0.0
    %835 = vmatprep.subr.mxu0 0.0
    %836 = vmatpush1.msra.mxu0 0.0
    %837 = vmatprep.subr.mxu0 0.0
    %838 = vmatpush1.msra.mxu0 0.0
    %839 = vmatprep.subr.mxu0 0.0
    %840 = vmatpush1.msra.mxu0 0.0
    %841 = vmatprep.subr.mxu0 0.0
    %842 = vmatpush1.msra.mxu0 0.0
    %843 = vmatprep.subr.mxu0 0.0
    %844 = vmatpush1.msra.mxu0 0.0
    %845 = vmatprep.subr.mxu0 0.0
    %846 = vmatpush1.msra.mxu0 0.0
    %847 = vmatprep.subr.mxu0 0.0
    %848 = vmatpush1.msra.mxu0 0.0
    %849 = vmatprep.subr.mxu0 0.0
    %850 = vmatpush1.msra.mxu0 0.0
    %851 = vmatprep.subr.mxu0 0.0
    %852 = vmatpush1.msra.mxu0 0.0
    %853 = vmatprep.subr.mxu0 0.0
    %854 = vmatpush1.msra.mxu0 0.0
    %855 = vmatprep.subr.mxu0 0.0
    %856 = vmatpush1.msra.mxu0 0.0
    %857 = vmatprep.subr.mxu0 0.0
    %858 = vmatpush1.msra.mxu0 0.0
    %859 = vmatprep.subr.mxu0 0.0
    %860 = vmatpush1.msra.mxu0 0.0
    %861 = vmatprep.subr.mxu0 0.0
    %862 = vmatpush1.msra.mxu0 0.0
    %863 = vmatprep.subr.mxu0 0.0
    %864 = vmatpush1.msra.mxu0 0.0
    %865 = vmatprep.subr.mxu0 0.0
    %866 = vmatpush1.msra.mxu0 0.0
    %867 = vmatprep.subr.mxu0 0.0
    %868 = vmatpush1.msra.mxu0 0.0
    %869 = vmatprep.subr.mxu0 0.0
    %870 = vmatpush1.msra.mxu0 0.0
    %871 = vmatprep.subr.mxu0 0.0
    %872 = vmatpush1.msra.mxu0 0.0
    %873 = vmatprep.subr.mxu0 0.0
    %874 = vmatpush1.msra.mxu0 0.0
    %875 = vmatprep.subr.mxu0 0.0
    %876 = vmatpush1.msra.mxu0 0.0
    %877 = vmatprep.mubr.f32.mxu0 0.0
    %878 = vmatmul.mubr.f32.gmra.mrb[0].mxu0 %v811
    %v879 = vpop.f32.mrb[0].mxu0
    %v880 = vadd.f32 %v227, %v879
    %v881 = vpop.f32.mrb[0].mxu0
    %882 = vdwg.mxu0
    %v884 = vrot.slane %v803, 6
    %v885 = vrot.slane %v803, 7
    %v888 = vadd.f32 %v129, %v884
    %v889 = vadd.f32 %v134, %v885
    %v890 = vsub.f32 0.0, %v888
    %v891 = vsub.f32 0.0, %v889
    %v892 = vmul.f32 %v890, 1.442695
    %v893 = vpow.pop %v892
    %v894 = vmul.f32 %v891, 1.442695
    %v895 = vpow.pop %v894
    %v896 = vadd.f32 %v893, 1.0
    %v897 = vadd.f32 %v895, 1.0
    %v898 = vrcp.pop %v896
    %v899 = vmul.f32 1.0, %v898
    %v900 = vrcp.pop %v897
    %v901 = vmul.f32 1.0, %v900
    %902 = vrot.lane.b32.xlu0 %v884, 96
    %v903 = vpop.permute.xlu0 %902
    %904 = vrot.lane.b32.xlu0 %v885, 96
    %v905 = vpop.permute.xlu0 %904
    %v908 = vmul.f32 %v899, %v903
    %v909 = vmul.f32 %v901, %v905
    %912 = vrot.lane.b32.xlu0 %v908, 32
    %v913 = vpop.permute.xlu0 %912
    %914 = vrot.lane.b32.xlu0 %v909, 32
    %v915 = vpop.permute.xlu0 %914
    %v918 = vadd.f32 %v129, %v913
    %v919 = vadd.f32 %v134, %v915
    %v920 = vtanh.pop %v918
    %v921 = vtanh.pop %v919
    %v922 = vsub.f32 1.0, %v899
    %v923 = vsub.f32 1.0, %v901
    %926 = vrot.lane.b32.xlu0 %v920, 112
    %v927 = vpop.permute.xlu0 %926
    %928 = vrot.lane.b32.xlu0 %v921, 112
    %v929 = vpop.permute.xlu0 %928
    %v932 = vmul.f32 %v922, %v927
    %v933 = vmul.f32 %v923, %v929
    %v934 = vrot.slane %v643, 7
    %v935 = vrot.slane %v644, 7
    %v938 = vmul.f32 %v899, %v934
    %v939 = vmul.f32 %v901, %v935
    %v940 = vadd.f32 %v932, %v938
    %v941 = vadd.f32 %v933, %v939
    %v943 = vrot.slane %v880, 3
    %v944 = vrot.slane %v880, 4
    %945 = vrot.lane.b32.xlu0 %v943, 48
    %v946 = vpop.permute.xlu0 %945
    %947 = vrot.lane.b32.xlu0 %v944, 48
    %v948 = vpop.permute.xlu0 %947
    %v951 = vadd.f32 %v129, %v946
    %v952 = vadd.f32 %v134, %v948
    %v953 = vsub.f32 0.0, %v951
    %v954 = vsub.f32 0.0, %v952
    %v955 = vmul.f32 %v953, 1.442695
    %v956 = vpow.pop %v955
    %v957 = vmul.f32 %v954, 1.442695
    %v958 = vpow.pop %v957
    %v959 = vadd.f32 %v956, 1.0
    %v960 = vadd.f32 %v958, 1.0
    %v961 = vrcp.pop %v959
    %v962 = vmul.f32 1.0, %v961
    %v963 = vrcp.pop %v960
    %v964 = vmul.f32 1.0, %v963
    %965 = vrot.lane.b32.xlu0 %v943, 16
    %v966 = vpop.permute.xlu0 %965
    %967 = vrot.lane.b32.xlu0 %v944, 16
    %v968 = vpop.permute.xlu0 %967
    %v971 = vmul.f32 %v962, %v966
    %v972 = vmul.f32 %v964, %v968
    %975 = vrot.lane.b32.xlu0 %v971, 32
    %v976 = vpop.permute.xlu0 %975
    %977 = vrot.lane.b32.xlu0 %v972, 32
    %v978 = vpop.permute.xlu0 %977
    %v981 = vadd.f32 %v129, %v976
    %v982 = vadd.f32 %v134, %v978
    %v983 = vtanh.pop %v981
    %v984 = vtanh.pop %v982
    %v985 = vsub.f32 1.0, %v962
    %v986 = vsub.f32 1.0, %v964
    %989 = vrot.lane.b32.xlu0 %v983, 112
    %v990 = vpop.permute.xlu0 %989
    %991 = vrot.lane.b32.xlu0 %v984, 112
    %v992 = vpop.permute.xlu0 %991
    %v995 = vmul.f32 %v985, %v990
    %v996 = vmul.f32 %v986, %v992
    %v997 = vrot.slane %v706, 1
    %v998 = vrot.slane %v707, 1
    %v1001 = vmul.f32 %v962, %v997
    %v1002 = vmul.f32 %v964, %v998
    %v1003 = vadd.f32 %v995, %v1001
    %v1004 = vadd.f32 %v996, %v1002
    %1007 = vrot.lane.b32.xlu0 %v940, 112
    %v1008 = vpop.permute.xlu0 %1007
    %1009 = vrot.lane.b32.xlu0 %v941, 112
    %v1010 = vpop.permute.xlu0 %1009
    %vm1013 = vcmask 124930
    %1014 = vst.msk [vmem:[#allocation2] sm:$0x4] %vm1013, %v1008
    %1015 = vst.msk [vmem:[#allocation2 + $0x8] sm:$0x4] %vm1013, %v1010
    %1018 = vrot.lane.b32.xlu0 %v1003, 80
    %v1019 = vpop.permute.xlu0 %1018
    %1020 = vrot.lane.b32.xlu0 %v1004, 80
    %v1021 = vpop.permute.xlu0 %1020
    %vm1024 = vcmask 259205
    %1025 = vst.msk [vmem:[#allocation2] sm:$0x20] %vm1024, %v1019
    %1026 = vst.msk [vmem:[#allocation2 + $0x8] sm:$0x20] %vm1024, %v1021
    %v1027 = vrot.slane %v940, 2
    %v1028 = vrot.slane %v941, 1
    %v1029 = vsel %vm435, %v1028, %v1027
    %1030 = vrot.lane.b32.xlu0 %v1029, 112
    %v1031 = vpop.permute.xlu0 %1030
    %v1032 = vsel %vm149, %v1031, 0
    %1034 = vmatprep.subr.mxu0 0.0
    %1035 = vmatpush1.msra.mxu0 %v137
    %1036 = vmatprep.subr.mxu0 0.0
    %1037 = vmatpush1.msra.mxu0 %v138
    %1038 = vmatprep.subr.mxu0 0.0
    %1039 = vmatpush1.msra.mxu0 0.0
    %1040 = vmatprep.subr.mxu0 0.0
    %1041 = vmatpush1.msra.mxu0 0.0
    %1042 = vmatprep.subr.mxu0 0.0
    %1043 = vmatpush1.msra.mxu0 0.0
    %1044 = vmatprep.subr.mxu0 0.0
    %1045 = vmatpush1.msra.mxu0 0.0
    %1046 = vmatprep.subr.mxu0 0.0
    %1047 = vmatpush1.msra.mxu0 0.0
    %1048 = vmatprep.subr.mxu0 0.0
    %1049 = vmatpush1.msra.mxu0 0.0
    %1050 = vmatprep.subr.mxu0 0.0
    %1051 = vmatpush1.msra.mxu0 0.0
    %1052 = vmatprep.subr.mxu0 0.0
    %1053 = vmatpush1.msra.mxu0 0.0
    %1054 = vmatprep.subr.mxu0 0.0
    %1055 = vmatpush1.msra.mxu0 0.0
    %1056 = vmatprep.subr.mxu0 0.0
    %1057 = vmatpush1.msra.mxu0 0.0
    %1058 = vmatprep.subr.mxu0 0.0
    %1059 = vmatpush1.msra.mxu0 0.0
    %1060 = vmatprep.subr.mxu0 0.0
    %1061 = vmatpush1.msra.mxu0 0.0
    %1062 = vmatprep.subr.mxu0 0.0
    %1063 = vmatpush1.msra.mxu0 0.0
    %1064 = vmatprep.subr.mxu0 0.0
    %1065 = vmatpush1.msra.mxu0 0.0
    %1066 = vmatprep.subr.mxu0 0.0
    %1067 = vmatpush1.msra.mxu0 0.0
    %1068 = vmatprep.subr.mxu0 0.0
    %1069 = vmatpush1.msra.mxu0 0.0
    %1070 = vmatprep.subr.mxu0 0.0
    %1071 = vmatpush1.msra.mxu0 0.0
    %1072 = vmatprep.subr.mxu0 0.0
    %1073 = vmatpush1.msra.mxu0 0.0
    %1074 = vmatprep.subr.mxu0 0.0
    %1075 = vmatpush1.msra.mxu0 0.0
    %1076 = vmatprep.subr.mxu0 0.0
    %1077 = vmatpush1.msra.mxu0 0.0
    %1078 = vmatprep.subr.mxu0 0.0
    %1079 = vmatpush1.msra.mxu0 0.0
    %1080 = vmatprep.subr.mxu0 0.0
    %1081 = vmatpush1.msra.mxu0 0.0
    %1082 = vmatprep.subr.mxu0 0.0
    %1083 = vmatpush1.msra.mxu0 0.0
    %1084 = vmatprep.subr.mxu0 0.0
    %1085 = vmatpush1.msra.mxu0 0.0
    %1086 = vmatprep.subr.mxu0 0.0
    %1087 = vmatpush1.msra.mxu0 0.0
    %1088 = vmatprep.subr.mxu0 0.0
    %1089 = vmatpush1.msra.mxu0 0.0
    %1090 = vmatprep.subr.mxu0 0.0
    %1091 = vmatpush1.msra.mxu0 0.0
    %1092 = vmatprep.subr.mxu0 0.0
    %1093 = vmatpush1.msra.mxu0 0.0
    %1094 = vmatprep.subr.mxu0 0.0
    %1095 = vmatpush1.msra.mxu0 0.0
    %1096 = vmatprep.subr.mxu0 0.0
    %1097 = vmatpush1.msra.mxu0 0.0
    %1098 = vmatprep.mubr.f32.mxu0 0.0
    %1099 = vmatmul.mubr.f32.gmra.mrb[0].mxu0 %v1032
    %v1100 = vpop.f32.mrb[0].mxu0
    %v1101 = vadd.f32 %v147, %v1100
    %v1102 = vpop.f32.mrb[0].mxu0
    %1103 = vdwg.mxu0
    %v1104 = vrot.slane %v1003, 5
    %v1105 = vrot.slane %v1004, 4
    %v1106 = vsel %vm435, %v1105, %v1104
    %1107 = vrot.lane.b32.xlu0 %v1106, 64
    %v1108 = vpop.permute.xlu0 %1107
    %v1109 = vsel %vm149, %v1108, 0
    %1111 = vmatprep.subr.mxu0 0.0
    %1112 = vmatpush1.msra.mxu0 %v140
    %1113 = vmatprep.subr.mxu0 0.0
    %1114 = vmatpush1.msra.mxu0 %v141
    %1115 = vmatprep.subr.mxu0 0.0
    %1116 = vmatpush1.msra.mxu0 0.0
    %1117 = vmatprep.subr.mxu0 0.0
    %1118 = vmatpush1.msra.mxu0 0.0
    %1119 = vmatprep.subr.mxu0 0.0
    %1120 = vmatpush1.msra.mxu0 0.0
    %1121 = vmatprep.subr.mxu0 0.0
    %1122 = vmatpush1.msra.mxu0 0.0
    %1123 = vmatprep.subr.mxu0 0.0
    %1124 = vmatpush1.msra.mxu0 0.0
    %1125 = vmatprep.subr.mxu0 0.0
    %1126 = vmatpush1.msra.mxu0 0.0
    %1127 = vmatprep.subr.mxu0 0.0
    %1128 = vmatpush1.msra.mxu0 0.0
    %1129 = vmatprep.subr.mxu0 0.0
    %1130 = vmatpush1.msra.mxu0 0.0
    %1131 = vmatprep.subr.mxu0 0.0
    %1132 = vmatpush1.msra.mxu0 0.0
    %1133 = vmatprep.subr.mxu0 0.0
    %1134 = vmatpush1.msra.mxu0 0.0
    %1135 = vmatprep.subr.mxu0 0.0
    %1136 = vmatpush1.msra.mxu0 0.0
    %1137 = vmatprep.subr.mxu0 0.0
    %1138 = vmatpush1.msra.mxu0 0.0
    %1139 = vmatprep.subr.mxu0 0.0
    %1140 = vmatpush1.msra.mxu0 0.0
    %1141 = vmatprep.subr.mxu0 0.0
    %1142 = vmatpush1.msra.mxu0 0.0
    %1143 = vmatprep.subr.mxu0 0.0
    %1144 = vmatpush1.msra.mxu0 0.0
    %1145 = vmatprep.subr.mxu0 0.0
    %1146 = vmatpush1.msra.mxu0 0.0
    %1147 = vmatprep.subr.mxu0 0.0
    %1148 = vmatpush1.msra.mxu0 0.0
    %1149 = vmatprep.subr.mxu0 0.0
    %1150 = vmatpush1.msra.mxu0 0.0
    %1151 = vmatprep.subr.mxu0 0.0
    %1152 = vmatpush1.msra.mxu0 0.0
    %1153 = vmatprep.subr.mxu0 0.0
    %1154 = vmatpush1.msra.mxu0 0.0
    %1155 = vmatprep.subr.mxu0 0.0
    %1156 = vmatpush1.msra.mxu0 0.0
    %1157 = vmatprep.subr.mxu0 0.0
    %1158 = vmatpush1.msra.mxu0 0.0
    %1159 = vmatprep.subr.mxu0 0.0
    %1160 = vmatpush1.msra.mxu0 0.0
    %1161 = vmatprep.subr.mxu0 0.0
    %1162 = vmatpush1.msra.mxu0 0.0
    %1163 = vmatprep.subr.mxu0 0.0
    %1164 = vmatpush1.msra.mxu0 0.0
    %1165 = vmatprep.subr.mxu0 0.0
    %1166 = vmatpush1.msra.mxu0 0.0
    %1167 = vmatprep.subr.mxu0 0.0
    %1168 = vmatpush1.msra.mxu0 0.0
    %1169 = vmatprep.subr.mxu0 0.0
    %1170 = vmatpush1.msra.mxu0 0.0
    %1171 = vmatprep.subr.mxu0 0.0
    %1172 = vmatpush1.msra.mxu0 0.0
    %1173 = vmatprep.subr.mxu0 0.0
    %1174 = vmatpush1.msra.mxu0 0.0
    %1175 = vmatprep.mubr.f32.mxu0 0.0
    %1176 = vmatmul.mubr.f32.gmra.mrb[0].mxu0 %v1109
    %v1177 = vpop.f32.mrb[0].mxu0
    %v1178 = vadd.f32 %v227, %v1177
    %v1179 = vpop.f32.mrb[0].mxu0
    %1180 = vdwg.mxu0
    %v1182 = vrot.slane %v1101, 5
    %v1183 = vrot.slane %v1101, 6
    %v1186 = vadd.f32 %v129, %v1182
    %v1187 = vadd.f32 %v134, %v1183
    %v1188 = vsub.f32 0.0, %v1186
    %v1189 = vsub.f32 0.0, %v1187
    %v1190 = vmul.f32 %v1188, 1.442695
    %v1191 = vpow.pop %v1190
    %v1192 = vmul.f32 %v1189, 1.442695
    %v1193 = vpow.pop %v1192
    %v1194 = vadd.f32 %v1191, 1.0
    %v1195 = vadd.f32 %v1193, 1.0
    %v1196 = vrcp.pop %v1194
    %v1197 = vmul.f32 1.0, %v1196
    %v1198 = vrcp.pop %v1195
    %v1199 = vmul.f32 1.0, %v1198
    %1200 = vrot.lane.b32.xlu0 %v1182, 96
    %v1201 = vpop.permute.xlu0 %1200
    %1202 = vrot.lane.b32.xlu0 %v1183, 96
    %v1203 = vpop.permute.xlu0 %1202
    %v1206 = vmul.f32 %v1197, %v1201
    %v1207 = vmul.f32 %v1199, %v1203
    %1210 = vrot.lane.b32.xlu0 %v1206, 32
    %v1211 = vpop.permute.xlu0 %1210
    %1212 = vrot.lane.b32.xlu0 %v1207, 32
    %v1213 = vpop.permute.xlu0 %1212
    %v1216 = vadd.f32 %v129, %v1211
    %v1217 = vadd.f32 %v134, %v1213
    %v1218 = vtanh.pop %v1216
    %v1219 = vtanh.pop %v1217
    %v1220 = vsub.f32 1.0, %v1197
    %v1221 = vsub.f32 1.0, %v1199
    %1224 = vrot.lane.b32.xlu0 %v1218, 112
    %v1225 = vpop.permute.xlu0 %1224
    %1226 = vrot.lane.b32.xlu0 %v1219, 112
    %v1227 = vpop.permute.xlu0 %1226
    %v1230 = vmul.f32 %v1220, %v1225
    %v1231 = vmul.f32 %v1221, %v1227
    %v1232 = vrot.slane %v940, 7
    %v1233 = vrot.slane %v941, 7
    %v1236 = vmul.f32 %v1197, %v1232
    %v1237 = vmul.f32 %v1199, %v1233
    %v1238 = vadd.f32 %v1230, %v1236
    %v1239 = vadd.f32 %v1231, %v1237
    %v1241 = vrot.slane %v1178, 4
    %v1242 = vrot.slane %v1178, 5
    %1243 = vrot.lane.b32.xlu0 %v1241, 48
    %v1244 = vpop.permute.xlu0 %1243
    %1245 = vrot.lane.b32.xlu0 %v1242, 48
    %v1246 = vpop.permute.xlu0 %1245
    %v1249 = vadd.f32 %v129, %v1244
    %v1250 = vadd.f32 %v134, %v1246
    %v1251 = vsub.f32 0.0, %v1249
    %v1252 = vsub.f32 0.0, %v1250
    %v1253 = vmul.f32 %v1251, 1.442695
    %v1254 = vpow.pop %v1253
    %v1255 = vmul.f32 %v1252, 1.442695
    %v1256 = vpow.pop %v1255
    %v1257 = vadd.f32 %v1254, 1.0
    %v1258 = vadd.f32 %v1256, 1.0
    %v1259 = vrcp.pop %v1257
    %v1260 = vmul.f32 1.0, %v1259
    %v1261 = vrcp.pop %v1258
    %v1262 = vmul.f32 1.0, %v1261
    %1263 = vrot.lane.b32.xlu0 %v1241, 16
    %v1264 = vpop.permute.xlu0 %1263
    %1265 = vrot.lane.b32.xlu0 %v1242, 16
    %v1266 = vpop.permute.xlu0 %1265
    %v1269 = vmul.f32 %v1260, %v1264
    %v1270 = vmul.f32 %v1262, %v1266
    %1273 = vrot.lane.b32.xlu0 %v1269, 32
    %v1274 = vpop.permute.xlu0 %1273
    %1275 = vrot.lane.b32.xlu0 %v1270, 32
    %v1276 = vpop.permute.xlu0 %1275
    %v1279 = vadd.f32 %v129, %v1274
    %v1280 = vadd.f32 %v134, %v1276
    %v1281 = vtanh.pop %v1279
    %v1282 = vtanh.pop %v1280
    %v1283 = vsub.f32 1.0, %v1260
    %v1284 = vsub.f32 1.0, %v1262
    %1287 = vrot.lane.b32.xlu0 %v1281, 112
    %v1288 = vpop.permute.xlu0 %1287
    %1289 = vrot.lane.b32.xlu0 %v1282, 112
    %v1290 = vpop.permute.xlu0 %1289
    %v1293 = vmul.f32 %v1283, %v1288
    %v1294 = vmul.f32 %v1284, %v1290
    %v1295 = vrot.slane %v1003, 1
    %v1296 = vrot.slane %v1004, 1
    %v1299 = vmul.f32 %v1260, %v1295
    %v1300 = vmul.f32 %v1262, %v1296
    %v1301 = vadd.f32 %v1293, %v1299
    %v1302 = vadd.f32 %v1294, %v1300
    %1305 = vrot.lane.b32.xlu0 %v1238, 112
    %v1306 = vpop.permute.xlu0 %1305
    %1307 = vrot.lane.b32.xlu0 %v1239, 112
    %v1308 = vpop.permute.xlu0 %1307
    %vm1311 = vcmask 125955
    %1312 = vst.msk [vmem:[#allocation2] sm:$0x8] %vm1311, %v1306
    %1313 = vst.msk [vmem:[#allocation2 + $0x8] sm:$0x8] %vm1311, %v1308
    %1316 = vrot.lane.b32.xlu0 %v1301, 80
    %v1317 = vpop.permute.xlu0 %1316
    %1318 = vrot.lane.b32.xlu0 %v1302, 80
    %v1319 = vpop.permute.xlu0 %1318
    %vm1322 = vcmask 258180
    %1323 = vst.msk [vmem:[#allocation2] sm:$0x10] %vm1322, %v1317
    %1324 = vst.msk [vmem:[#allocation2 + $0x8] sm:$0x10] %vm1322, %v1319
    %v1325 = vrot.slane %v1238, 3
    %v1326 = vrot.slane %v1239, 2
    %v1327 = vsel %vm435, %v1326, %v1325
    %1328 = vrot.lane.b32.xlu0 %v1327, 112
    %v1329 = vpop.permute.xlu0 %1328
    %v1330 = vsel %vm149, %v1329, 0
    %1332 = vmatprep.subr.mxu0 0.0
    %1333 = vmatpush1.msra.mxu0 %v137
    %1334 = vmatprep.subr.mxu0 0.0
    %1335 = vmatpush1.msra.mxu0 %v138
    %1336 = vmatprep.subr.mxu0 0.0
    %1337 = vmatpush1.msra.mxu0 0.0
    %1338 = vmatprep.subr.mxu0 0.0
    %1339 = vmatpush1.msra.mxu0 0.0
    %1340 = vmatprep.subr.mxu0 0.0
    %1341 = vmatpush1.msra.mxu0 0.0
    %1342 = vmatprep.subr.mxu0 0.0
    %1343 = vmatpush1.msra.mxu0 0.0
    %1344 = vmatprep.subr.mxu0 0.0
    %1345 = vmatpush1.msra.mxu0 0.0
    %1346 = vmatprep.subr.mxu0 0.0
    %1347 = vmatpush1.msra.mxu0 0.0
    %1348 = vmatprep.subr.mxu0 0.0
    %1349 = vmatpush1.msra.mxu0 0.0
    %1350 = vmatprep.subr.mxu0 0.0
    %1351 = vmatpush1.msra.mxu0 0.0
    %1352 = vmatprep.subr.mxu0 0.0
    %1353 = vmatpush1.msra.mxu0 0.0
    %1354 = vmatprep.subr.mxu0 0.0
    %1355 = vmatpush1.msra.mxu0 0.0
    %1356 = vmatprep.subr.mxu0 0.0
    %1357 = vmatpush1.msra.mxu0 0.0
    %1358 = vmatprep.subr.mxu0 0.0
    %1359 = vmatpush1.msra.mxu0 0.0
    %1360 = vmatprep.subr.mxu0 0.0
    %1361 = vmatpush1.msra.mxu0 0.0
    %1362 = vmatprep.subr.mxu0 0.0
    %1363 = vmatpush1.msra.mxu0 0.0
    %1364 = vmatprep.subr.mxu0 0.0
    %1365 = vmatpush1.msra.mxu0 0.0
    %1366 = vmatprep.subr.mxu0 0.0
    %1367 = vmatpush1.msra.mxu0 0.0
    %1368 = vmatprep.subr.mxu0 0.0
    %1369 = vmatpush1.msra.mxu0 0.0
    %1370 = vmatprep.subr.mxu0 0.0
    %1371 = vmatpush1.msra.mxu0 0.0
    %1372 = vmatprep.subr.mxu0 0.0
    %1373 = vmatpush1.msra.mxu0 0.0
    %1374 = vmatprep.subr.mxu0 0.0
    %1375 = vmatpush1.msra.mxu0 0.0
    %1376 = vmatprep.subr.mxu0 0.0
    %1377 = vmatpush1.msra.mxu0 0.0
    %1378 = vmatprep.subr.mxu0 0.0
    %1379 = vmatpush1.msra.mxu0 0.0
    %1380 = vmatprep.subr.mxu0 0.0
    %1381 = vmatpush1.msra.mxu0 0.0
    %1382 = vmatprep.subr.mxu0 0.0
    %1383 = vmatpush1.msra.mxu0 0.0
    %1384 = vmatprep.subr.mxu0 0.0
    %1385 = vmatpush1.msra.mxu0 0.0
    %1386 = vmatprep.subr.mxu0 0.0
    %1387 = vmatpush1.msra.mxu0 0.0
    %1388 = vmatprep.subr.mxu0 0.0
    %1389 = vmatpush1.msra.mxu0 0.0
    %1390 = vmatprep.subr.mxu0 0.0
    %1391 = vmatpush1.msra.mxu0 0.0
    %1392 = vmatprep.subr.mxu0 0.0
    %1393 = vmatpush1.msra.mxu0 0.0
    %1394 = vmatprep.subr.mxu0 0.0
    %1395 = vmatpush1.msra.mxu0 0.0
    %1396 = vmatprep.mubr.f32.mxu0 0.0
    %1397 = vmatmul.mubr.f32.gmra.mrb[0].mxu0 %v1330
    %v1398 = vpop.f32.mrb[0].mxu0
    %v1399 = vadd.f32 %v147, %v1398
    %v1400 = vpop.f32.mrb[0].mxu0
    %1401 = vdwg.mxu0
    %v1402 = vrot.slane %v1301, 4
    %v1403 = vrot.slane %v1302, 3
    %v1404 = vsel %vm435, %v1403, %v1402
    %1405 = vrot.lane.b32.xlu0 %v1404, 64
    %v1406 = vpop.permute.xlu0 %1405
    %v1407 = vsel %vm149, %v1406, 0
    %1409 = vmatprep.subr.mxu0 0.0
    %1410 = vmatpush1.msra.mxu0 %v140
    %1411 = vmatprep.subr.mxu0 0.0
    %1412 = vmatpush1.msra.mxu0 %v141
    %1413 = vmatprep.subr.mxu0 0.0
    %1414 = vmatpush1.msra.mxu0 0.0
    %1415 = vmatprep.subr.mxu0 0.0
    %1416 = vmatpush1.msra.mxu0 0.0
    %1417 = vmatprep.subr.mxu0 0.0
    %1418 = vmatpush1.msra.mxu0 0.0
    %1419 = vmatprep.subr.mxu0 0.0
    %1420 = vmatpush1.msra.mxu0 0.0
    %1421 = vmatprep.subr.mxu0 0.0
    %1422 = vmatpush1.msra.mxu0 0.0
    %1423 = vmatprep.subr.mxu0 0.0
    %1424 = vmatpush1.msra.mxu0 0.0
    %1425 = vmatprep.subr.mxu0 0.0
    %1426 = vmatpush1.msra.mxu0 0.0
    %1427 = vmatprep.subr.mxu0 0.0
    %1428 = vmatpush1.msra.mxu0 0.0
    %1429 = vmatprep.subr.mxu0 0.0
    %1430 = vmatpush1.msra.mxu0 0.0
    %1431 = vmatprep.subr.mxu0 0.0
    %1432 = vmatpush1.msra.mxu0 0.0
    %1433 = vmatprep.subr.mxu0 0.0
    %1434 = vmatpush1.msra.mxu0 0.0
    %1435 = vmatprep.subr.mxu0 0.0
    %1436 = vmatpush1.msra.mxu0 0.0
    %1437 = vmatprep.subr.mxu0 0.0
    %1438 = vmatpush1.msra.mxu0 0.0
    %1439 = vmatprep.subr.mxu0 0.0
    %1440 = vmatpush1.msra.mxu0 0.0
    %1441 = vmatprep.subr.mxu0 0.0
    %1442 = vmatpush1.msra.mxu0 0.0
    %1443 = vmatprep.subr.mxu0 0.0
    %1444 = vmatpush1.msra.mxu0 0.0
    %1445 = vmatprep.subr.mxu0 0.0
    %1446 = vmatpush1.msra.mxu0 0.0
    %1447 = vmatprep.subr.mxu0 0.0
    %1448 = vmatpush1.msra.mxu0 0.0
    %1449 = vmatprep.subr.mxu0 0.0
    %1450 = vmatpush1.msra.mxu0 0.0
    %1451 = vmatprep.subr.mxu0 0.0
    %1452 = vmatpush1.msra.mxu0 0.0
    %1453 = vmatprep.subr.mxu0 0.0
    %1454 = vmatpush1.msra.mxu0 0.0
    %1455 = vmatprep.subr.mxu0 0.0
    %1456 = vmatpush1.msra.mxu0 0.0
    %1457 = vmatprep.subr.mxu0 0.0
    %1458 = vmatpush1.msra.mxu0 0.0
    %1459 = vmatprep.subr.mxu0 0.0
    %1460 = vmatpush1.msra.mxu0 0.0
    %1461 = vmatprep.subr.mxu0 0.0
    %1462 = vmatpush1.msra.mxu0 0.0
    %1463 = vmatprep.subr.mxu0 0.0
    %1464 = vmatpush1.msra.mxu0 0.0
    %1465 = vmatprep.subr.mxu0 0.0
    %1466 = vmatpush1.msra.mxu0 0.0
    %1467 = vmatprep.subr.mxu0 0.0
    %1468 = vmatpush1.msra.mxu0 0.0
    %1469 = vmatprep.subr.mxu0 0.0
    %1470 = vmatpush1.msra.mxu0 0.0
    %1471 = vmatprep.subr.mxu0 0.0
    %1472 = vmatpush1.msra.mxu0 0.0
    %1473 = vmatprep.mubr.f32.mxu0 0.0
    %1474 = vmatmul.mubr.f32.gmra.mrb[0].mxu0 %v1407
    %v1475 = vpop.f32.mrb[0].mxu0
    %v1476 = vadd.f32 %v227, %v1475
    %v1477 = vpop.f32.mrb[0].mxu0
    %1478 = vdwg.mxu0
    %v1480 = vrot.slane %v1399, 4
    %v1481 = vrot.slane %v1399, 5
    %v1484 = vadd.f32 %v129, %v1480
    %v1485 = vadd.f32 %v134, %v1481
    %v1486 = vsub.f32 0.0, %v1484
    %v1487 = vsub.f32 0.0, %v1485
    %v1488 = vmul.f32 %v1486, 1.442695
    %v1489 = vpow.pop %v1488
    %v1490 = vmul.f32 %v1487, 1.442695
    %v1491 = vpow.pop %v1490
    %v1492 = vadd.f32 %v1489, 1.0
    %v1493 = vadd.f32 %v1491, 1.0
    %v1494 = vrcp.pop %v1492
    %v1495 = vmul.f32 1.0, %v1494
    %v1496 = vrcp.pop %v1493
    %v1497 = vmul.f32 1.0, %v1496
    %1498 = vrot.lane.b32.xlu0 %v1480, 96
    %v1499 = vpop.permute.xlu0 %1498
    %1500 = vrot.lane.b32.xlu0 %v1481, 96
    %v1501 = vpop.permute.xlu0 %1500
    %v1504 = vmul.f32 %v1495, %v1499
    %v1505 = vmul.f32 %v1497, %v1501
    %1508 = vrot.lane.b32.xlu0 %v1504, 32
    %v1509 = vpop.permute.xlu0 %1508
    %1510 = vrot.lane.b32.xlu0 %v1505, 32
    %v1511 = vpop.permute.xlu0 %1510
    %v1514 = vadd.f32 %v129, %v1509
    %v1515 = vadd.f32 %v134, %v1511
    %v1516 = vtanh.pop %v1514
    %v1517 = vtanh.pop %v1515
    %v1518 = vsub.f32 1.0, %v1495
    %v1519 = vsub.f32 1.0, %v1497
    %1522 = vrot.lane.b32.xlu0 %v1516, 112
    %v1523 = vpop.permute.xlu0 %1522
    %1524 = vrot.lane.b32.xlu0 %v1517, 112
    %v1525 = vpop.permute.xlu0 %1524
    %v1528 = vmul.f32 %v1518, %v1523
    %v1529 = vmul.f32 %v1519, %v1525
    %v1530 = vrot.slane %v1238, 7
    %v1531 = vrot.slane %v1239, 7
    %v1534 = vmul.f32 %v1495, %v1530
    %v1535 = vmul.f32 %v1497, %v1531
    %v1536 = vadd.f32 %v1528, %v1534
    %v1537 = vadd.f32 %v1529, %v1535
    %v1539 = vrot.slane %v1476, 5
    %v1540 = vrot.slane %v1476, 6
    %1541 = vrot.lane.b32.xlu0 %v1539, 48
    %v1542 = vpop.permute.xlu0 %1541
    %1543 = vrot.lane.b32.xlu0 %v1540, 48
    %v1544 = vpop.permute.xlu0 %1543
    %v1547 = vadd.f32 %v129, %v1542
    %v1548 = vadd.f32 %v134, %v1544
    %v1549 = vsub.f32 0.0, %v1547
    %v1550 = vsub.f32 0.0, %v1548
    %v1551 = vmul.f32 %v1549, 1.442695
    %v1552 = vpow.pop %v1551
    %v1553 = vmul.f32 %v1550, 1.442695
    %v1554 = vpow.pop %v1553
    %v1555 = vadd.f32 %v1552, 1.0
    %v1556 = vadd.f32 %v1554, 1.0
    %v1557 = vrcp.pop %v1555
    %v1558 = vmul.f32 1.0, %v1557
    %v1559 = vrcp.pop %v1556
    %v1560 = vmul.f32 1.0, %v1559
    %1561 = vrot.lane.b32.xlu0 %v1539, 16
    %v1562 = vpop.permute.xlu0 %1561
    %1563 = vrot.lane.b32.xlu0 %v1540, 16
    %v1564 = vpop.permute.xlu0 %1563
    %v1567 = vmul.f32 %v1558, %v1562
    %v1568 = vmul.f32 %v1560, %v1564
    %1571 = vrot.lane.b32.xlu0 %v1567, 32
    %v1572 = vpop.permute.xlu0 %1571
    %1573 = vrot.lane.b32.xlu0 %v1568, 32
    %v1574 = vpop.permute.xlu0 %1573
    %v1577 = vadd.f32 %v129, %v1572
    %v1578 = vadd.f32 %v134, %v1574
    %v1579 = vtanh.pop %v1577
    %v1580 = vtanh.pop %v1578
    %v1581 = vsub.f32 1.0, %v1558
    %v1582 = vsub.f32 1.0, %v1560
    %1585 = vrot.lane.b32.xlu0 %v1579, 112
    %v1586 = vpop.permute.xlu0 %1585
    %1587 = vrot.lane.b32.xlu0 %v1580, 112
    %v1588 = vpop.permute.xlu0 %1587
    %v1591 = vmul.f32 %v1581, %v1586
    %v1592 = vmul.f32 %v1582, %v1588
    %v1593 = vrot.slane %v1301, 1
    %v1594 = vrot.slane %v1302, 1
    %v1597 = vmul.f32 %v1558, %v1593
    %v1598 = vmul.f32 %v1560, %v1594
    %v1599 = vadd.f32 %v1591, %v1597
    %v1600 = vadd.f32 %v1592, %v1598
    %1603 = vrot.lane.b32.xlu0 %v1536, 112
    %v1604 = vpop.permute.xlu0 %1603
    %1605 = vrot.lane.b32.xlu0 %v1537, 112
    %v1606 = vpop.permute.xlu0 %1605
    %vm1609 = vcmask 126980
    %1610 = vst.msk [vmem:[#allocation2] sm:$0x10] %vm1609, %v1604
    %1611 = vst.msk [vmem:[#allocation2 + $0x8] sm:$0x10] %vm1609, %v1606
    %1614 = vrot.lane.b32.xlu0 %v1599, 80
    %v1615 = vpop.permute.xlu0 %1614
    %1616 = vrot.lane.b32.xlu0 %v1600, 80
    %v1617 = vpop.permute.xlu0 %1616
    %vm1620 = vcmask 257155
    %1621 = vst.msk [vmem:[#allocation2] sm:$0x8] %vm1620, %v1615
    %1622 = vst.msk [vmem:[#allocation2 + $0x8] sm:$0x8] %vm1620, %v1617
    %v1623 = vrot.slane %v1536, 4
    %v1624 = vrot.slane %v1537, 3
    %v1625 = vsel %vm435, %v1624, %v1623
    %1626 = vrot.lane.b32.xlu0 %v1625, 112
    %v1627 = vpop.permute.xlu0 %1626
    %v1628 = vsel %vm149, %v1627, 0
    %1630 = vmatprep.subr.mxu0 0.0
    %1631 = vmatpush1.msra.mxu0 %v137
    %1632 = vmatprep.subr.mxu0 0.0
    %1633 = vmatpush1.msra.mxu0 %v138
    %1634 = vmatprep.subr.mxu0 0.0
    %1635 = vmatpush1.msra.mxu0 0.0
    %1636 = vmatprep.subr.mxu0 0.0
    %1637 = vmatpush1.msra.mxu0 0.0
    %1638 = vmatprep.subr.mxu0 0.0
    %1639 = vmatpush1.msra.mxu0 0.0
    %1640 = vmatprep.subr.mxu0 0.0
    %1641 = vmatpush1.msra.mxu0 0.0
    %1642 = vmatprep.subr.mxu0 0.0
    %1643 = vmatpush1.msra.mxu0 0.0
    %1644 = vmatprep.subr.mxu0 0.0
    %1645 = vmatpush1.msra.mxu0 0.0
    %1646 = vmatprep.subr.mxu0 0.0
    %1647 = vmatpush1.msra.mxu0 0.0
    %1648 = vmatprep.subr.mxu0 0.0
    %1649 = vmatpush1.msra.mxu0 0.0
    %1650 = vmatprep.subr.mxu0 0.0
    %1651 = vmatpush1.msra.mxu0 0.0
    %1652 = vmatprep.subr.mxu0 0.0
    %1653 = vmatpush1.msra.mxu0 0.0
    %1654 = vmatprep.subr.mxu0 0.0
    %1655 = vmatpush1.msra.mxu0 0.0
    %1656 = vmatprep.subr.mxu0 0.0
    %1657 = vmatpush1.msra.mxu0 0.0
    %1658 = vmatprep.subr.mxu0 0.0
    %1659 = vmatpush1.msra.mxu0 0.0
    %1660 = vmatprep.subr.mxu0 0.0
    %1661 = vmatpush1.msra.mxu0 0.0
    %1662 = vmatprep.subr.mxu0 0.0
    %1663 = vmatpush1.msra.mxu0 0.0
    %1664 = vmatprep.subr.mxu0 0.0
    %1665 = vmatpush1.msra.mxu0 0.0
    %1666 = vmatprep.subr.mxu0 0.0
    %1667 = vmatpush1.msra.mxu0 0.0
    %1668 = vmatprep.subr.mxu0 0.0
    %1669 = vmatpush1.msra.mxu0 0.0
    %1670 = vmatprep.subr.mxu0 0.0
    %1671 = vmatpush1.msra.mxu0 0.0
    %1672 = vmatprep.subr.mxu0 0.0
    %1673 = vmatpush1.msra.mxu0 0.0
    %1674 = vmatprep.subr.mxu0 0.0
    %1675 = vmatpush1.msra.mxu0 0.0
    %1676 = vmatprep.subr.mxu0 0.0
    %1677 = vmatpush1.msra.mxu0 0.0
    %1678 = vmatprep.subr.mxu0 0.0
    %1679 = vmatpush1.msra.mxu0 0.0
    %1680 = vmatprep.subr.mxu0 0.0
    %1681 = vmatpush1.msra.mxu0 0.0
    %1682 = vmatprep.subr.mxu0 0.0
    %1683 = vmatpush1.msra.mxu0 0.0
    %1684 = vmatprep.subr.mxu0 0.0
    %1685 = vmatpush1.msra.mxu0 0.0
    %1686 = vmatprep.subr.mxu0 0.0
    %1687 = vmatpush1.msra.mxu0 0.0
    %1688 = vmatprep.subr.mxu0 0.0
    %1689 = vmatpush1.msra.mxu0 0.0
    %1690 = vmatprep.subr.mxu0 0.0
    %1691 = vmatpush1.msra.mxu0 0.0
    %1692 = vmatprep.subr.mxu0 0.0
    %1693 = vmatpush1.msra.mxu0 0.0
    %1694 = vmatprep.mubr.f32.mxu0 0.0
    %1695 = vmatmul.mubr.f32.gmra.mrb[0].mxu0 %v1628
    %v1696 = vpop.f32.mrb[0].mxu0
    %v1697 = vadd.f32 %v147, %v1696
    %v1698 = vpop.f32.mrb[0].mxu0
    %1699 = vdwg.mxu0
    %v1700 = vrot.slane %v1599, 3
    %v1701 = vrot.slane %v1600, 2
    %v1702 = vsel %vm435, %v1701, %v1700
    %1703 = vrot.lane.b32.xlu0 %v1702, 64
    %v1704 = vpop.permute.xlu0 %1703
    %v1705 = vsel %vm149, %v1704, 0
    %1707 = vmatprep.subr.mxu0 0.0
    %1708 = vmatpush1.msra.mxu0 %v140
    %1709 = vmatprep.subr.mxu0 0.0
    %1710 = vmatpush1.msra.mxu0 %v141
    %1711 = vmatprep.subr.mxu0 0.0
    %1712 = vmatpush1.msra.mxu0 0.0
    %1713 = vmatprep.subr.mxu0 0.0
    %1714 = vmatpush1.msra.mxu0 0.0
    %1715 = vmatprep.subr.mxu0 0.0
    %1716 = vmatpush1.msra.mxu0 0.0
    %1717 = vmatprep.subr.mxu0 0.0
    %1718 = vmatpush1.msra.mxu0 0.0
    %1719 = vmatprep.subr.mxu0 0.0
    %1720 = vmatpush1.msra.mxu0 0.0
    %1721 = vmatprep.subr.mxu0 0.0
    %1722 = vmatpush1.msra.mxu0 0.0
    %1723 = vmatprep.subr.mxu0 0.0
    %1724 = vmatpush1.msra.mxu0 0.0
    %1725 = vmatprep.subr.mxu0 0.0
    %1726 = vmatpush1.msra.mxu0 0.0
    %1727 = vmatprep.subr.mxu0 0.0
    %1728 = vmatpush1.msra.mxu0 0.0
    %1729 = vmatprep.subr.mxu0 0.0
    %1730 = vmatpush1.msra.mxu0 0.0
    %1731 = vmatprep.subr.mxu0 0.0
    %1732 = vmatpush1.msra.mxu0 0.0
    %1733 = vmatprep.subr.mxu0 0.0
    %1734 = vmatpush1.msra.mxu0 0.0
    %1735 = vmatprep.subr.mxu0 0.0
    %1736 = vmatpush1.msra.mxu0 0.0
    %1737 = vmatprep.subr.mxu0 0.0
    %1738 = vmatpush1.msra.mxu0 0.0
    %1739 = vmatprep.subr.mxu0 0.0
    %1740 = vmatpush1.msra.mxu0 0.0
    %1741 = vmatprep.subr.mxu0 0.0
    %1742 = vmatpush1.msra.mxu0 0.0
    %1743 = vmatprep.subr.mxu0 0.0
    %1744 = vmatpush1.msra.mxu0 0.0
    %1745 = vmatprep.subr.mxu0 0.0
    %1746 = vmatpush1.msra.mxu0 0.0
    %1747 = vmatprep.subr.mxu0 0.0
    %1748 = vmatpush1.msra.mxu0 0.0
    %1749 = vmatprep.subr.mxu0 0.0
    %1750 = vmatpush1.msra.mxu0 0.0
    %1751 = vmatprep.subr.mxu0 0.0
    %1752 = vmatpush1.msra.mxu0 0.0
    %1753 = vmatprep.subr.mxu0 0.0
    %1754 = vmatpush1.msra.mxu0 0.0
    %1755 = vmatprep.subr.mxu0 0.0
    %1756 = vmatpush1.msra.mxu0 0.0
    %1757 = vmatprep.subr.mxu0 0.0
    %1758 = vmatpush1.msra.mxu0 0.0
    %1759 = vmatprep.subr.mxu0 0.0
    %1760 = vmatpush1.msra.mxu0 0.0
    %1761 = vmatprep.subr.mxu0 0.0
    %1762 = vmatpush1.msra.mxu0 0.0
    %1763 = vmatprep.subr.mxu0 0.0
    %1764 = vmatpush1.msra.mxu0 0.0
    %1765 = vmatprep.subr.mxu0 0.0
    %1766 = vmatpush1.msra.mxu0 0.0
    %1767 = vmatprep.subr.mxu0 0.0
    %1768 = vmatpush1.msra.mxu0 0.0
    %1769 = vmatprep.subr.mxu0 0.0
    %1770 = vmatpush1.msra.mxu0 0.0
    %1771 = vmatprep.mubr.f32.mxu0 0.0
    %1772 = vmatmul.mubr.f32.gmra.mrb[0].mxu0 %v1705
    %v1773 = vpop.f32.mrb[0].mxu0
    %v1774 = vadd.f32 %v227, %v1773
    %v1775 = vpop.f32.mrb[0].mxu0
    %1776 = vdwg.mxu0
    %v1778 = vrot.slane %v1697, 3
    %v1779 = vrot.slane %v1697, 4
    %v1782 = vadd.f32 %v129, %v1778
    %v1783 = vadd.f32 %v134, %v1779
    %v1784 = vsub.f32 0.0, %v1782
    %v1785 = vsub.f32 0.0, %v1783
    %v1786 = vmul.f32 %v1784, 1.442695
    %v1787 = vpow.pop %v1786
    %v1788 = vmul.f32 %v1785, 1.442695
    %v1789 = vpow.pop %v1788
    %v1790 = vadd.f32 %v1787, 1.0
    %v1791 = vadd.f32 %v1789, 1.0
    %v1792 = vrcp.pop %v1790
    %v1793 = vmul.f32 1.0, %v1792
    %v1794 = vrcp.pop %v1791
    %v1795 = vmul.f32 1.0, %v1794
    %1796 = vrot.lane.b32.xlu0 %v1778, 96
    %v1797 = vpop.permute.xlu0 %1796
    %1798 = vrot.lane.b32.xlu0 %v1779, 96
    %v1799 = vpop.permute.xlu0 %1798
    %v1802 = vmul.f32 %v1793, %v1797
    %v1803 = vmul.f32 %v1795, %v1799
    %1806 = vrot.lane.b32.xlu0 %v1802, 32
    %v1807 = vpop.permute.xlu0 %1806
    %1808 = vrot.lane.b32.xlu0 %v1803, 32
    %v1809 = vpop.permute.xlu0 %1808
    %v1812 = vadd.f32 %v129, %v1807
    %v1813 = vadd.f32 %v134, %v1809
    %v1814 = vtanh.pop %v1812
    %v1815 = vtanh.pop %v1813
    %v1816 = vsub.f32 1.0, %v1793
    %v1817 = vsub.f32 1.0, %v1795
    %1820 = vrot.lane.b32.xlu0 %v1814, 112
    %v1821 = vpop.permute.xlu0 %1820
    %1822 = vrot.lane.b32.xlu0 %v1815, 112
    %v1823 = vpop.permute.xlu0 %1822
    %v1826 = vmul.f32 %v1816, %v1821
    %v1827 = vmul.f32 %v1817, %v1823
    %v1828 = vrot.slane %v1536, 7
    %v1829 = vrot.slane %v1537, 7
    %v1832 = vmul.f32 %v1793, %v1828
    %v1833 = vmul.f32 %v1795, %v1829
    %v1834 = vadd.f32 %v1826, %v1832
    %v1835 = vadd.f32 %v1827, %v1833
    %v1837 = vrot.slane %v1774, 6
    %v1838 = vrot.slane %v1774, 7
    %1839 = vrot.lane.b32.xlu0 %v1837, 48
    %v1840 = vpop.permute.xlu0 %1839
    %1841 = vrot.lane.b32.xlu0 %v1838, 48
    %v1842 = vpop.permute.xlu0 %1841
    %v1845 = vadd.f32 %v129, %v1840
    %v1846 = vadd.f32 %v134, %v1842
    %v1847 = vsub.f32 0.0, %v1845
    %v1848 = vsub.f32 0.0, %v1846
    %v1849 = vmul.f32 %v1847, 1.442695
    %v1850 = vpow.pop %v1849
    %v1851 = vmul.f32 %v1848, 1.442695
    %v1852 = vpow.pop %v1851
    %v1853 = vadd.f32 %v1850, 1.0
    %v1854 = vadd.f32 %v1852, 1.0
    %v1855 = vrcp.pop %v1853
    %v1856 = vmul.f32 1.0, %v1855
    %v1857 = vrcp.pop %v1854
    %v1858 = vmul.f32 1.0, %v1857
    %1859 = vrot.lane.b32.xlu0 %v1837, 16
    %v1860 = vpop.permute.xlu0 %1859
    %1861 = vrot.lane.b32.xlu0 %v1838, 16
    %v1862 = vpop.permute.xlu0 %1861
    %v1865 = vmul.f32 %v1856, %v1860
    %v1866 = vmul.f32 %v1858, %v1862
    %1869 = vrot.lane.b32.xlu0 %v1865, 32
    %v1870 = vpop.permute.xlu0 %1869
    %1871 = vrot.lane.b32.xlu0 %v1866, 32
    %v1872 = vpop.permute.xlu0 %1871
    %v1875 = vadd.f32 %v129, %v1870
    %v1876 = vadd.f32 %v134, %v1872
    %v1877 = vtanh.pop %v1875
    %v1878 = vtanh.pop %v1876
    %v1879 = vsub.f32 1.0, %v1856
    %v1880 = vsub.f32 1.0, %v1858
    %1883 = vrot.lane.b32.xlu0 %v1877, 112
    %v1884 = vpop.permute.xlu0 %1883
    %1885 = vrot.lane.b32.xlu0 %v1878, 112
    %v1886 = vpop.permute.xlu0 %1885
    %v1889 = vmul.f32 %v1879, %v1884
    %v1890 = vmul.f32 %v1880, %v1886
    %v1891 = vrot.slane %v1599, 1
    %v1892 = vrot.slane %v1600, 1
    %v1895 = vmul.f32 %v1856, %v1891
    %v1896 = vmul.f32 %v1858, %v1892
    %v1897 = vadd.f32 %v1889, %v1895
    %v1898 = vadd.f32 %v1890, %v1896
    %1901 = vrot.lane.b32.xlu0 %v1834, 112
    %v1902 = vpop.permute.xlu0 %1901
    %1903 = vrot.lane.b32.xlu0 %v1835, 112
    %v1904 = vpop.permute.xlu0 %1903
    %vm1907 = vcmask 128005
    %1908 = vst.msk [vmem:[#allocation2] sm:$0x20] %vm1907, %v1902
    %1909 = vst.msk [vmem:[#allocation2 + $0x8] sm:$0x20] %vm1907, %v1904
    %1912 = vrot.lane.b32.xlu0 %v1897, 80
    %v1913 = vpop.permute.xlu0 %1912
    %1914 = vrot.lane.b32.xlu0 %v1898, 80
    %v1915 = vpop.permute.xlu0 %1914
    %vm1918 = vcmask 256130
    %1919 = vst.msk [vmem:[#allocation2] sm:$0x4] %vm1918, %v1913
    %1920 = vst.msk [vmem:[#allocation2 + $0x8] sm:$0x4] %vm1918, %v1915
    %v1921 = vrot.slane %v1834, 5
    %v1922 = vrot.slane %v1835, 4
    %v1923 = vsel %vm435, %v1922, %v1921
    %1924 = vrot.lane.b32.xlu0 %v1923, 112
    %v1925 = vpop.permute.xlu0 %1924
    %v1926 = vsel %vm149, %v1925, 0
    %1928 = vmatprep.subr.mxu0 0.0
    %1929 = vmatpush1.msra.mxu0 %v137
    %1930 = vmatprep.subr.mxu0 0.0
    %1931 = vmatpush1.msra.mxu0 %v138
    %1932 = vmatprep.subr.mxu0 0.0
    %1933 = vmatpush1.msra.mxu0 0.0
    %1934 = vmatprep.subr.mxu0 0.0
    %1935 = vmatpush1.msra.mxu0 0.0
    %1936 = vmatprep.subr.mxu0 0.0
    %1937 = vmatpush1.msra.mxu0 0.0
    %1938 = vmatprep.subr.mxu0 0.0
    %1939 = vmatpush1.msra.mxu0 0.0
    %1940 = vmatprep.subr.mxu0 0.0
    %1941 = vmatpush1.msra.mxu0 0.0
    %1942 = vmatprep.subr.mxu0 0.0
    %1943 = vmatpush1.msra.mxu0 0.0
    %1944 = vmatprep.subr.mxu0 0.0
    %1945 = vmatpush1.msra.mxu0 0.0
    %1946 = vmatprep.subr.mxu0 0.0
    %1947 = vmatpush1.msra.mxu0 0.0
    %1948 = vmatprep.subr.mxu0 0.0
    %1949 = vmatpush1.msra.mxu0 0.0
    %1950 = vmatprep.subr.mxu0 0.0
    %1951 = vmatpush1.msra.mxu0 0.0
    %1952 = vmatprep.subr.mxu0 0.0
    %1953 = vmatpush1.msra.mxu0 0.0
    %1954 = vmatprep.subr.mxu0 0.0
    %1955 = vmatpush1.msra.mxu0 0.0
    %1956 = vmatprep.subr.mxu0 0.0
    %1957 = vmatpush1.msra.mxu0 0.0
    %1958 = vmatprep.subr.mxu0 0.0
    %1959 = vmatpush1.msra.mxu0 0.0
    %1960 = vmatprep.subr.mxu0 0.0
    %1961 = vmatpush1.msra.mxu0 0.0
    %1962 = vmatprep.subr.mxu0 0.0
    %1963 = vmatpush1.msra.mxu0 0.0
    %1964 = vmatprep.subr.mxu0 0.0
    %1965 = vmatpush1.msra.mxu0 0.0
    %1966 = vmatprep.subr.mxu0 0.0
    %1967 = vmatpush1.msra.mxu0 0.0
    %1968 = vmatprep.subr.mxu0 0.0
    %1969 = vmatpush1.msra.mxu0 0.0
    %1970 = vmatprep.subr.mxu0 0.0
    %1971 = vmatpush1.msra.mxu0 0.0
    %1972 = vmatprep.subr.mxu0 0.0
    %1973 = vmatpush1.msra.mxu0 0.0
    %1974 = vmatprep.subr.mxu0 0.0
    %1975 = vmatpush1.msra.mxu0 0.0
    %1976 = vmatprep.subr.mxu0 0.0
    %1977 = vmatpush1.msra.mxu0 0.0
    %1978 = vmatprep.subr.mxu0 0.0
    %1979 = vmatpush1.msra.mxu0 0.0
    %1980 = vmatprep.subr.mxu0 0.0
    %1981 = vmatpush1.msra.mxu0 0.0
    %1982 = vmatprep.subr.mxu0 0.0
    %1983 = vmatpush1.msra.mxu0 0.0
    %1984 = vmatprep.subr.mxu0 0.0
    %1985 = vmatpush1.msra.mxu0 0.0
    %1986 = vmatprep.subr.mxu0 0.0
    %1987 = vmatpush1.msra.mxu0 0.0
    %1988 = vmatprep.subr.mxu0 0.0
    %1989 = vmatpush1.msra.mxu0 0.0
    %1990 = vmatprep.subr.mxu0 0.0
    %1991 = vmatpush1.msra.mxu0 0.0
    %1992 = vmatprep.mubr.f32.mxu0 0.0
    %1993 = vmatmul.mubr.f32.gmra.mrb[0].mxu0 %v1926
    %v1994 = vpop.f32.mrb[0].mxu0
    %v1995 = vadd.f32 %v147, %v1994
    %v1996 = vpop.f32.mrb[0].mxu0
    %1997 = vdwg.mxu0
    %v1998 = vrot.slane %v1897, 2
    %v1999 = vrot.slane %v1898, 1
    %v2000 = vsel %vm435, %v1999, %v1998
    %2001 = vrot.lane.b32.xlu0 %v2000, 64
    %v2002 = vpop.permute.xlu0 %2001
    %v2003 = vsel %vm149, %v2002, 0
    %2005 = vmatprep.subr.mxu0 0.0
    %2006 = vmatpush1.msra.mxu0 %v140
    %2007 = vmatprep.subr.mxu0 0.0
    %2008 = vmatpush1.msra.mxu0 %v141
    %2009 = vmatprep.subr.mxu0 0.0
    %2010 = vmatpush1.msra.mxu0 0.0
    %2011 = vmatprep.subr.mxu0 0.0
    %2012 = vmatpush1.msra.mxu0 0.0
    %2013 = vmatprep.subr.mxu0 0.0
    %2014 = vmatpush1.msra.mxu0 0.0
    %2015 = vmatprep.subr.mxu0 0.0
    %2016 = vmatpush1.msra.mxu0 0.0
    %2017 = vmatprep.subr.mxu0 0.0
    %2018 = vmatpush1.msra.mxu0 0.0
    %2019 = vmatprep.subr.mxu0 0.0
    %2020 = vmatpush1.msra.mxu0 0.0
    %2021 = vmatprep.subr.mxu0 0.0
    %2022 = vmatpush1.msra.mxu0 0.0
    %2023 = vmatprep.subr.mxu0 0.0
    %2024 = vmatpush1.msra.mxu0 0.0
    %2025 = vmatprep.subr.mxu0 0.0
    %2026 = vmatpush1.msra.mxu0 0.0
    %2027 = vmatprep.subr.mxu0 0.0
    %2028 = vmatpush1.msra.mxu0 0.0
    %2029 = vmatprep.subr.mxu0 0.0
    %2030 = vmatpush1.msra.mxu0 0.0
    %2031 = vmatprep.subr.mxu0 0.0
    %2032 = vmatpush1.msra.mxu0 0.0
    %2033 = vmatprep.subr.mxu0 0.0
    %2034 = vmatpush1.msra.mxu0 0.0
    %2035 = vmatprep.subr.mxu0 0.0
    %2036 = vmatpush1.msra.mxu0 0.0
    %2037 = vmatprep.subr.mxu0 0.0
    %2038 = vmatpush1.msra.mxu0 0.0
    %2039 = vmatprep.subr.mxu0 0.0
    %2040 = vmatpush1.msra.mxu0 0.0
    %2041 = vmatprep.subr.mxu0 0.0
    %2042 = vmatpush1.msra.mxu0 0.0
    %2043 = vmatprep.subr.mxu0 0.0
    %2044 = vmatpush1.msra.mxu0 0.0
    %2045 = vmatprep.subr.mxu0 0.0
    %2046 = vmatpush1.msra.mxu0 0.0
    %2047 = vmatprep.subr.mxu0 0.0
    %2048 = vmatpush1.msra.mxu0 0.0
    %2049 = vmatprep.subr.mxu0 0.0
    %2050 = vmatpush1.msra.mxu0 0.0
    %2051 = vmatprep.subr.mxu0 0.0
    %2052 = vmatpush1.msra.mxu0 0.0
    %2053 = vmatprep.subr.mxu0 0.0
    %2054 = vmatpush1.msra.mxu0 0.0
    %2055 = vmatprep.subr.mxu0 0.0
    %2056 = vmatpush1.msra.mxu0 0.0
    %2057 = vmatprep.subr.mxu0 0.0
    %2058 = vmatpush1.msra.mxu0 0.0
    %2059 = vmatprep.subr.mxu0 0.0
    %2060 = vmatpush1.msra.mxu0 0.0
    %2061 = vmatprep.subr.mxu0 0.0
    %2062 = vmatpush1.msra.mxu0 0.0
    %2063 = vmatprep.subr.mxu0 0.0
    %2064 = vmatpush1.msra.mxu0 0.0
    %2065 = vmatprep.subr.mxu0 0.0
    %2066 = vmatpush1.msra.mxu0 0.0
    %2067 = vmatprep.subr.mxu0 0.0
    %2068 = vmatpush1.msra.mxu0 0.0
    %2069 = vmatprep.mubr.f32.mxu0 0.0
    %2070 = vmatmul.mubr.f32.gmra.mrb[0].mxu0 %v2003
    %v2071 = vpop.f32.mrb[0].mxu0
    %v2072 = vadd.f32 %v227, %v2071
    %v2073 = vpop.f32.mrb[0].mxu0
    %2074 = vdwg.mxu0
    %v2076 = vrot.slane %v1995, 2
    %v2077 = vrot.slane %v1995, 3
    %v2080 = vadd.f32 %v129, %v2076
    %v2081 = vadd.f32 %v134, %v2077
    %v2082 = vsub.f32 0.0, %v2080
    %v2083 = vsub.f32 0.0, %v2081
    %v2084 = vmul.f32 %v2082, 1.442695
    %v2085 = vpow.pop %v2084
    %v2086 = vmul.f32 %v2083, 1.442695
    %v2087 = vpow.pop %v2086
    %v2088 = vadd.f32 %v2085, 1.0
    %v2089 = vadd.f32 %v2087, 1.0
    %v2090 = vrcp.pop %v2088
    %v2091 = vmul.f32 1.0, %v2090
    %v2092 = vrcp.pop %v2089
    %v2093 = vmul.f32 1.0, %v2092
    %2094 = vrot.lane.b32.xlu0 %v2076, 96
    %v2095 = vpop.permute.xlu0 %2094
    %2096 = vrot.lane.b32.xlu0 %v2077, 96
    %v2097 = vpop.permute.xlu0 %2096
    %v2100 = vmul.f32 %v2091, %v2095
    %v2101 = vmul.f32 %v2093, %v2097
    %2104 = vrot.lane.b32.xlu0 %v2100, 32
    %v2105 = vpop.permute.xlu0 %2104
    %2106 = vrot.lane.b32.xlu0 %v2101, 32
    %v2107 = vpop.permute.xlu0 %2106
    %v2110 = vadd.f32 %v129, %v2105
    %v2111 = vadd.f32 %v134, %v2107
    %v2112 = vtanh.pop %v2110
    %v2113 = vtanh.pop %v2111
    %v2114 = vsub.f32 1.0, %v2091
    %v2115 = vsub.f32 1.0, %v2093
    %2118 = vrot.lane.b32.xlu0 %v2112, 112
    %v2119 = vpop.permute.xlu0 %2118
    %2120 = vrot.lane.b32.xlu0 %v2113, 112
    %v2121 = vpop.permute.xlu0 %2120
    %v2124 = vmul.f32 %v2114, %v2119
    %v2125 = vmul.f32 %v2115, %v2121
    %v2126 = vrot.slane %v1834, 7
    %v2127 = vrot.slane %v1835, 7
    %v2130 = vmul.f32 %v2091, %v2126
    %v2131 = vmul.f32 %v2093, %v2127
    %v2132 = vadd.f32 %v2124, %v2130
    %v2133 = vadd.f32 %v2125, %v2131
    %v2135 = vrot.slane %v2072, 7
    %2136 = vrot.lane.b32.xlu0 %v2135, 48
    %v2137 = vpop.permute.xlu0 %2136
    %2138 = vrot.lane.b32.xlu0 %v2072, 48
    %v2139 = vpop.permute.xlu0 %2138
    %v2142 = vadd.f32 %v129, %v2137
    %v2143 = vadd.f32 %v134, %v2139
    %v2144 = vsub.f32 0.0, %v2142
    %v2145 = vsub.f32 0.0, %v2143
    %v2146 = vmul.f32 %v2144, 1.442695
    %v2147 = vpow.pop %v2146
    %v2148 = vmul.f32 %v2145, 1.442695
    %v2149 = vpow.pop %v2148
    %v2150 = vadd.f32 %v2147, 1.0
    %v2151 = vadd.f32 %v2149, 1.0
    %v2152 = vrcp.pop %v2150
    %v2153 = vmul.f32 1.0, %v2152
    %v2154 = vrcp.pop %v2151
    %v2155 = vmul.f32 1.0, %v2154
    %2156 = vrot.lane.b32.xlu0 %v2135, 16
    %v2157 = vpop.permute.xlu0 %2156
    %2158 = vrot.lane.b32.xlu0 %v2072, 16
    %v2159 = vpop.permute.xlu0 %2158
    %v2162 = vmul.f32 %v2153, %v2157
    %v2163 = vmul.f32 %v2155, %v2159
    %2166 = vrot.lane.b32.xlu0 %v2162, 32
    %v2167 = vpop.permute.xlu0 %2166
    %2168 = vrot.lane.b32.xlu0 %v2163, 32
    %v2169 = vpop.permute.xlu0 %2168
    %v2172 = vadd.f32 %v129, %v2167
    %v2173 = vadd.f32 %v134, %v2169
    %v2174 = vtanh.pop %v2172
    %v2175 = vtanh.pop %v2173
    %v2176 = vsub.f32 1.0, %v2153
    %v2177 = vsub.f32 1.0, %v2155
    %2180 = vrot.lane.b32.xlu0 %v2174, 112
    %v2181 = vpop.permute.xlu0 %2180
    %2182 = vrot.lane.b32.xlu0 %v2175, 112
    %v2183 = vpop.permute.xlu0 %2182
    %v2186 = vmul.f32 %v2176, %v2181
    %v2187 = vmul.f32 %v2177, %v2183
    %v2188 = vrot.slane %v1897, 1
    %v2191 = vmul.f32 %v2153, %v2188
    %v2192 = vmul.f32 %v2155, %v1999
    %v2193 = vadd.f32 %v2186, %v2191
    %v2194 = vadd.f32 %v2187, %v2192
    %2197 = vrot.lane.b32.xlu0 %v2132, 112
    %v2198 = vpop.permute.xlu0 %2197
    %2199 = vrot.lane.b32.xlu0 %v2133, 112
    %v2200 = vpop.permute.xlu0 %2199
    %vm2203 = vcmask 129030
    %2204 = vst.msk [vmem:[#allocation2] sm:$0x40] %vm2203, %v2198
    %2205 = vst.msk [vmem:[#allocation2 + $0x8] sm:$0x40] %vm2203, %v2200
    %2208 = vrot.lane.b32.xlu0 %v2193, 80
    %v2209 = vpop.permute.xlu0 %2208
    %2210 = vrot.lane.b32.xlu0 %v2194, 80
    %v2211 = vpop.permute.xlu0 %2210
    %vm2214 = vcmask 255105
    %2215 = vst.msk [vmem:[#allocation2] sm:$0x2] %vm2214, %v2209
    %2216 = vst.msk [vmem:[#allocation2 + $0x8] sm:$0x2] %vm2214, %v2211
    %v2217 = vrot.slane %v2132, 6
    %v2218 = vrot.slane %v2133, 5
    %v2219 = vsel %vm435, %v2218, %v2217
    %2220 = vrot.lane.b32.xlu0 %v2219, 112
    %v2221 = vpop.permute.xlu0 %2220
    %v2222 = vsel %vm149, %v2221, 0
    %2224 = vmatprep.subr.mxu0 0.0
    %2225 = vmatpush1.msra.mxu0 %v137
    %2226 = vmatprep.subr.mxu0 0.0
    %2227 = vmatpush1.msra.mxu0 %v138
    %2228 = vmatprep.subr.mxu0 0.0
    %2229 = vmatpush1.msra.mxu0 0.0
    %2230 = vmatprep.subr.mxu0 0.0
    %2231 = vmatpush1.msra.mxu0 0.0
    %2232 = vmatprep.subr.mxu0 0.0
    %2233 = vmatpush1.msra.mxu0 0.0
    %2234 = vmatprep.subr.mxu0 0.0
    %2235 = vmatpush1.msra.mxu0 0.0
    %2236 = vmatprep.subr.mxu0 0.0
    %2237 = vmatpush1.msra.mxu0 0.0
    %2238 = vmatprep.subr.mxu0 0.0
    %2239 = vmatpush1.msra.mxu0 0.0
    %2240 = vmatprep.subr.mxu0 0.0
    %2241 = vmatpush1.msra.mxu0 0.0
    %2242 = vmatprep.subr.mxu0 0.0
    %2243 = vmatpush1.msra.mxu0 0.0
    %2244 = vmatprep.subr.mxu0 0.0
    %2245 = vmatpush1.msra.mxu0 0.0
    %2246 = vmatprep.subr.mxu0 0.0
    %2247 = vmatpush1.msra.mxu0 0.0
    %2248 = vmatprep.subr.mxu0 0.0
    %2249 = vmatpush1.msra.mxu0 0.0
    %2250 = vmatprep.subr.mxu0 0.0
    %2251 = vmatpush1.msra.mxu0 0.0
    %2252 = vmatprep.subr.mxu0 0.0
    %2253 = vmatpush1.msra.mxu0 0.0
    %2254 = vmatprep.subr.mxu0 0.0
    %2255 = vmatpush1.msra.mxu0 0.0
    %2256 = vmatprep.subr.mxu0 0.0
    %2257 = vmatpush1.msra.mxu0 0.0
    %2258 = vmatprep.subr.mxu0 0.0
    %2259 = vmatpush1.msra.mxu0 0.0
    %2260 = vmatprep.subr.mxu0 0.0
    %2261 = vmatpush1.msra.mxu0 0.0
    %2262 = vmatprep.subr.mxu0 0.0
    %2263 = vmatpush1.msra.mxu0 0.0
    %2264 = vmatprep.subr.mxu0 0.0
    %2265 = vmatpush1.msra.mxu0 0.0
    %2266 = vmatprep.subr.mxu0 0.0
    %2267 = vmatpush1.msra.mxu0 0.0
    %2268 = vmatprep.subr.mxu0 0.0
    %2269 = vmatpush1.msra.mxu0 0.0
    %2270 = vmatprep.subr.mxu0 0.0
    %2271 = vmatpush1.msra.mxu0 0.0
    %2272 = vmatprep.subr.mxu0 0.0
    %2273 = vmatpush1.msra.mxu0 0.0
    %2274 = vmatprep.subr.mxu0 0.0
    %2275 = vmatpush1.msra.mxu0 0.0
    %2276 = vmatprep.subr.mxu0 0.0
    %2277 = vmatpush1.msra.mxu0 0.0
    %2278 = vmatprep.subr.mxu0 0.0
    %2279 = vmatpush1.msra.mxu0 0.0
    %2280 = vmatprep.subr.mxu0 0.0
    %2281 = vmatpush1.msra.mxu0 0.0
    %2282 = vmatprep.subr.mxu0 0.0
    %2283 = vmatpush1.msra.mxu0 0.0
    %2284 = vmatprep.subr.mxu0 0.0
    %2285 = vmatpush1.msra.mxu0 0.0
    %2286 = vmatprep.subr.mxu0 0.0
    %2287 = vmatpush1.msra.mxu0 0.0
    %2288 = vmatprep.mubr.f32.mxu0 0.0
    %2289 = vmatmul.mubr.f32.gmra.mrb[0].mxu0 %v2222
    %v2290 = vpop.f32.mrb[0].mxu0
    %v2291 = vadd.f32 %v147, %v2290
    %v2292 = vpop.f32.mrb[0].mxu0
    %2293 = vdwg.mxu0
    %v2294 = vrot.slane %v2193, 1
    %v2295 = vsel %vm435, %v2194, %v2294
    %2296 = vrot.lane.b32.xlu0 %v2295, 64
    %v2297 = vpop.permute.xlu0 %2296
    %v2298 = vsel %vm149, %v2297, 0
    %2300 = vmatprep.subr.mxu0 0.0
    %2301 = vmatpush1.msra.mxu0 %v140
    %2302 = vmatprep.subr.mxu0 0.0
    %2303 = vmatpush1.msra.mxu0 %v141
    %2304 = vmatprep.subr.mxu0 0.0
    %2305 = vmatpush1.msra.mxu0 0.0
    %2306 = vmatprep.subr.mxu0 0.0
    %2307 = vmatpush1.msra.mxu0 0.0
    %2308 = vmatprep.subr.mxu0 0.0
    %2309 = vmatpush1.msra.mxu0 0.0
    %2310 = vmatprep.subr.mxu0 0.0
    %2311 = vmatpush1.msra.mxu0 0.0
    %2312 = vmatprep.subr.mxu0 0.0
    %2313 = vmatpush1.msra.mxu0 0.0
    %2314 = vmatprep.subr.mxu0 0.0
    %2315 = vmatpush1.msra.mxu0 0.0
    %2316 = vmatprep.subr.mxu0 0.0
    %2317 = vmatpush1.msra.mxu0 0.0
    %2318 = vmatprep.subr.mxu0 0.0
    %2319 = vmatpush1.msra.mxu0 0.0
    %2320 = vmatprep.subr.mxu0 0.0
    %2321 = vmatpush1.msra.mxu0 0.0
    %2322 = vmatprep.subr.mxu0 0.0
    %2323 = vmatpush1.msra.mxu0 0.0
    %2324 = vmatprep.subr.mxu0 0.0
    %2325 = vmatpush1.msra.mxu0 0.0
    %2326 = vmatprep.subr.mxu0 0.0
    %2327 = vmatpush1.msra.mxu0 0.0
    %2328 = vmatprep.subr.mxu0 0.0
    %2329 = vmatpush1.msra.mxu0 0.0
    %2330 = vmatprep.subr.mxu0 0.0
    %2331 = vmatpush1.msra.mxu0 0.0
    %2332 = vmatprep.subr.mxu0 0.0
    %2333 = vmatpush1.msra.mxu0 0.0
    %2334 = vmatprep.subr.mxu0 0.0
    %2335 = vmatpush1.msra.mxu0 0.0
    %2336 = vmatprep.subr.mxu0 0.0
    %2337 = vmatpush1.msra.mxu0 0.0
    %2338 = vmatprep.subr.mxu0 0.0
    %2339 = vmatpush1.msra.mxu0 0.0
    %2340 = vmatprep.subr.mxu0 0.0
    %2341 = vmatpush1.msra.mxu0 0.0
    %2342 = vmatprep.subr.mxu0 0.0
    %2343 = vmatpush1.msra.mxu0 0.0
    %2344 = vmatprep.subr.mxu0 0.0
    %2345 = vmatpush1.msra.mxu0 0.0
    %2346 = vmatprep.subr.mxu0 0.0
    %2347 = vmatpush1.msra.mxu0 0.0
    %2348 = vmatprep.subr.mxu0 0.0
    %2349 = vmatpush1.msra.mxu0 0.0
    %2350 = vmatprep.subr.mxu0 0.0
    %2351 = vmatpush1.msra.mxu0 0.0
    %2352 = vmatprep.subr.mxu0 0.0
    %2353 = vmatpush1.msra.mxu0 0.0
    %2354 = vmatprep.subr.mxu0 0.0
    %2355 = vmatpush1.msra.mxu0 0.0
    %2356 = vmatprep.subr.mxu0 0.0
    %2357 = vmatpush1.msra.mxu0 0.0
    %2358 = vmatprep.subr.mxu0 0.0
    %2359 = vmatpush1.msra.mxu0 0.0
    %2360 = vmatprep.subr.mxu0 0.0
    %2361 = vmatpush1.msra.mxu0 0.0
    %2362 = vmatprep.subr.mxu0 0.0
    %2363 = vmatpush1.msra.mxu0 0.0
    %2364 = vmatprep.mubr.f32.mxu0 0.0
    %2365 = vmatmul.mubr.f32.gmra.mrb[0].mxu0 %v2298
    %v2366 = vpop.f32.mrb[0].mxu0
    %v2367 = vadd.f32 %v227, %v2366
    %v2368 = vpop.f32.mrb[0].mxu0
    %2369 = vdwg.mxu0
    %v2371 = vrot.slane %v2291, 1
    %v2372 = vrot.slane %v2291, 2
    %v2375 = vadd.f32 %v129, %v2371
    %v2376 = vadd.f32 %v134, %v2372
    %v2377 = vsub.f32 0.0, %v2375
    %v2378 = vsub.f32 0.0, %v2376
    %v2379 = vmul.f32 %v2377, 1.442695
    %v2380 = vpow.pop %v2379
    %v2381 = vmul.f32 %v2378, 1.442695
    %v2382 = vpow.pop %v2381
    %v2383 = vadd.f32 %v2380, 1.0
    %v2384 = vadd.f32 %v2382, 1.0
    %v2385 = vrcp.pop %v2383
    %v2386 = vmul.f32 1.0, %v2385
    %v2387 = vrcp.pop %v2384
    %v2388 = vmul.f32 1.0, %v2387
    %2389 = vrot.lane.b32.xlu0 %v2371, 96
    %v2390 = vpop.permute.xlu0 %2389
    %2391 = vrot.lane.b32.xlu0 %v2372, 96
    %v2392 = vpop.permute.xlu0 %2391
    %v2395 = vmul.f32 %v2386, %v2390
    %v2396 = vmul.f32 %v2388, %v2392
    %2399 = vrot.lane.b32.xlu0 %v2395, 32
    %v2400 = vpop.permute.xlu0 %2399
    %2401 = vrot.lane.b32.xlu0 %v2396, 32
    %v2402 = vpop.permute.xlu0 %2401
    %v2405 = vadd.f32 %v129, %v2400
    %v2406 = vadd.f32 %v134, %v2402
    %v2407 = vtanh.pop %v2405
    %v2408 = vtanh.pop %v2406
    %v2409 = vsub.f32 1.0, %v2386
    %v2410 = vsub.f32 1.0, %v2388
    %2413 = vrot.lane.b32.xlu0 %v2407, 112
    %v2414 = vpop.permute.xlu0 %2413
    %2415 = vrot.lane.b32.xlu0 %v2408, 112
    %v2416 = vpop.permute.xlu0 %2415
    %v2419 = vmul.f32 %v2409, %v2414
    %v2420 = vmul.f32 %v2410, %v2416
    %v2421 = vrot.slane %v2132, 7
    %v2422 = vrot.slane %v2133, 7
    %v2425 = vmul.f32 %v2386, %v2421
    %v2426 = vmul.f32 %v2388, %v2422
    %v2427 = vadd.f32 %v2419, %v2425
    %v2428 = vadd.f32 %v2420, %v2426
    %v2430 = vrot.slane %v2367, 1
    %2431 = vrot.lane.b32.xlu0 %v2367, 48
    %v2432 = vpop.permute.xlu0 %2431
    %2433 = vrot.lane.b32.xlu0 %v2430, 48
    %v2434 = vpop.permute.xlu0 %2433
    %v2437 = vadd.f32 %v129, %v2432
    %v2438 = vadd.f32 %v134, %v2434
    %v2439 = vsub.f32 0.0, %v2437
    %v2440 = vsub.f32 0.0, %v2438
    %v2441 = vmul.f32 %v2439, 1.442695
    %v2442 = vpow.pop %v2441
    %v2443 = vmul.f32 %v2440, 1.442695
    %v2444 = vpow.pop %v2443
    %v2445 = vadd.f32 %v2442, 1.0
    %v2446 = vadd.f32 %v2444, 1.0
    %v2447 = vrcp.pop %v2445
    %v2448 = vmul.f32 1.0, %v2447
    %v2449 = vrcp.pop %v2446
    %v2450 = vmul.f32 1.0, %v2449
    %2451 = vrot.lane.b32.xlu0 %v2367, 16
    %v2452 = vpop.permute.xlu0 %2451
    %2453 = vrot.lane.b32.xlu0 %v2430, 16
    %v2454 = vpop.permute.xlu0 %2453
    %v2457 = vmul.f32 %v2448, %v2452
    %v2458 = vmul.f32 %v2450, %v2454
    %2461 = vrot.lane.b32.xlu0 %v2457, 32
    %v2462 = vpop.permute.xlu0 %2461
    %2463 = vrot.lane.b32.xlu0 %v2458, 32
    %v2464 = vpop.permute.xlu0 %2463
    %v2467 = vadd.f32 %v129, %v2462
    %v2468 = vadd.f32 %v134, %v2464
    %v2469 = vtanh.pop %v2467
    %v2470 = vtanh.pop %v2468
    %v2471 = vsub.f32 1.0, %v2448
    %v2472 = vsub.f32 1.0, %v2450
    %2475 = vrot.lane.b32.xlu0 %v2469, 112
    %v2476 = vpop.permute.xlu0 %2475
    %2477 = vrot.lane.b32.xlu0 %v2470, 112
    %v2478 = vpop.permute.xlu0 %2477
    %v2481 = vmul.f32 %v2471, %v2476
    %v2482 = vmul.f32 %v2472, %v2478
    %v2483 = vrot.slane %v2194, 1
    %v2486 = vmul.f32 %v2448, %v2294
    %v2487 = vmul.f32 %v2450, %v2483
    %v2488 = vadd.f32 %v2481, %v2486
    %v2489 = vadd.f32 %v2482, %v2487
    %2492 = vrot.lane.b32.xlu0 %v2427, 112
    %v2493 = vpop.permute.xlu0 %2492
    %2494 = vrot.lane.b32.xlu0 %v2428, 112
    %v2495 = vpop.permute.xlu0 %2494
    %vm2498 = vcmask 130055
    %2499 = vst.msk [vmem:[#allocation2] sm:$0x80] %vm2498, %v2493
    %2500 = vst.msk [vmem:[#allocation2 + $0x8] sm:$0x80] %vm2498, %v2495
    %2503 = vrot.lane.b32.xlu0 %v2488, 80
    %v2504 = vpop.permute.xlu0 %2503
    %2505 = vrot.lane.b32.xlu0 %v2489, 80
    %v2506 = vpop.permute.xlu0 %2505
    %vm2509 = vcmask 254080
    %2510 = vst.msk [vmem:[#allocation2] sm:$0x1] %vm2509, %v2504
    %2511 = vst.msk [vmem:[#allocation2 + $0x8] sm:$0x1] %vm2509, %v2506
    %v2512 = vld [vmem:[#allocation2] sm:$0xff]
    %v2513 = vld [vmem:[#allocation2 + $0x8] sm:$0xff]
    %v2514 = vld [vmem:[%s8] sm:$0xff]
    %v2515 = vld [vmem:[%s8 + $0x8] sm:$0xff]
    %v2516 = vld [vmem:[%s8 + $0x10] sm:$0xff]
    %v2517 = vld [vmem:[%s8 + $0x18] sm:$0xff]
    %v2518 = vld [vmem:[%s9] sm:$0x1]
    %v2520 = vlaneseq
    %v2521 = vshrl.u32 %v2520, 7
    %v2522 = vsub.s32 0, %v2521
    %v2523 = vrot.slane %v2518, %v2522
    %v2526 = vsel %vm55, %v2512, 0
    %v2529 = vsel %vm55, %v2513, 0
    %2531 = vmatprep.subr.mxu0 0.0
    %2532 = vmatpush1.msra.mxu0 %v2514
    %2533 = vmatprep.subr.mxu0 0.0
    %2534 = vmatpush1.msra.mxu0 %v2515
    %2535 = vmatprep.subr.mxu0 0.0
    %2536 = vmatpush1.msra.mxu0 %v2516
    %2537 = vmatprep.subr.mxu0 0.0
    %2538 = vmatpush1.msra.mxu0 %v2517
    %2539 = vmatprep.subr.mxu0 0.0
    %2540 = vmatpush1.msra.mxu0 0.0
    %2541 = vmatprep.subr.mxu0 0.0
    %2542 = vmatpush1.msra.mxu0 0.0
    %2543 = vmatprep.subr.mxu0 0.0
    %2544 = vmatpush1.msra.mxu0 0.0
    %2545 = vmatprep.subr.mxu0 0.0
    %2546 = vmatpush1.msra.mxu0 0.0
    %2547 = vmatprep.subr.mxu0 0.0
    %2548 = vmatpush1.msra.mxu0 0.0
    %2549 = vmatprep.subr.mxu0 0.0
    %2550 = vmatpush1.msra.mxu0 0.0
    %2551 = vmatprep.subr.mxu0 0.0
    %2552 = vmatpush1.msra.mxu0 0.0
    %2553 = vmatprep.subr.mxu0 0.0
    %2554 = vmatpush1.msra.mxu0 0.0
    %2555 = vmatprep.subr.mxu0 0.0
    %2556 = vmatpush1.msra.mxu0 0.0
    %2557 = vmatprep.subr.mxu0 0.0
    %2558 = vmatpush1.msra.mxu0 0.0
    %2559 = vmatprep.subr.mxu0 0.0
    %2560 = vmatpush1.msra.mxu0 0.0
    %2561 = vmatprep.subr.mxu0 0.0
    %2562 = vmatpush1.msra.mxu0 0.0
    %2563 = vmatprep.subr.mxu0 0.0
    %2564 = vmatpush1.msra.mxu0 0.0
    %2565 = vmatprep.subr.mxu0 0.0
    %2566 = vmatpush1.msra.mxu0 0.0
    %2567 = vmatprep.subr.mxu0 0.0
    %2568 = vmatpush1.msra.mxu0 0.0
    %2569 = vmatprep.subr.mxu0 0.0
    %2570 = vmatpush1.msra.mxu0 0.0
    %2571 = vmatprep.subr.mxu0 0.0
    %2572 = vmatpush1.msra.mxu0 0.0
    %2573 = vmatprep.subr.mxu0 0.0
    %2574 = vmatpush1.msra.mxu0 0.0
    %2575 = vmatprep.subr.mxu0 0.0
    %2576 = vmatpush1.msra.mxu0 0.0
    %2577 = vmatprep.subr.mxu0 0.0
    %2578 = vmatpush1.msra.mxu0 0.0
    %2579 = vmatprep.subr.mxu0 0.0
    %2580 = vmatpush1.msra.mxu0 0.0
    %2581 = vmatprep.subr.mxu0 0.0
    %2582 = vmatpush1.msra.mxu0 0.0
    %2583 = vmatprep.subr.mxu0 0.0
    %2584 = vmatpush1.msra.mxu0 0.0
    %2585 = vmatprep.subr.mxu0 0.0
    %2586 = vmatpush1.msra.mxu0 0.0
    %2587 = vmatprep.subr.mxu0 0.0
    %2588 = vmatpush1.msra.mxu0 0.0
    %2589 = vmatprep.subr.mxu0 0.0
    %2590 = vmatpush1.msra.mxu0 0.0
    %2591 = vmatprep.subr.mxu0 0.0
    %2592 = vmatpush1.msra.mxu0 0.0
    %2593 = vmatprep.subr.mxu0 0.0
    %2594 = vmatpush1.msra.mxu0 0.0
    %2595 = vmatprep.mubr.f32.mxu0 0.0
    %2596 = vmatmul.mubr.f32.gmra.mrb[0].mxu0 %v2526
    %v2597 = vpop.f32.mrb[0].mxu0
    %v2598 = vadd.f32 %v2523, %v2597
    %v2599 = vpop.f32.mrb[0].mxu0
    %2600 = vmatprep.mubr.f32.mxu0 0.0
    %2601 = vmatmul.mubr.f32.gmra.mrb[0].mxu0 %v2529
    %v2602 = vpop.f32.mrb[0].mxu0
    %v2603 = vadd.f32 %v2523, %v2602
    %v2604 = vpop.f32.mrb[0].mxu0
    %2605 = vdwg.mxu0
    %v2606 = vld [vmem:[%s1] sm:$0xff]
    %v2607 = vld [vmem:[%s1 + $0x8] sm:$0xff]
    %vm2608 = vcmp.ne.f32.partialorder %v2606, 0.0
    %vm2609 = vcmp.ne.f32.partialorder %v2607, 0.0
    %v2610 = vlaneseq
    %v2611 = vshrl.u32 %v2610, 7
    %v2612 = vlaneseq
    %v2613 = vand.u32 %v2612, 127
    %vm2614 = vcmp.eq.s32.totalorder %v2611, %v2613
    %vm2615 = vmor %vm2608, %vm2614
    %vm2616 = vmor %vm2609, %vm2614
    %v2617 = vsel %vm2615, %v2598, -9999999.0
    %v2618 = vsel %vm2616, %v2603, -9999999.0
    %vm2619 = vcmask 64512
    %v2620 = vsel %vm2619, %v2617, -inf
    %2621 = vmax.xlane.f32.xlu0 %v2620
    %v2622 = vpop.xlane.xlu0 %2621
    %v2623 = vsel %vm2619, %v2618, -inf
    %2624 = vmax.xlane.f32.xlu0 %v2623
    %v2625 = vpop.xlane.xlu0 %2624
    %v2626 = vsub.f32 %v2617, %v2622
    %v2627 = vsub.f32 %v2618, %v2625
    %v2628 = vmul.f32 %v2626, 1.442695
    %v2629 = vpow.pop %v2628
    %v2630 = vmul.f32 %v2627, 1.442695
    %v2631 = vpow.pop %v2630
    %v2632 = vsel %vm2619, %v2629, 0.0
    %2633 = vadd.xlane.f32.xlu0 %v2632
    %v2634 = vpop.xlane.xlu0 %2633
    %v2635 = vsel %vm2619, %v2631, 0.0
    %2636 = vadd.xlane.f32.xlu0 %v2635
    %v2637 = vpop.xlane.xlu0 %2636
    %v2638 = vrcp.pop %v2634
    %v2639 = vrcp.pop %v2637
    %v2640 = vmul.f32 %v2629, %v2638
    %v2641 = vmul.f32 %v2631, %v2639
    %v2643 = vsel %vm2619, %v2640, 0
    %2645 = vmatprep.subr.mxu0 0.0
    %2646 = vmatpush1.msra.mxu0 %v2512
    %2647 = vmatprep.subr.mxu0 0.0
    %2648 = vmatpush1.msra.mxu0 0.0
    %2649 = vmatprep.subr.mxu0 0.0
    %2650 = vmatpush1.msra.mxu0 0.0
    %2651 = vmatprep.subr.mxu0 0.0
    %2652 = vmatpush1.msra.mxu0 0.0
    %2653 = vmatprep.subr.mxu0 0.0
    %2654 = vmatpush1.msra.mxu0 0.0
    %2655 = vmatprep.subr.mxu0 0.0
    %2656 = vmatpush1.msra.mxu0 0.0
    %2657 = vmatprep.subr.mxu0 0.0
    %2658 = vmatpush1.msra.mxu0 0.0
    %2659 = vmatprep.subr.mxu0 0.0
    %2660 = vmatpush1.msra.mxu0 0.0
    %2661 = vmatprep.subr.mxu0 0.0
    %2662 = vmatpush1.msra.mxu0 0.0
    %2663 = vmatprep.subr.mxu0 0.0
    %2664 = vmatpush1.msra.mxu0 0.0
    %2665 = vmatprep.subr.mxu0 0.0
    %2666 = vmatpush1.msra.mxu0 0.0
    %2667 = vmatprep.subr.mxu0 0.0
    %2668 = vmatpush1.msra.mxu0 0.0
    %2669 = vmatprep.subr.mxu0 0.0
    %2670 = vmatpush1.msra.mxu0 0.0
    %2671 = vmatprep.subr.mxu0 0.0
    %2672 = vmatpush1.msra.mxu0 0.0
    %2673 = vmatprep.subr.mxu0 0.0
    %2674 = vmatpush1.msra.mxu0 0.0
    %2675 = vmatprep.subr.mxu0 0.0
    %2676 = vmatpush1.msra.mxu0 0.0
    %2677 = vmatprep.subr.mxu0 0.0
    %2678 = vmatpush1.msra.mxu0 0.0
    %2679 = vmatprep.subr.mxu0 0.0
    %2680 = vmatpush1.msra.mxu0 0.0
    %2681 = vmatprep.subr.mxu0 0.0
    %2682 = vmatpush1.msra.mxu0 0.0
    %2683 = vmatprep.subr.mxu0 0.0
    %2684 = vmatpush1.msra.mxu0 0.0
    %2685 = vmatprep.subr.mxu0 0.0
    %2686 = vmatpush1.msra.mxu0 0.0
    %2687 = vmatprep.subr.mxu0 0.0
    %2688 = vmatpush1.msra.mxu0 0.0
    %2689 = vmatprep.subr.mxu0 0.0
    %2690 = vmatpush1.msra.mxu0 0.0
    %2691 = vmatprep.subr.mxu0 0.0
    %2692 = vmatpush1.msra.mxu0 0.0
    %2693 = vmatprep.subr.mxu0 0.0
    %2694 = vmatpush1.msra.mxu0 0.0
    %2695 = vmatprep.subr.mxu0 0.0
    %2696 = vmatpush1.msra.mxu0 0.0
    %2697 = vmatprep.subr.mxu0 0.0
    %2698 = vmatpush1.msra.mxu0 0.0
    %2699 = vmatprep.subr.mxu0 0.0
    %2700 = vmatpush1.msra.mxu0 0.0
    %2701 = vmatprep.subr.mxu0 0.0
    %2702 = vmatpush1.msra.mxu0 0.0
    %2703 = vmatprep.subr.mxu0 0.0
    %2704 = vmatpush1.msra.mxu0 0.0
    %2705 = vmatprep.subr.mxu0 0.0
    %2706 = vmatpush1.msra.mxu0 0.0
    %2707 = vmatprep.subr.mxu0 0.0
    %2708 = vmatpush1.msra.mxu0 0.0
    %2709 = vmatprep.mubr.f32.mxu0 0.0
    %2710 = vmatmul.mubr.f32.gmra.mrb[0].mxu0 %v2643
    %v2711 = vpop.f32.mrb[0].mxu0
    %v2712 = vadd.f32 0.0, %v2711
    %v2713 = vpop.f32.mrb[0].mxu0
    %2714 = vdwg.mxu0
    %v2716 = vsel %vm2619, %v2641, 0
    %2718 = vmatprep.subr.mxu0 0.0
    %2719 = vmatpush1.msra.mxu0 %v2513
    %2720 = vmatprep.subr.mxu0 0.0
    %2721 = vmatpush1.msra.mxu0 0.0
    %2722 = vmatprep.subr.mxu0 0.0
    %2723 = vmatpush1.msra.mxu0 0.0
    %2724 = vmatprep.subr.mxu0 0.0
    %2725 = vmatpush1.msra.mxu0 0.0
    %2726 = vmatprep.subr.mxu0 0.0
    %2727 = vmatpush1.msra.mxu0 0.0
    %2728 = vmatprep.subr.mxu0 0.0
    %2729 = vmatpush1.msra.mxu0 0.0
    %2730 = vmatprep.subr.mxu0 0.0
    %2731 = vmatpush1.msra.mxu0 0.0
    %2732 = vmatprep.subr.mxu0 0.0
    %2733 = vmatpush1.msra.mxu0 0.0
    %2734 = vmatprep.subr.mxu0 0.0
    %2735 = vmatpush1.msra.mxu0 0.0
    %2736 = vmatprep.subr.mxu0 0.0
    %2737 = vmatpush1.msra.mxu0 0.0
    %2738 = vmatprep.subr.mxu0 0.0
    %2739 = vmatpush1.msra.mxu0 0.0
    %2740 = vmatprep.subr.mxu0 0.0
    %2741 = vmatpush1.msra.mxu0 0.0
    %2742 = vmatprep.subr.mxu0 0.0
    %2743 = vmatpush1.msra.mxu0 0.0
    %2744 = vmatprep.subr.mxu0 0.0
    %2745 = vmatpush1.msra.mxu0 0.0
    %2746 = vmatprep.subr.mxu0 0.0
    %2747 = vmatpush1.msra.mxu0 0.0
    %2748 = vmatprep.subr.mxu0 0.0
    %2749 = vmatpush1.msra.mxu0 0.0
    %2750 = vmatprep.subr.mxu0 0.0
    %2751 = vmatpush1.msra.mxu0 0.0
    %2752 = vmatprep.subr.mxu0 0.0
    %2753 = vmatpush1.msra.mxu0 0.0
    %2754 = vmatprep.subr.mxu0 0.0
    %2755 = vmatpush1.msra.mxu0 0.0
    %2756 = vmatprep.subr.mxu0 0.0
    %2757 = vmatpush1.msra.mxu0 0.0
    %2758 = vmatprep.subr.mxu0 0.0
    %2759 = vmatpush1.msra.mxu0 0.0
    %2760 = vmatprep.subr.mxu0 0.0
    %2761 = vmatpush1.msra.mxu0 0.0
    %2762 = vmatprep.subr.mxu0 0.0
    %2763 = vmatpush1.msra.mxu0 0.0
    %2764 = vmatprep.subr.mxu0 0.0
    %2765 = vmatpush1.msra.mxu0 0.0
    %2766 = vmatprep.subr.mxu0 0.0
    %2767 = vmatpush1.msra.mxu0 0.0
    %2768 = vmatprep.subr.mxu0 0.0
    %2769 = vmatpush1.msra.mxu0 0.0
    %2770 = vmatprep.subr.mxu0 0.0
    %2771 = vmatpush1.msra.mxu0 0.0
    %2772 = vmatprep.subr.mxu0 0.0
    %2773 = vmatpush1.msra.mxu0 0.0
    %2774 = vmatprep.subr.mxu0 0.0
    %2775 = vmatpush1.msra.mxu0 0.0
    %2776 = vmatprep.subr.mxu0 0.0
    %2777 = vmatpush1.msra.mxu0 0.0
    %2778 = vmatprep.subr.mxu0 0.0
    %2779 = vmatpush1.msra.mxu0 0.0
    %2780 = vmatprep.subr.mxu0 0.0
    %2781 = vmatpush1.msra.mxu0 0.0
    %2782 = vmatprep.mubr.f32.mxu0 0.0
    %2783 = vmatmul.mubr.f32.gmra.mrb[0].mxu0 %v2716
    %v2784 = vpop.f32.mrb[0].mxu0
    %v2785 = vadd.f32 0.0, %v2784
    %v2786 = vpop.f32.mrb[0].mxu0
    %2787 = vdwg.mxu0
    %v2788 = vld [vmem:[%s11] sm:$0xff]
    %v2789 = vld [vmem:[%s11 + $0x8] sm:$0xff]
    %v2790 = vld [vmem:[%s11 + $0x10] sm:$0xff]
    %v2791 = vld [vmem:[%s11 + $0x18] sm:$0xff]
    %v2792 = vld [vmem:[%s10] sm:$0xff]
    %v2793 = vld [vmem:[%s10 + $0x8] sm:$0xff]
    %v2794 = vld [vmem:[%s10 + $0x10] sm:$0xff]
    %v2795 = vld [vmem:[%s10 + $0x18] sm:$0xff]
    %2796 = vmatprep.subr.mxu0 0.0
    %2797 = vmatpush1.msra.mxu0 %v2792
    %2798 = vmatprep.subr.mxu0 0.0
    %2799 = vmatpush1.msra.mxu0 %v2793
    %2800 = vmatprep.subr.mxu0 0.0
    %2801 = vmatpush1.msra.mxu0 %v2794
    %2802 = vmatprep.subr.mxu0 0.0
    %2803 = vmatpush1.msra.mxu0 %v2795
    %2804 = vmatprep.subr.mxu0 0.0
    %2805 = vmatpush1.msra.mxu0 0.0
    %2806 = vmatprep.subr.mxu0 0.0
    %2807 = vmatpush1.msra.mxu0 0.0
    %2808 = vmatprep.subr.mxu0 0.0
    %2809 = vmatpush1.msra.mxu0 0.0
    %2810 = vmatprep.subr.mxu0 0.0
    %2811 = vmatpush1.msra.mxu0 0.0
    %2812 = vmatprep.subr.mxu0 0.0
    %2813 = vmatpush1.msra.mxu0 0.0
    %2814 = vmatprep.subr.mxu0 0.0
    %2815 = vmatpush1.msra.mxu0 0.0
    %2816 = vmatprep.subr.mxu0 0.0
    %2817 = vmatpush1.msra.mxu0 0.0
    %2818 = vmatprep.subr.mxu0 0.0
    %2819 = vmatpush1.msra.mxu0 0.0
    %2820 = vmatprep.subr.mxu0 0.0
    %2821 = vmatpush1.msra.mxu0 0.0
    %2822 = vmatprep.subr.mxu0 0.0
    %2823 = vmatpush1.msra.mxu0 0.0
    %2824 = vmatprep.subr.mxu0 0.0
    %2825 = vmatpush1.msra.mxu0 0.0
    %2826 = vmatprep.subr.mxu0 0.0
    %2827 = vmatpush1.msra.mxu0 0.0
    %2828 = vmatprep.subr.mxu0 0.0
    %2829 = vmatpush1.msra.mxu0 0.0
    %2830 = vmatprep.subr.mxu0 0.0
    %2831 = vmatpush1.msra.mxu0 0.0
    %2832 = vmatprep.subr.mxu0 0.0
    %2833 = vmatpush1.msra.mxu0 0.0
    %2834 = vmatprep.subr.mxu0 0.0
    %2835 = vmatpush1.msra.mxu0 0.0
    %2836 = vmatprep.subr.mxu0 0.0
    %2837 = vmatpush1.msra.mxu0 0.0
    %2838 = vmatprep.subr.mxu0 0.0
    %2839 = vmatpush1.msra.mxu0 0.0
    %2840 = vmatprep.subr.mxu0 0.0
    %2841 = vmatpush1.msra.mxu0 0.0
    %2842 = vmatprep.subr.mxu0 0.0
    %2843 = vmatpush1.msra.mxu0 0.0
    %2844 = vmatprep.subr.mxu0 0.0
    %2845 = vmatpush1.msra.mxu0 0.0
    %2846 = vmatprep.subr.mxu0 0.0
    %2847 = vmatpush1.msra.mxu0 0.0
    %2848 = vmatprep.subr.mxu0 0.0
    %2849 = vmatpush1.msra.mxu0 0.0
    %2850 = vmatprep.subr.mxu0 0.0
    %2851 = vmatpush1.msra.mxu0 0.0
    %2852 = vmatprep.subr.mxu0 0.0
    %2853 = vmatpush1.msra.mxu0 0.0
    %2854 = vmatprep.subr.mxu0 0.0
    %2855 = vmatpush1.msra.mxu0 0.0
    %2856 = vmatprep.subr.mxu0 0.0
    %2857 = vmatpush1.msra.mxu0 0.0
    %2858 = vmatprep.subr.mxu0 0.0
    %2859 = vmatpush1.msra.mxu0 0.0
    %2860 = vmatprep.mubr.f32.mxu0 0.0
    %2861 = vmatmul.mubr.f32.gmra.mrb[0].mxu0 %v57
    %v2862 = vpop.f32.mrb[0].mxu0
    %v2863 = vadd.f32 0.0, %v2862
    %v2864 = vpop.f32.mrb[0].mxu0
    %2865 = vmatprep.mubr.f32.mxu0 0.0
    %2866 = vmatmul.mubr.f32.gmra.mrb[0].mxu0 %v60
    %v2867 = vpop.f32.mrb[0].mxu0
    %v2868 = vadd.f32 0.0, %v2867
    %v2869 = vpop.f32.mrb[0].mxu0
    %2870 = vdwg.mxu0
    %v2872 = vsel %vm55, %v2712, 0
    %v2875 = vsel %vm55, %v2785, 0
    %2877 = vmatprep.subr.mxu0 0.0
    %2878 = vmatpush1.msra.mxu0 %v2788
    %2879 = vmatprep.subr.mxu0 0.0
    %2880 = vmatpush1.msra.mxu0 %v2789
    %2881 = vmatprep.subr.mxu0 0.0
    %2882 = vmatpush1.msra.mxu0 %v2790
    %2883 = vmatprep.subr.mxu0 0.0
    %2884 = vmatpush1.msra.mxu0 %v2791
    %2885 = vmatprep.subr.mxu0 0.0
    %2886 = vmatpush1.msra.mxu0 0.0
    %2887 = vmatprep.subr.mxu0 0.0
    %2888 = vmatpush1.msra.mxu0 0.0
    %2889 = vmatprep.subr.mxu0 0.0
    %2890 = vmatpush1.msra.mxu0 0.0
    %2891 = vmatprep.subr.mxu0 0.0
    %2892 = vmatpush1.msra.mxu0 0.0
    %2893 = vmatprep.subr.mxu0 0.0
    %2894 = vmatpush1.msra.mxu0 0.0
    %2895 = vmatprep.subr.mxu0 0.0
    %2896 = vmatpush1.msra.mxu0 0.0
    %2897 = vmatprep.subr.mxu0 0.0
    %2898 = vmatpush1.msra.mxu0 0.0
    %2899 = vmatprep.subr.mxu0 0.0
    %2900 = vmatpush1.msra.mxu0 0.0
    %2901 = vmatprep.subr.mxu0 0.0
    %2902 = vmatpush1.msra.mxu0 0.0
    %2903 = vmatprep.subr.mxu0 0.0
    %2904 = vmatpush1.msra.mxu0 0.0
    %2905 = vmatprep.subr.mxu0 0.0
    %2906 = vmatpush1.msra.mxu0 0.0
    %2907 = vmatprep.subr.mxu0 0.0
    %2908 = vmatpush1.msra.mxu0 0.0
    %2909 = vmatprep.subr.mxu0 0.0
    %2910 = vmatpush1.msra.mxu0 0.0
    %2911 = vmatprep.subr.mxu0 0.0
    %2912 = vmatpush1.msra.mxu0 0.0
    %2913 = vmatprep.subr.mxu0 0.0
    %2914 = vmatpush1.msra.mxu0 0.0
    %2915 = vmatprep.subr.mxu0 0.0
    %2916 = vmatpush1.msra.mxu0 0.0
    %2917 = vmatprep.subr.mxu0 0.0
    %2918 = vmatpush1.msra.mxu0 0.0
    %2919 = vmatprep.subr.mxu0 0.0
    %2920 = vmatpush1.msra.mxu0 0.0
    %2921 = vmatprep.subr.mxu0 0.0
    %2922 = vmatpush1.msra.mxu0 0.0
    %2923 = vmatprep.subr.mxu0 0.0
    %2924 = vmatpush1.msra.mxu0 0.0
    %2925 = vmatprep.subr.mxu0 0.0
    %2926 = vmatpush1.msra.mxu0 0.0
    %2927 = vmatprep.subr.mxu0 0.0
    %2928 = vmatpush1.msra.mxu0 0.0
    %2929 = vmatprep.subr.mxu0 0.0
    %2930 = vmatpush1.msra.mxu0 0.0
    %2931 = vmatprep.subr.mxu0 0.0
    %2932 = vmatpush1.msra.mxu0 0.0
    %2933 = vmatprep.subr.mxu0 0.0
    %2934 = vmatpush1.msra.mxu0 0.0
    %2935 = vmatprep.subr.mxu0 0.0
    %2936 = vmatpush1.msra.mxu0 0.0
    %2937 = vmatprep.subr.mxu0 0.0
    %2938 = vmatpush1.msra.mxu0 0.0
    %2939 = vmatprep.subr.mxu0 0.0
    %2940 = vmatpush1.msra.mxu0 0.0
    %2941 = vmatprep.mubr.f32.mxu0 0.0
    %2942 = vmatmul.mubr.f32.gmra.mrb[0].mxu0 %v2872
    %v2943 = vpop.f32.mrb[0].mxu0
    %v2944 = vadd.f32 %v2863, %v2943
    %v2945 = vpop.f32.mrb[0].mxu0
    %2946 = vmatprep.mubr.f32.mxu0 0.0
    %2947 = vmatmul.mubr.f32.gmra.mrb[0].mxu0 %v2875
    %v2948 = vpop.f32.mrb[0].mxu0
    %v2949 = vadd.f32 %v2868, %v2948
    %v2950 = vpop.f32.mrb[0].mxu0
    %2951 = vdwg.mxu0
    %v2952 = vmax.f32 %v2944, 0.0
    %v2953 = vmax.f32 %v2949, 0.0
    %2954 = vst.msk [vmem:[#allocation3] sm:$0xff] %vm55, %v2952
    %2955 = vst.msk [vmem:[#allocation3 + $0x8] sm:$0xff] %vm55, %v2953
    // Predicated region
    $region50: #{encoder_forward.1} parent=1 // pred_check
      _
    $region51: #{encoder_forward.1} parent=1 // pred_check_branch
      %2957 = sbr.rel (0) target = $region53
    $region52: #{encoder_forward.1} parent=1 // pred_region
      %s2959 = ssub.s32 256, 256
      %2960 = vsyncadd [#allocation4], %s2959
      %s2961 = sshll.u32 [#allocation3], 4
      %s2962 = int_to_ptr.vmem [resolvable:$true] %s2961
      %2967 = dma.vmem_to_hbm [thread:$0]  %s2962, 256, %s12, [#allocation4], 128, 128, 8
    $region53: #{encoder_forward.1} parent=1 // pred_fallthru
      _
    // Predicated region
    $region54: #{encoder_forward.1} parent=1 // pred_check
      _
    $region55: #{encoder_forward.1} parent=1 // pred_check_branch
      %2969 = sbr.rel (0) target = $region57
    $region56: #{encoder_forward.1} parent=1 // pred_region
      %2970 = dma.done [#allocation4], 256
    $region57: #{encoder_forward.1} parent=1 // pred_fallthru
      _
    %2971 = vsyncpa [#allocation4], 1

</llo_original>
